<compile_context>
chip_gen: v5e
topology: v5e:2x2
jax: 0.10.0
libtpu: 0.0.40
codegen_flags: <defaults>
</compile_context>

<pallas_src>
import functools

import jax
import jax.numpy as jnp
from jax.experimental import pallas as pl
from jax.experimental.pallas import tpu as pltpu


def _round_up(x, m):
    return ((x + m - 1) // m) * m


def _make_kernel(taps, m_tile, oc_pad, n_row_blocks):
    """taps: tuple of static (phase_index, flat_row_offset, weight_index)."""

    def kernel(x_ref, w_ref, shift_ref, o_ref, acc_ref):
        # x_ref:     (n_phases, PH*PW, C)   bf16 image slab (resident across row blocks)
        # w_ref:     (KH*KW, C, OC_pad)     bf16 weights, BN scale folded in
        # shift_ref: (1, OC_pad)            f32  BN shift (+ conv bias)
        # o_ref:     (m_tile, OC_pad)       f32  output row tile (lane-dense)
        # acc_ref:   (m_tile, OC_pad)       f32  VMEM accumulator
        if n_row_blocks == 1:
            r0 = 0                                   # fully static slices
        else:
            r0 = pl.program_id(1) * m_tile
        acc_ref[...] = jnp.zeros_like(acc_ref)
        for pidx, off, widx in taps:                 # static unroll over KH*KW taps
            patch = x_ref[pidx, pl.ds(r0 + off, m_tile), :]       # (m_tile, C) bf16
            acc_ref[...] += jnp.dot(patch, w_ref[widx],
                                    preferred_element_type=jnp.float32)
        y = acc_ref[...] + shift_ref[...]            # fused BN shift (+ conv bias)
        o_ref[...] = jnp.maximum(y, 0.0).astype(o_ref.dtype)      # ReLU

    return kernel


@functools.partial(
    jax.jit,
    static_argnames=("stride", "padding", "eps", "compute_dtype", "out_layout"))
def conv_bn_relu(x, weight, bias, gamma, beta, running_mean, running_var,
                 stride=1, padding=0, eps=1e-5, compute_dtype=jnp.bfloat16,
                 out_layout="NCHW"):
    """x: (N, C_in, H, W) NCHW.  weight: (C_out, C_in, KH, KW) (PyTorch layout)."""
    n, cin, h, w = x.shape
    oc, cin_w, kh, kw = weight.shape
    assert cin == cin_w
    s, p = stride, padding

    oh = (h + 2 * p - kh) // s + 1
    ow = (w + 2 * p - kw) // s + 1

    # ---- tiling --------------------------------------------------------------
    oc_pad = _round_up(oc, 128)                 # lane-dense output stores
    qh, qw = (kh - 1) // s, (kw - 1) // s
    pw = ow + qw                                # per output row: OW valid + qw junk cols
    rows_target = 1024                          # ~M rows per grid step (big tile)
    th = max(1, min(oh, max(1, rows_target // pw)))
    # keep double-buffered f32 output tile + accumulator well under VMEM
    max_rows = max(1, (12 << 20) // (pw * oc_pad * 4 * 3))
    th = max(1, min(th, max_rows))
    n_rb = pl.cdiv(oh, th)                      # cdiv grid (no divisibility assert)
    oh_pad = n_rb * th
    m_tile = th * pw
    ph_need = oh_pad + qh + 1                   # +1 zero row keeps junk windows in-bounds
    pw_need = pw

    # ---- NHWC + spatial zero-pad + phase decomposition (1x input bytes) ------
    x_nhwc = jnp.transpose(x.astype(compute_dtype), (0, 2, 3, 1))
    xp = jnp.pad(x_nhwc, ((0, 0), (p, p), (p, p), (0, 0)))
    phases = []
    for ri in range(s):
        for rj in range(s):
            ph = xp[:, ri::s, rj::s, :]
            pad_h = max(0, ph_need - ph.shape[1])
            pad_w = max(0, pw_need - ph.shape[2])
            ph = jnp.pad(ph, ((0, 0), (0, pad_h), (0, pad_w), (0, 0)))
            phases.append(ph[:, :ph_need, :pw_need, :])
    n_phases = s * s
    xph = jnp.stack(phases, axis=0)                           # (s*s, N, PH, PW, C)
    xph = xph.reshape(n_phases, n, ph_need * pw_need, cin)    # free collapse

    # ---- fold BN (+ conv bias) into weights / shift ---------------------------
    scale = gamma / jnp.sqrt(running_var + eps)               # (OC,)
    shift = beta + scale * (bias - running_mean)              # (OC,)
    w_hwio = jnp.transpose(weight, (2, 3, 1, 0)).reshape(kh * kw, cin, oc)
    w_folded = (w_hwio * scale[None, None, :]).astype(compute_dtype)
    w_folded = jnp.pad(w_folded, ((0, 0), (0, 0), (0, oc_pad - oc)))
    shift_pad = jnp.pad(shift.astype(jnp.float32),
                        (0, oc_pad - oc)).reshape(1, oc_pad)

    # ---- static tap table: (phase index, flat row offset, weight index) -------
    taps = tuple(((i % s) * s + (j % s),
                  (i // s) * pw_need + (j // s),
                  i * kw + j)
                 for i in range(kh) for j in range(kw))

    kernel = _make_kernel(taps, m_tile, oc_pad, n_rb)

    # rough VMEM budget (double-buffered blocks + accumulator), with headroom
    esize = jnp.dtype(compute_dtype).itemsize
    x_vmem = 2 * n_phases * _round_up(ph_need * pw_need, 16) * _round_up(cin, 128) * esize
    w_vmem = 2 * kh * kw * _round_up(cin, 16) * oc_pad * esize
    o_vmem = 3 * _round_up(m_tile, 8) * oc_pad * 4
    vmem_limit = int(min(96 << 20, max(32 << 20, 2 * (x_vmem + w_vmem + o_vmem))))

    out = pl.pallas_call(
        kernel,
        out_shape=jax.ShapeDtypeStruct((n, n_rb, m_tile, oc_pad), jnp.float32),
        grid_spec=pltpu.PrefetchScalarGridSpec(
            num_scalar_prefetch=0,
            grid=(n, n_rb),
            in_specs=[
                # full (phase, flat spatial, C) slab of image `nn`; index map is
                # independent of `r`, so it stays resident across row blocks.
                pl.BlockSpec((n_phases, None, ph_need * pw_need, cin),
                             lambda nn, r: (0, nn, 0, 0)),
                pl.BlockSpec((kh * kw, cin, oc_pad), lambda nn, r: (0, 0, 0)),
                pl.BlockSpec((1, oc_pad), lambda nn, r: (0, 0)),
            ],
            out_specs=pl.BlockSpec((None, None, m_tile, oc_pad),
                                   lambda nn, r: (nn, r, 0, 0)),
            scratch_shapes=[pltpu.VMEM((m_tile, oc_pad), jnp.float32)],
        ),
        compiler_params=pltpu.CompilerParams(
            dimension_semantics=("parallel", "arbitrary"),
            vmem_limit_bytes=vmem_limit),
    )(xph, w_folded, shift_pad)

    # (N, n_rb, TH*PW, OC_pad) -> (N, OH_pad, PW, OC_pad) -> valid region
    out = out.reshape(n, oh_pad, pw_need, oc_pad)[:, :oh, :ow, :oc]
    if out_layout == "NHWC":
        return out
    return jnp.transpose(out, (0, 3, 1, 2))     # NCHW to match the PyTorch module


def _reference(x, weight, bias, gamma, beta, running_mean, running_var,
               stride, padding, eps=1e-5):
    y = jax.lax.conv_general_dilated(
        x, weight, window_strides=(stride, stride),
        padding=((padding, padding), (padding, padding)),
        dimension_numbers=("NCHW", "OIHW", "NCHW"))
    y = y + bias.reshape(1, -1, 1, 1)
    y = (y - running_mean.reshape(1, -1, 1, 1)) / jnp.sqrt(
        running_var.reshape(1, -1, 1, 1) + eps)
    y = y * gamma.reshape(1, -1, 1, 1) + beta.reshape(1, -1, 1, 1)
    return jnp.maximum(y, 0.0)


if __name__ == "__main__":
    key = jax.random.PRNGKey(0)
    k_x, k_w, k_b, k_g, k_beta = jax.random.split(key, 5)

    # ConvBn(in_channels=4, out_channels=8, kernel_size=3, stride=1, padding=1)
    N, CIN, H, W = 2, 4, 16, 16
    COUT, KH, KW = 8, 3, 3
    STRIDE, PAD = 1, 1

    x = jax.random.normal(k_x, (N, CIN, H, W), dtype=jnp.float32)
    weight = jax.random.normal(k_w, (COUT, CIN, KH, KW), dtype=jnp.float32) * 0.1
    bias = jax.random.normal(k_b, (COUT,), dtype=jnp.float32) * 0.1
    gamma = jax.random.normal(k_g, (COUT,), dtype=jnp.float32) * 0.1 + 1.0
    beta = jax.random.normal(k_beta, (COUT,), dtype=jnp.float32) * 0.1
    running_mean = jnp.zeros((COUT,), jnp.float32)
    running_var = jnp.ones((COUT,), jnp.float32)

    out = conv_bn_relu(x, weight, bias, gamma, beta, running_mean, running_var,
                       stride=STRIDE, padding=PAD)
    out = jax.block_until_ready(out)

    ref = _reference(x, weight, bias, gamma, beta, running_mean, running_var,
                     STRIDE, PAD)
    assert out.shape == ref.shape == (N, COUT, H, W)
    max_err = float(jnp.max(jnp.abs(out - ref)))
    # bf16 inputs with f32 accumulation -> small absolute error vs f32 reference.
    assert jnp.allclose(out, ref, atol=5e-2, rtol=5e-2), f"max abs err {max_err}"

    print("KERNEL_OK")
</pallas_src>

<mosaic_0001>
module attributes {stable_mosaic.version = 11 : i64} {
  func.func @kernel(%arg0: i32, %arg1: i32, %arg2: memref<1x1x342x4xbf16, #tpu.memory_space<vmem>>, %arg3: memref<9x4x128xbf16, #tpu.memory_space<vmem>>, %arg4: memref<1x128xf32, #tpu.memory_space<vmem>>, %arg5: memref<1x1x288x128xf32, #tpu.memory_space<vmem>>, %arg6: memref<288x128xf32, #tpu.memory_space<vmem>>) attributes {dimension_semantics = [#tpu.dimension_semantics<parallel>, #tpu.dimension_semantics<arbitrary>], iteration_bounds = array<i64: 2, 1>, scalar_prefetch = 0 : i64, scratch_operands = 1 : i64, tpu.core_type = #tpu.core_type<tc>, window_params = [{transform_indices = @transform_0, window_bounds = array<i64: 1, 1, 342, 4>}, {pipeline_mode = #tpu.pipeline_mode<synchronous>, transform_indices = @transform_1, window_bounds = array<i64: 9, 4, 128>}, {pipeline_mode = #tpu.pipeline_mode<synchronous>, transform_indices = @transform_2, window_bounds = array<i64: 1, 128>}, {transform_indices = @transform_3, window_bounds = array<i64: 1, 1, 288, 128>}]} {
    %cst = arith.constant 0.000000e+00 : f32
    %0 = vector.broadcast %cst : f32 to vector<288x128xf32>
    %c0 = arith.constant 0 : index
    %c0_0 = arith.constant 0 : index
    %1 = vector.load %arg6[%c0, %c0_0] : memref<288x128xf32, #tpu.memory_space<vmem>>, vector<288x128xf32>
    tpu.vector_store %arg6[%c0, %c0_0], %0 {strides = array<i32>} : memref<288x128xf32, #tpu.memory_space<vmem>>, vector<288x128xf32>,
    %c0_1 = arith.constant 0 : index
    %c0_2 = arith.constant 0 : index
    %c0_3 = arith.constant 0 : index
    %c0_4 = arith.constant 0 : index
    %2 = vector.load %arg2[%c0_1, %c0_2, %c0_3, %c0_4] : memref<1x1x342x4xbf16, #tpu.memory_space<vmem>>, vector<1x1x288x4xbf16>
    %3 = vector.shape_cast %2 : vector<1x1x288x4xbf16> to vector<288x4xbf16>
    %c0_5 = arith.constant 0 : index
    %c0_6 = arith.constant 0 : index
    %4 = vector.load %arg6[%c0_5, %c0_6] : memref<288x128xf32, #tpu.memory_space<vmem>>, vector<288x128xf32>
    %c0_7 = arith.constant 0 : index
    %c0_8 = arith.constant 0 : index
    %c0_9 = arith.constant 0 : index
    %5 = vector.load %arg3[%c0_7, %c0_8, %c0_9] : memref<9x4x128xbf16, #tpu.memory_space<vmem>>, vector<1x4x128xbf16>
    %6 = vector.shape_cast %5 : vector<1x4x128xbf16> to vector<4x128xbf16>
    %cst_10 = arith.constant dense<0.000000e+00> : vector<288x128xf32>
    %7 = tpu.matmul %3, %6, %cst_10 {dimension_numbers = #tpu.dot_dimension_numbers<[1], [0], [0], [1], [0, 0, 1, 1], [], []>} : vector<288x4xbf16>, vector<4x128xbf16>, vector<288x128xf32> -> vector<288x128xf32>
    %8 = arith.addf %4, %7 : vector<288x128xf32>
    %c0_11 = arith.constant 0 : index
    %c0_12 = arith.constant 0 : index
    %9 = vector.load %arg6[%c0_11, %c0_12] : memref<288x128xf32, #tpu.memory_space<vmem>>, vector<288x128xf32>
    tpu.vector_store %arg6[%c0_11, %c0_12], %8 {strides = array<i32>} : memref<288x128xf32, #tpu.memory_space<vmem>>, vector<288x128xf32>,
    %c0_13 = arith.constant 0 : index
    %c0_14 = arith.constant 0 : index
    %c1 = arith.constant 1 : index
    %c0_15 = arith.constant 0 : index
    %10 = vector.load %arg2[%c0_13, %c0_14, %c1, %c0_15] : memref<1x1x342x4xbf16, #tpu.memory_space<vmem>>, vector<1x1x288x4xbf16>
    %11 = vector.shape_cast %10 : vector<1x1x288x4xbf16> to vector<288x4xbf16>
    %c0_16 = arith.constant 0 : index
    %c0_17 = arith.constant 0 : index
    %12 = vector.load %arg6[%c0_16, %c0_17] : memref<288x128xf32, #tpu.memory_space<vmem>>, vector<288x128xf32>
    %c1_18 = arith.constant 1 : index
    %c0_19 = arith.constant 0 : index
    %c0_20 = arith.constant 0 : index
    %13 = vector.load %arg3[%c1_18, %c0_19, %c0_20] : memref<9x4x128xbf16, #tpu.memory_space<vmem>>, vector<1x4x128xbf16>
    %14 = vector.shape_cast %13 : vector<1x4x128xbf16> to vector<4x128xbf16>
    %cst_21 = arith.constant dense<0.000000e+00> : vector<288x128xf32>
    %15 = tpu.matmul %11, %14, %cst_21 {dimension_numbers = #tpu.dot_dimension_numbers<[1], [0], [0], [1], [0, 0, 1, 1], [], []>} : vector<288x4xbf16>, vector<4x128xbf16>, vector<288x128xf32> -> vector<288x128xf32>
    %16 = arith.addf %12, %15 : vector<288x128xf32>
    %c0_22 = arith.constant 0 : index
    %c0_23 = arith.constant 0 : index
    %17 = vector.load %arg6[%c0_22, %c0_23] : memref<288x128xf32, #tpu.memory_space<vmem>>, vector<288x128xf32>
    tpu.vector_store %arg6[%c0_22, %c0_23], %16 {strides = array<i32>} : memref<288x128xf32, #tpu.memory_space<vmem>>, vector<288x128xf32>,
    %c0_24 = arith.constant 0 : index
    %c0_25 = arith.constant 0 : index
    %c2 = arith.constant 2 : index
    %c0_26 = arith.constant 0 : index
    %18 = vector.load %arg2[%c0_24, %c0_25, %c2, %c0_26] : memref<1x1x342x4xbf16, #tpu.memory_space<vmem>>, vector<1x1x288x4xbf16>
    %19 = vector.shape_cast %18 : vector<1x1x288x4xbf16> to vector<288x4xbf16>
    %c0_27 = arith.constant 0 : index
    %c0_28 = arith.constant 0 : index
    %20 = vector.load %arg6[%c0_27, %c0_28] : memref<288x128xf32, #tpu.memory_space<vmem>>, vector<288x128xf32>
    %c2_29 = arith.constant 2 : index
    %c0_30 = arith.constant 0 : index
    %c0_31 = arith.constant 0 : index
    %21 = vector.load %arg3[%c2_29, %c0_30, %c0_31] : memref<9x4x128xbf16, #tpu.memory_space<vmem>>, vector<1x4x128xbf16>
    %22 = vector.shape_cast %21 : vector<1x4x128xbf16> to vector<4x128xbf16>
    %cst_32 = arith.constant dense<0.000000e+00> : vector<288x128xf32>
    %23 = tpu.matmul %19, %22, %cst_32 {dimension_numbers = #tpu.dot_dimension_numbers<[1], [0], [0], [1], [0, 0, 1, 1], [], []>} : vector<288x4xbf16>, vector<4x128xbf16>, vector<288x128xf32> -> vector<288x128xf32>
    %24 = arith.addf %20, %23 : vector<288x128xf32>
    %c0_33 = arith.constant 0 : index
    %c0_34 = arith.constant 0 : index
    %25 = vector.load %arg6[%c0_33, %c0_34] : memref<288x128xf32, #tpu.memory_space<vmem>>, vector<288x128xf32>
    tpu.vector_store %arg6[%c0_33, %c0_34], %24 {strides = array<i32>} : memref<288x128xf32, #tpu.memory_space<vmem>>, vector<288x128xf32>,
    %c0_35 = arith.constant 0 : index
    %c0_36 = arith.constant 0 : index
    %c18 = arith.constant 18 : index
    %c0_37 = arith.constant 0 : index
    %26 = vector.load %arg2[%c0_35, %c0_36, %c18, %c0_37] : memref<1x1x342x4xbf16, #tpu.memory_space<vmem>>, vector<1x1x288x4xbf16>
    %27 = vector.shape_cast %26 : vector<1x1x288x4xbf16> to vector<288x4xbf16>
    %c0_38 = arith.constant 0 : index
    %c0_39 = arith.constant 0 : index
    %28 = vector.load %arg6[%c0_38, %c0_39] : memref<288x128xf32, #tpu.memory_space<vmem>>, vector<288x128xf32>
    %c3 = arith.constant 3 : index
    %c0_40 = arith.constant 0 : index
    %c0_41 = arith.constant 0 : index
    %29 = vector.load %arg3[%c3, %c0_40, %c0_41] : memref<9x4x128xbf16, #tpu.memory_space<vmem>>, vector<1x4x128xbf16>
    %30 = vector.shape_cast %29 : vector<1x4x128xbf16> to vector<4x128xbf16>
    %cst_42 = arith.constant dense<0.000000e+00> : vector<288x128xf32>
    %31 = tpu.matmul %27, %30, %cst_42 {dimension_numbers = #tpu.dot_dimension_numbers<[1], [0], [0], [1], [0, 0, 1, 1], [], []>} : vector<288x4xbf16>, vector<4x128xbf16>, vector<288x128xf32> -> vector<288x128xf32>
    %32 = arith.addf %28, %31 : vector<288x128xf32>
    %c0_43 = arith.constant 0 : index
    %c0_44 = arith.constant 0 : index
    %33 = vector.load %arg6[%c0_43, %c0_44] : memref<288x128xf32, #tpu.memory_space<vmem>>, vector<288x128xf32>
    tpu.vector_store %arg6[%c0_43, %c0_44], %32 {strides = array<i32>} : memref<288x128xf32, #tpu.memory_space<vmem>>, vector<288x128xf32>,
    %c0_45 = arith.constant 0 : index
    %c0_46 = arith.constant 0 : index
    %c19 = arith.constant 19 : index
    %c0_47 = arith.constant 0 : index
    %34 = vector.load %arg2[%c0_45, %c0_46, %c19, %c0_47] : memref<1x1x342x4xbf16, #tpu.memory_space<vmem>>, vector<1x1x288x4xbf16>
    %35 = vector.shape_cast %34 : vector<1x1x288x4xbf16> to vector<288x4xbf16>
    %c0_48 = arith.constant 0 : index
    %c0_49 = arith.constant 0 : index
    %36 = vector.load %arg6[%c0_48, %c0_49] : memref<288x128xf32, #tpu.memory_space<vmem>>, vector<288x128xf32>
    %c4 = arith.constant 4 : index
    %c0_50 = arith.constant 0 : index
    %c0_51 = arith.constant 0 : index
    %37 = vector.load %arg3[%c4, %c0_50, %c0_51] : memref<9x4x128xbf16, #tpu.memory_space<vmem>>, vector<1x4x128xbf16>
    %38 = vector.shape_cast %37 : vector<1x4x128xbf16> to vector<4x128xbf16>
    %cst_52 = arith.constant dense<0.000000e+00> : vector<288x128xf32>
    %39 = tpu.matmul %35, %38, %cst_52 {dimension_numbers = #tpu.dot_dimension_numbers<[1], [0], [0], [1], [0, 0, 1, 1], [], []>} : vector<288x4xbf16>, vector<4x128xbf16>, vector<288x128xf32> -> vector<288x128xf32>
    %40 = arith.addf %36, %39 : vector<288x128xf32>
    %c0_53 = arith.constant 0 : index
    %c0_54 = arith.constant 0 : index
    %41 = vector.load %arg6[%c0_53, %c0_54] : memref<288x128xf32, #tpu.memory_space<vmem>>, vector<288x128xf32>
    tpu.vector_store %arg6[%c0_53, %c0_54], %40 {strides = array<i32>} : memref<288x128xf32, #tpu.memory_space<vmem>>, vector<288x128xf32>,
    %c0_55 = arith.constant 0 : index
    %c0_56 = arith.constant 0 : index
    %c20 = arith.constant 20 : index
    %c0_57 = arith.constant 0 : index
    %42 = vector.load %arg2[%c0_55, %c0_56, %c20, %c0_57] : memref<1x1x342x4xbf16, #tpu.memory_space<vmem>>, vector<1x1x288x4xbf16>
    %43 = vector.shape_cast %42 : vector<1x1x288x4xbf16> to vector<288x4xbf16>
    %c0_58 = arith.constant 0 : index
    %c0_59 = arith.constant 0 : index
    %44 = vector.load %arg6[%c0_58, %c0_59] : memref<288x128xf32, #tpu.memory_space<vmem>>, vector<288x128xf32>
    %c5 = arith.constant 5 : index
    %c0_60 = arith.constant 0 : index
    %c0_61 = arith.constant 0 : index
    %45 = vector.load %arg3[%c5, %c0_60, %c0_61] : memref<9x4x128xbf16, #tpu.memory_space<vmem>>, vector<1x4x128xbf16>
    %46 = vector.shape_cast %45 : vector<1x4x128xbf16> to vector<4x128xbf16>
    %cst_62 = arith.constant dense<0.000000e+00> : vector<288x128xf32>
    %47 = tpu.matmul %43, %46, %cst_62 {dimension_numbers = #tpu.dot_dimension_numbers<[1], [0], [0], [1], [0, 0, 1, 1], [], []>} : vector<288x4xbf16>, vector<4x128xbf16>, vector<288x128xf32> -> vector<288x128xf32>
    %48 = arith.addf %44, %47 : vector<288x128xf32>
    %c0_63 = arith.constant 0 : index
    %c0_64 = arith.constant 0 : index
    %49 = vector.load %arg6[%c0_63, %c0_64] : memref<288x128xf32, #tpu.memory_space<vmem>>, vector<288x128xf32>
    tpu.vector_store %arg6[%c0_63, %c0_64], %48 {strides = array<i32>} : memref<288x128xf32, #tpu.memory_space<vmem>>, vector<288x128xf32>,
    %c0_65 = arith.constant 0 : index
    %c0_66 = arith.constant 0 : index
    %c36 = arith.constant 36 : index
    %c0_67 = arith.constant 0 : index
    %50 = vector.load %arg2[%c0_65, %c0_66, %c36, %c0_67] : memref<1x1x342x4xbf16, #tpu.memory_space<vmem>>, vector<1x1x288x4xbf16>
    %51 = vector.shape_cast %50 : vector<1x1x288x4xbf16> to vector<288x4xbf16>
    %c0_68 = arith.constant 0 : index
    %c0_69 = arith.constant 0 : index
    %52 = vector.load %arg6[%c0_68, %c0_69] : memref<288x128xf32, #tpu.memory_space<vmem>>, vector<288x128xf32>
    %c6 = arith.constant 6 : index
    %c0_70 = arith.constant 0 : index
    %c0_71 = arith.constant 0 : index
    %53 = vector.load %arg3[%c6, %c0_70, %c0_71] : memref<9x4x128xbf16, #tpu.memory_space<vmem>>, vector<1x4x128xbf16>
    %54 = vector.shape_cast %53 : vector<1x4x128xbf16> to vector<4x128xbf16>
    %cst_72 = arith.constant dense<0.000000e+00> : vector<288x128xf32>
    %55 = tpu.matmul %51, %54, %cst_72 {dimension_numbers = #tpu.dot_dimension_numbers<[1], [0], [0], [1], [0, 0, 1, 1], [], []>} : vector<288x4xbf16>, vector<4x128xbf16>, vector<288x128xf32> -> vector<288x128xf32>
    %56 = arith.addf %52, %55 : vector<288x128xf32>
    %c0_73 = arith.constant 0 : index
    %c0_74 = arith.constant 0 : index
    %57 = vector.load %arg6[%c0_73, %c0_74] : memref<288x128xf32, #tpu.memory_space<vmem>>, vector<288x128xf32>
    tpu.vector_store %arg6[%c0_73, %c0_74], %56 {strides = array<i32>} : memref<288x128xf32, #tpu.memory_space<vmem>>, vector<288x128xf32>,
    %c0_75 = arith.constant 0 : index
    %c0_76 = arith.constant 0 : index
    %c37 = arith.constant 37 : index
    %c0_77 = arith.constant 0 : index
    %58 = vector.load %arg2[%c0_75, %c0_76, %c37, %c0_77] : memref<1x1x342x4xbf16, #tpu.memory_space<vmem>>, vector<1x1x288x4xbf16>
    %59 = vector.shape_cast %58 : vector<1x1x288x4xbf16> to vector<288x4xbf16>
    %c0_78 = arith.constant 0 : index
    %c0_79 = arith.constant 0 : index
    %60 = vector.load %arg6[%c0_78, %c0_79] : memref<288x128xf32, #tpu.memory_space<vmem>>, vector<288x128xf32>
    %c7 = arith.constant 7 : index
    %c0_80 = arith.constant 0 : index
    %c0_81 = arith.constant 0 : index
    %61 = vector.load %arg3[%c7, %c0_80, %c0_81] : memref<9x4x128xbf16, #tpu.memory_space<vmem>>, vector<1x4x128xbf16>
    %62 = vector.shape_cast %61 : vector<1x4x128xbf16> to vector<4x128xbf16>
    %cst_82 = arith.constant dense<0.000000e+00> : vector<288x128xf32>
    %63 = tpu.matmul %59, %62, %cst_82 {dimension_numbers = #tpu.dot_dimension_numbers<[1], [0], [0], [1], [0, 0, 1, 1], [], []>} : vector<288x4xbf16>, vector<4x128xbf16>, vector<288x128xf32> -> vector<288x128xf32>
    %64 = arith.addf %60, %63 : vector<288x128xf32>
    %c0_83 = arith.constant 0 : index
    %c0_84 = arith.constant 0 : index
    %65 = vector.load %arg6[%c0_83, %c0_84] : memref<288x128xf32, #tpu.memory_space<vmem>>, vector<288x128xf32>
    tpu.vector_store %arg6[%c0_83, %c0_84], %64 {strides = array<i32>} : memref<288x128xf32, #tpu.memory_space<vmem>>, vector<288x128xf32>,
    %c0_85 = arith.constant 0 : index
    %c0_86 = arith.constant 0 : index
    %c38 = arith.constant 38 : index
    %c0_87 = arith.constant 0 : index
    %66 = vector.load %arg2[%c0_85, %c0_86, %c38, %c0_87] : memref<1x1x342x4xbf16, #tpu.memory_space<vmem>>, vector<1x1x288x4xbf16>
    %67 = vector.shape_cast %66 : vector<1x1x288x4xbf16> to vector<288x4xbf16>
    %c0_88 = arith.constant 0 : index
    %c0_89 = arith.constant 0 : index
    %68 = vector.load %arg6[%c0_88, %c0_89] : memref<288x128xf32, #tpu.memory_space<vmem>>, vector<288x128xf32>
    %c8 = arith.constant 8 : index
    %c0_90 = arith.constant 0 : index
    %c0_91 = arith.constant 0 : index
    %69 = vector.load %arg3[%c8, %c0_90, %c0_91] : memref<9x4x128xbf16, #tpu.memory_space<vmem>>, vector<1x4x128xbf16>
    %70 = vector.shape_cast %69 : vector<1x4x128xbf16> to vector<4x128xbf16>
    %cst_92 = arith.constant dense<0.000000e+00> : vector<288x128xf32>
    %71 = tpu.matmul %67, %70, %cst_92 {dimension_numbers = #tpu.dot_dimension_numbers<[1], [0], [0], [1], [0, 0, 1, 1], [], []>} : vector<288x4xbf16>, vector<4x128xbf16>, vector<288x128xf32> -> vector<288x128xf32>
    %72 = arith.addf %68, %71 : vector<288x128xf32>
    %c0_93 = arith.constant 0 : index
    %c0_94 = arith.constant 0 : index
    %73 = vector.load %arg6[%c0_93, %c0_94] : memref<288x128xf32, #tpu.memory_space<vmem>>, vector<288x128xf32>
    tpu.vector_store %arg6[%c0_93, %c0_94], %72 {strides = array<i32>} : memref<288x128xf32, #tpu.memory_space<vmem>>, vector<288x128xf32>,
    %c0_95 = arith.constant 0 : index
    %c0_96 = arith.constant 0 : index
    %74 = vector.load %arg6[%c0_95, %c0_96] : memref<288x128xf32, #tpu.memory_space<vmem>>, vector<288x128xf32>
    %c0_97 = arith.constant 0 : index
    %c0_98 = arith.constant 0 : index
    %75 = vector.load %arg4[%c0_97, %c0_98] : memref<1x128xf32, #tpu.memory_space<vmem>>, vector<1x128xf32>
    %76 = vector.broadcast %75 : vector<1x128xf32> to vector<288x128xf32>
    %77 = arith.addf %74, %76 : vector<288x128xf32>
    %cst_99 = arith.constant 0.000000e+00 : f32
    %78 = vector.broadcast %cst_99 : f32 to vector<288x128xf32>
    %79 = arith.maximumf %77, %78 : vector<288x128xf32>
    %c0_100 = arith.constant 0 : index
    %c0_101 = arith.constant 0 : index
    %c0_102 = arith.constant 0 : index
    %c0_103 = arith.constant 0 : index
    %80 = vector.load %arg5[%c0_100, %c0_101, %c0_102, %c0_103] : memref<1x1x288x128xf32, #tpu.memory_space<vmem>>, vector<1x1x288x128xf32>
    %81 = vector.shape_cast %80 : vector<1x1x288x128xf32> to vector<288x128xf32>
    %82 = vector.shape_cast %79 : vector<288x128xf32> to vector<1x1x288x128xf32>
    tpu.vector_store %arg5[%c0_100, %c0_101, %c0_102, %c0_103], %82 {strides = array<i32>} : memref<1x1x288x128xf32, #tpu.memory_space<vmem>>, vector<1x1x288x128xf32>,
    return
  }
  func.func @transform_0(%arg0: i32, %arg1: i32) -> (i32, i32, i32, i32) {
    %c0_i32 = arith.constant 0 : i32
    %c0_i32_0 = arith.constant 0 : i32
    %c0_i32_1 = arith.constant 0 : i32
    %c0_i32_2 = arith.constant 0 : i32
    return %c0_i32, %arg0, %c0_i32_0, %c0_i32_1 : i32, i32, i32, i32
  }
  func.func @transform_1(%arg0: i32, %arg1: i32) -> (i32, i32, i32) {
    %c0_i32 = arith.constant 0 : i32
    %c0_i32_0 = arith.constant 0 : i32
    %c0_i32_1 = arith.constant 0 : i32
    %c0_i32_2 = arith.constant 0 : i32
    return %c0_i32, %c0_i32_0, %c0_i32_1 : i32, i32, i32
  }
  func.func @transform_2(%arg0: i32, %arg1: i32) -> (i32, i32) {
    %c0_i32 = arith.constant 0 : i32
    %c0_i32_0 = arith.constant 0 : i32
    %c0_i32_1 = arith.constant 0 : i32
    return %c0_i32, %c0_i32_0 : i32, i32
  }
  func.func @transform_3(%arg0: i32, %arg1: i32) -> (i32, i32, i32, i32) {
    %c0_i32 = arith.constant 0 : i32
    %c0_i32_0 = arith.constant 0 : i32
    %c0_i32_1 = arith.constant 0 : i32
    return %arg0, %arg1, %c0_i32, %c0_i32_0 : i32, i32, i32, i32
  }
}

</mosaic_0001>

<llo_original>
// kernel: conv_bn_relu.1
$region0: #{conv_bn_relu.1}
  #allocation0 [shape = 'u32[]', space=smem, size = 0x4, offset = 0x4, fixed_abs, tag = 'smem constant byte address 0x4 - core index']
  #allocation1 [shape = 'u32[72,128]{1,0:T(1,128)}', space=vmem, size = 0x9000, scoped, tag = 'internal scratch']
  #allocation2 [shape = 'f32[288,128]{1,0:T(8,128)}', space=vmem, size = 0x24000, scoped, tag = 'scratch operand']
  %s0 = inlined_call_operand.vmem [shape: bf16[1,2,342,4], index: 0, kind: input, shape index: {}]
  %s1 = inlined_call_operand.vmem [shape: bf16[9,4,128], index: 1, kind: input, shape index: {}]
  %s2 = inlined_call_operand.vmem [shape: f32[1,128], index: 2, kind: input, shape index: {}]
  %s3 = inlined_call_operand.vmem [shape: f32[2,1,288,128], index: 3, kind: output, shape index: {}]
  %s4 = sld [smem:[#allocation0]]
  $region45: #{conv_bn_relu.1} parent=0
    _
  %s6 = ssub.s32 1, %s4
  %s7 = scalar_select 0, %s6, %s4
  loop: start=0, step=1, limit=4
  $region2: #{conv_bn_relu.1} parent=0 // loop_pre_header
    _
  $region3: #{conv_bn_relu.1} parent=0 // loop_header
    %s9 = sphi 0, %s13
    %p10 = scmp.ge.s32.totalorder %s9, 4
    %s16 = sphi 0, %s28
    %s17 = sphi 0, %s24
    %s18 = sphi 0, %s16
    %s19 = sphi 0, %s17
    %s20 = sphi 0, %s18
    %s21 = sphi 0, %s19
    %s31 = sphi 0, %s33
    %s34 = sphi 0, %s31
    %s35 = sphi 0, %s34
    %s51 = sphi 0, %s35
    %s55 = sphi 0, %s55
    %s57 = sphi 0, %s55
    %s58 = sphi 0, %s57
    %s72 = sphi 0, %s58
    %s76 = sphi 0, %s76
    %s78 = sphi 0, %s76
    %s79 = sphi 0, %s78
    %s93 = sphi 0, %s79
    %s101 = sphi 0, %s103
    %s104 = sphi 0, %s101
    %s105 = sphi 0, %s104
    %s121 = sphi 0, %s105
  $region4: #{conv_bn_relu.1} parent=0 // loop_header_branch
    %12 = sbr.rel (%p10) target = $region8
  $region5: #{conv_bn_relu.1} parent=0 // loop_body
    %s14 = ssub.s32 %s9, 1
    %s15 = ssub.s32 %s9, 2
    %s22 = sadd.s32 1, %s17
    %p23 = scmp.ge.s32.totalorder %s22, 1
    %s24 = scalar_select %p23, 0, %s22
    %s25 = sadd.s32 1, %s16
    %s26 = scalar_select %p23, %s25, %s16
    %p27 = scmp.ge.s32.totalorder %s26, 2
    %s28 = scalar_select %p27, 0, %s26
    %s29 = ssub.s32 %s16, %s28
    %p30 = scmp.eq.s32.totalorder %s29, 0
    %s32 = sadd.s32 %s31, 1
    %s33 = scalar_select %p30, %s31, %s32
    %p36 = pneg %p30
    %p37 = scmp.eq.s32.totalorder %s9, 1
    %p38 = por %p36, %p37
    %p39 = scmp.ne.s32.totalorder %s31, %s34
    %p40 = scmp.eq.s32.totalorder %s9, 0
    %p41 = por %p39, %p40
    %p42 = scmp.ne.s32.totalorder %s31, %s34
    %p43 = scmp.eq.s32.totalorder %s14, 1
    %p44 = por %p42, %p43
    %p45 = scmp.ne.s32.totalorder %s34, %s35
    %p46 = scmp.eq.s32.totalorder %s14, 0
    %p47 = por %p45, %p46
    %p48 = scmp.ne.s32.totalorder %s34, %s35
    %p49 = scmp.eq.s32.totalorder %s15, 1
    %p50 = por %p48, %p49
    %p52 = scmp.ne.s32.totalorder %s35, %s51
    %p53 = scmp.eq.s32.totalorder %s15, 0
    %p54 = por %p52, %p53
    %s56 = sadd.s32 %s55, 1
    %p59 = scmp.eq.s32.totalorder %s9, 1
    %p60 = scmp.ne.s32.totalorder %s55, %s57
    %p61 = scmp.eq.s32.totalorder %s9, 0
    %p62 = por %p60, %p61
    %p63 = scmp.ne.s32.totalorder %s55, %s57
    %p64 = scmp.eq.s32.totalorder %s14, 1
    %p65 = por %p63, %p64
    %p66 = scmp.ne.s32.totalorder %s57, %s58
    %p67 = scmp.eq.s32.totalorder %s14, 0
    %p68 = por %p66, %p67
    %p69 = scmp.ne.s32.totalorder %s57, %s58
    %p70 = scmp.eq.s32.totalorder %s15, 1
    %p71 = por %p69, %p70
    %p73 = scmp.ne.s32.totalorder %s58, %s72
    %p74 = scmp.eq.s32.totalorder %s15, 0
    %p75 = por %p73, %p74
    %s77 = sadd.s32 %s76, 1
    %p80 = scmp.eq.s32.totalorder %s9, 1
    %p81 = scmp.ne.s32.totalorder %s76, %s78
    %p82 = scmp.eq.s32.totalorder %s9, 0
    %p83 = por %p81, %p82
    %p84 = scmp.ne.s32.totalorder %s76, %s78
    %p85 = scmp.eq.s32.totalorder %s14, 1
    %p86 = por %p84, %p85
    %p87 = scmp.ne.s32.totalorder %s78, %s79
    %p88 = scmp.eq.s32.totalorder %s14, 0
    %p89 = por %p87, %p88
    %p90 = scmp.ne.s32.totalorder %s78, %s79
    %p91 = scmp.eq.s32.totalorder %s15, 1
    %p92 = por %p90, %p91
    %p94 = scmp.ne.s32.totalorder %s79, %s93
    %p95 = scmp.eq.s32.totalorder %s15, 0
    %p96 = por %p94, %p95
    %s97 = ssub.s32 %s16, %s28
    %s98 = ssub.s32 %s17, %s24
    %s99 = sor.u32 %s97, %s98
    %p100 = scmp.eq.s32.totalorder %s99, 0
    %s102 = sadd.s32 %s101, 1
    %s103 = scalar_select %p100, %s101, %s102
    %p106 = pneg %p100
    %p107 = scmp.eq.s32.totalorder %s9, 1
    %p108 = por %p106, %p107
    %p109 = scmp.ne.s32.totalorder %s101, %s104
    %p110 = scmp.eq.s32.totalorder %s9, 0
    %p111 = por %p109, %p110
    %p112 = scmp.ne.s32.totalorder %s101, %s104
    %p113 = scmp.eq.s32.totalorder %s14, 1
    %p114 = por %p112, %p113
    %p115 = scmp.ne.s32.totalorder %s104, %s105
    %p116 = scmp.eq.s32.totalorder %s14, 0
    %p117 = por %p115, %p116
    %p118 = scmp.ne.s32.totalorder %s104, %s105
    %p119 = scmp.eq.s32.totalorder %s15, 1
    %p120 = por %p118, %p119
    %p122 = scmp.ne.s32.totalorder %s105, %s121
    %p123 = scmp.eq.s32.totalorder %s15, 0
    %p124 = por %p122, %p123
    %p125 = scmp.le.s32.totalorder 1, %s9
    %p126 = scmp.lt.s32.totalorder %s9, 3
    %p127 = pnand %p125, %p126
    %p128 = pneg %p127
    // Predicated region
    $region9: #{conv_bn_relu.1} parent=5 // pred_check
      _
    $region10: #{conv_bn_relu.1} parent=5 // pred_check_branch
      %130 = sbr.rel (%p127) target = $region12
    $region11: #{conv_bn_relu.1} parent=5 // pred_region
      %s131 = ssub.s32 %s9, 1
      // Predicated region
      $region13: #{conv_bn_relu.1} parent=11 // pred_check
        %p132 = pneg %p68
      $region14: #{conv_bn_relu.1} parent=11 // pred_check_branch
        %134 = sbr.rel (%p132) target = $region16
      $region15: #{conv_bn_relu.1} parent=11 // pred_region
        _
      $region16: #{conv_bn_relu.1} parent=11 // pred_fallthru
        _
      // Predicated region
      $region17: #{conv_bn_relu.1} parent=11 // pred_check
        %p135 = pneg %p89
      $region18: #{conv_bn_relu.1} parent=11 // pred_check_branch
        %137 = sbr.rel (%p135) target = $region20
      $region19: #{conv_bn_relu.1} parent=11 // pred_region
        _
      $region20: #{conv_bn_relu.1} parent=11 // pred_fallthru
        _
    $region12: #{conv_bn_relu.1} parent=5 // pred_fallthru
      _
    %p138 = scmp.lt.s32.totalorder %s9, 2
    // Predicated region
    $region21: #{conv_bn_relu.1} parent=5 // pred_check
      %p139 = pneg %p138
    $region22: #{conv_bn_relu.1} parent=5 // pred_check_branch
      %141 = sbr.rel (%p139) target = $region24
    $region23: #{conv_bn_relu.1} parent=5 // pred_region
      // Predicated region
      $region25: #{conv_bn_relu.1} parent=23 // pred_check
        %p142 = pneg %p41
      $region26: #{conv_bn_relu.1} parent=23 // pred_check_branch
        %144 = sbr.rel (%p142) target = $region28
      $region27: #{conv_bn_relu.1} parent=23 // pred_region
        %p145 = scmp.lt.s32.totalorder %s16, 1
        %s146 = scalar_select %p145, %s16, 1
        %s147 = smul.addr %s146, 43
        %s148 = smul.addr %s147, 4
        %s149 = scalar_lea.vmem %s0, %s148
      $region28: #{conv_bn_relu.1} parent=23 // pred_fallthru
        _
    $region24: #{conv_bn_relu.1} parent=5 // pred_fallthru
      _
    %p150 = scmp.le.s32.totalorder 1, %s9
    %p151 = scmp.lt.s32.totalorder %s9, 3
    %p152 = pnand %p150, %p151
    %p153 = pneg %p152
    // Predicated region
    $region29: #{conv_bn_relu.1} parent=5 // pred_check
      _
    $region30: #{conv_bn_relu.1} parent=5 // pred_check_branch
      %155 = sbr.rel (%p152) target = $region32
    $region31: #{conv_bn_relu.1} parent=5 // pred_region
      %s156 = ssub.s32 %s9, 1
      %p157 = scmp.lt.s32.totalorder %s18, 1
      %s158 = scalar_select %p157, %s18, 1
      %s159 = smul.addr %s158, 43
      %s160 = smul.addr %s159, 4
      %s161 = scalar_lea.vmem %s0, %s160
      %p162 = pneg %p47
      %p163 = pneg %p44
      %p164 = pneg %p68
      %p165 = pneg %p65
      %p166 = pneg %p89
      %p167 = pneg %p86
      %p168 = pneg %p117
      %p169 = pneg %p114
      %p170 = scmp.lt.s32.totalorder %s18, 1
      %s171 = scalar_select %p170, %s18, 1
      %p172 = scmp.lt.s32.totalorder %s19, 0
      %s173 = scalar_select %p172, %s19, 0
      %s174 = smul.addr %s173, 36
      %s175 = smul.addr %s171, 36
      %s176 = sadd.s32 %s174, %s175
      %s177 = smul.addr %s176, 8
      %s178 = scalar_lea.vmem %s3, %s177
      %p179 = scmp.lt.s32.totalorder %s18, 1
      %s180 = scalar_select %p179, %s18, 1
      %s181 = smul.addr %s180, 43
      %s182 = smul.addr %s181, 4
      %s183 = scalar_lea.vmem %s0, %s182
      %p184 = scmp.lt.s32.totalorder %s18, 1
      %s185 = scalar_select %p184, %s18, 1
      %p186 = scmp.lt.s32.totalorder %s19, 0
      %s187 = scalar_select %p186, %s19, 0
      %s188 = smul.addr %s187, 36
      %s189 = smul.addr %s185, 36
      %s190 = sadd.s32 %s188, %s189
      %s191 = smul.addr %s190, 8
      %s192 = scalar_lea.vmem %s3, %s191
      %194 = vst [vmem:[#allocation2] sm:$0xff] 0.0
      %195 = vst [vmem:[#allocation2 + $0x8] sm:$0xff] 0.0
      %196 = vst [vmem:[#allocation2 + $0x10] sm:$0xff] 0.0
      %197 = vst [vmem:[#allocation2 + $0x18] sm:$0xff] 0.0
      %198 = vst [vmem:[#allocation2 + $0x20] sm:$0xff] 0.0
      %199 = vst [vmem:[#allocation2 + $0x28] sm:$0xff] 0.0
      %200 = vst [vmem:[#allocation2 + $0x30] sm:$0xff] 0.0
      %201 = vst [vmem:[#allocation2 + $0x38] sm:$0xff] 0.0
      %202 = vst [vmem:[#allocation2 + $0x40] sm:$0xff] 0.0
      %203 = vst [vmem:[#allocation2 + $0x48] sm:$0xff] 0.0
      %204 = vst [vmem:[#allocation2 + $0x50] sm:$0xff] 0.0
      %205 = vst [vmem:[#allocation2 + $0x58] sm:$0xff] 0.0
      %206 = vst [vmem:[#allocation2 + $0x60] sm:$0xff] 0.0
      %207 = vst [vmem:[#allocation2 + $0x68] sm:$0xff] 0.0
      %208 = vst [vmem:[#allocation2 + $0x70] sm:$0xff] 0.0
      %209 = vst [vmem:[#allocation2 + $0x78] sm:$0xff] 0.0
      %210 = vst [vmem:[#allocation2 + $0x80] sm:$0xff] 0.0
      %211 = vst [vmem:[#allocation2 + $0x88] sm:$0xff] 0.0
      %212 = vst [vmem:[#allocation2 + $0x90] sm:$0xff] 0.0
      %213 = vst [vmem:[#allocation2 + $0x98] sm:$0xff] 0.0
      %214 = vst [vmem:[#allocation2 + $0xa0] sm:$0xff] 0.0
      %215 = vst [vmem:[#allocation2 + $0xa8] sm:$0xff] 0.0
      %216 = vst [vmem:[#allocation2 + $0xb0] sm:$0xff] 0.0
      %217 = vst [vmem:[#allocation2 + $0xb8] sm:$0xff] 0.0
      %218 = vst [vmem:[#allocation2 + $0xc0] sm:$0xff] 0.0
      %219 = vst [vmem:[#allocation2 + $0xc8] sm:$0xff] 0.0
      %220 = vst [vmem:[#allocation2 + $0xd0] sm:$0xff] 0.0
      %221 = vst [vmem:[#allocation2 + $0xd8] sm:$0xff] 0.0
      %222 = vst [vmem:[#allocation2 + $0xe0] sm:$0xff] 0.0
      %223 = vst [vmem:[#allocation2 + $0xe8] sm:$0xff] 0.0
      %224 = vst [vmem:[#allocation2 + $0xf0] sm:$0xff] 0.0
      %225 = vst [vmem:[#allocation2 + $0xf8] sm:$0xff] 0.0
      %226 = vst [vmem:[#allocation2 + $0x100] sm:$0xff] 0.0
      %227 = vst [vmem:[#allocation2 + $0x108] sm:$0xff] 0.0
      %228 = vst [vmem:[#allocation2 + $0x110] sm:$0xff] 0.0
      %229 = vst [vmem:[#allocation2 + $0x118] sm:$0xff] 0.0
      %v230 = vld [vmem:[%s183] sm:$0xf]
      %v231 = vld [vmem:[%s183 + $0x4] sm:$0xf]
      %v232 = vld [vmem:[%s183 + $0x8] sm:$0xf]
      %v233 = vld [vmem:[%s183 + $0xc] sm:$0xf]
      %v234 = vld [vmem:[%s183 + $0x10] sm:$0xf]
      %v235 = vld [vmem:[%s183 + $0x14] sm:$0xf]
      %v236 = vld [vmem:[%s183 + $0x18] sm:$0xf]
      %v237 = vld [vmem:[%s183 + $0x1c] sm:$0xf]
      %v238 = vld [vmem:[%s183 + $0x20] sm:$0xf]
      %v239 = vld [vmem:[%s183 + $0x24] sm:$0xf]
      %v240 = vld [vmem:[%s183 + $0x28] sm:$0xf]
      %v241 = vld [vmem:[%s183 + $0x2c] sm:$0xf]
      %v242 = vld [vmem:[%s183 + $0x30] sm:$0xf]
      %v243 = vld [vmem:[%s183 + $0x34] sm:$0xf]
      %v244 = vld [vmem:[%s183 + $0x38] sm:$0xf]
      %v245 = vld [vmem:[%s183 + $0x3c] sm:$0xf]
      %v246 = vld [vmem:[%s183 + $0x40] sm:$0xf]
      %v247 = vld [vmem:[%s183 + $0x44] sm:$0xf]
      %v248 = vld [vmem:[%s183 + $0x48] sm:$0xf]
      %v249 = vld [vmem:[%s183 + $0x4c] sm:$0xf]
      %v250 = vld [vmem:[%s183 + $0x50] sm:$0xf]
      %v251 = vld [vmem:[%s183 + $0x54] sm:$0xf]
      %v252 = vld [vmem:[%s183 + $0x58] sm:$0xf]
      %v253 = vld [vmem:[%s183 + $0x5c] sm:$0xf]
      %v254 = vld [vmem:[%s183 + $0x60] sm:$0xf]
      %v255 = vld [vmem:[%s183 + $0x64] sm:$0xf]
      %v256 = vld [vmem:[%s183 + $0x68] sm:$0xf]
      %v257 = vld [vmem:[%s183 + $0x6c] sm:$0xf]
      %v258 = vld [vmem:[%s183 + $0x70] sm:$0xf]
      %v259 = vld [vmem:[%s183 + $0x74] sm:$0xf]
      %v260 = vld [vmem:[%s183 + $0x78] sm:$0xf]
      %v261 = vld [vmem:[%s183 + $0x7c] sm:$0xf]
      %v262 = vld [vmem:[%s183 + $0x80] sm:$0xf]
      %v263 = vld [vmem:[%s183 + $0x84] sm:$0xf]
      %v264 = vld [vmem:[%s183 + $0x88] sm:$0xf]
      %v265 = vld [vmem:[%s183 + $0x8c] sm:$0xf]
      %v266 = vld [vmem:[#allocation2] sm:$0xff]
      %v267 = vld [vmem:[#allocation2 + $0x8] sm:$0xff]
      %v268 = vld [vmem:[#allocation2 + $0x10] sm:$0xff]
      %v269 = vld [vmem:[#allocation2 + $0x18] sm:$0xff]
      %v270 = vld [vmem:[#allocation2 + $0x20] sm:$0xff]
      %v271 = vld [vmem:[#allocation2 + $0x28] sm:$0xff]
      %v272 = vld [vmem:[#allocation2 + $0x30] sm:$0xff]
      %v273 = vld [vmem:[#allocation2 + $0x38] sm:$0xff]
      %v274 = vld [vmem:[#allocation2 + $0x40] sm:$0xff]
      %v275 = vld [vmem:[#allocation2 + $0x48] sm:$0xff]
      %v276 = vld [vmem:[#allocation2 + $0x50] sm:$0xff]
      %v277 = vld [vmem:[#allocation2 + $0x58] sm:$0xff]
      %v278 = vld [vmem:[#allocation2 + $0x60] sm:$0xff]
      %v279 = vld [vmem:[#allocation2 + $0x68] sm:$0xff]
      %v280 = vld [vmem:[#allocation2 + $0x70] sm:$0xff]
      %v281 = vld [vmem:[#allocation2 + $0x78] sm:$0xff]
      %v282 = vld [vmem:[#allocation2 + $0x80] sm:$0xff]
      %v283 = vld [vmem:[#allocation2 + $0x88] sm:$0xff]
      %v284 = vld [vmem:[#allocation2 + $0x90] sm:$0xff]
      %v285 = vld [vmem:[#allocation2 + $0x98] sm:$0xff]
      %v286 = vld [vmem:[#allocation2 + $0xa0] sm:$0xff]
      %v287 = vld [vmem:[#allocation2 + $0xa8] sm:$0xff]
      %v288 = vld [vmem:[#allocation2 + $0xb0] sm:$0xff]
      %v289 = vld [vmem:[#allocation2 + $0xb8] sm:$0xff]
      %v290 = vld [vmem:[#allocation2 + $0xc0] sm:$0xff]
      %v291 = vld [vmem:[#allocation2 + $0xc8] sm:$0xff]
      %v292 = vld [vmem:[#allocation2 + $0xd0] sm:$0xff]
      %v293 = vld [vmem:[#allocation2 + $0xd8] sm:$0xff]
      %v294 = vld [vmem:[#allocation2 + $0xe0] sm:$0xff]
      %v295 = vld [vmem:[#allocation2 + $0xe8] sm:$0xff]
      %v296 = vld [vmem:[#allocation2 + $0xf0] sm:$0xff]
      %v297 = vld [vmem:[#allocation2 + $0xf8] sm:$0xff]
      %v298 = vld [vmem:[#allocation2 + $0x100] sm:$0xff]
      %v299 = vld [vmem:[#allocation2 + $0x108] sm:$0xff]
      %v300 = vld [vmem:[#allocation2 + $0x110] sm:$0xff]
      %v301 = vld [vmem:[#allocation2 + $0x118] sm:$0xff]
      %v302 = vld [vmem:[%s1] sm:$0x3]
      %v339 = vunpack.c.l.b16 %v230
      %v340 = vunpack.c.l.b16 %v231
      %v341 = vunpack.c.l.b16 %v232
      %v342 = vunpack.c.l.b16 %v233
      %v343 = vunpack.c.l.b16 %v234
      %v344 = vunpack.c.l.b16 %v235
      %v345 = vunpack.c.l.b16 %v236
      %v346 = vunpack.c.l.b16 %v237
      %v347 = vunpack.c.l.b16 %v238
      %v348 = vunpack.c.l.b16 %v239
      %v349 = vunpack.c.l.b16 %v240
      %v350 = vunpack.c.l.b16 %v241
      %v351 = vunpack.c.l.b16 %v242
      %v352 = vunpack.c.l.b16 %v243
      %v353 = vunpack.c.l.b16 %v244
      %v354 = vunpack.c.l.b16 %v245
      %v355 = vunpack.c.l.b16 %v246
      %v356 = vunpack.c.l.b16 %v247
      %v357 = vunpack.c.l.b16 %v248
      %v358 = vunpack.c.l.b16 %v249
      %v359 = vunpack.c.l.b16 %v250
      %v360 = vunpack.c.l.b16 %v251
      %v361 = vunpack.c.l.b16 %v252
      %v362 = vunpack.c.l.b16 %v253
      %v363 = vunpack.c.l.b16 %v254
      %v364 = vunpack.c.l.b16 %v255
      %v365 = vunpack.c.l.b16 %v256
      %v366 = vunpack.c.l.b16 %v257
      %v367 = vunpack.c.l.b16 %v258
      %v368 = vunpack.c.l.b16 %v259
      %v369 = vunpack.c.l.b16 %v260
      %v370 = vunpack.c.l.b16 %v261
      %v371 = vunpack.c.l.b16 %v262
      %v372 = vunpack.c.l.b16 %v263
      %v373 = vunpack.c.l.b16 %v264
      %v374 = vunpack.c.l.b16 %v265
      %v375 = vpack.c.b16 %v340, %v339
      %v376 = vpack.c.b16 %v342, %v341
      %v377 = vpack.c.b16 %v344, %v343
      %v378 = vpack.c.b16 %v346, %v345
      %v379 = vpack.c.b16 %v348, %v347
      %v380 = vpack.c.b16 %v350, %v349
      %v381 = vpack.c.b16 %v352, %v351
      %v382 = vpack.c.b16 %v354, %v353
      %v383 = vpack.c.b16 %v356, %v355
      %v384 = vpack.c.b16 %v358, %v357
      %v385 = vpack.c.b16 %v360, %v359
      %v386 = vpack.c.b16 %v362, %v361
      %v387 = vpack.c.b16 %v364, %v363
      %v388 = vpack.c.b16 %v366, %v365
      %v389 = vpack.c.b16 %v368, %v367
      %v390 = vpack.c.b16 %v370, %v369
      %v391 = vpack.c.b16 %v372, %v371
      %v392 = vpack.c.b16 %v374, %v373
      %vm393 = vcmask 31744
      %v395 = vsel %vm393, %v375, 0
      %v398 = vsel %vm393, %v376, 0
      %v401 = vsel %vm393, %v377, 0
      %v404 = vsel %vm393, %v378, 0
      %v407 = vsel %vm393, %v379, 0
      %v410 = vsel %vm393, %v380, 0
      %v413 = vsel %vm393, %v381, 0
      %v416 = vsel %vm393, %v382, 0
      %v419 = vsel %vm393, %v383, 0
      %v422 = vsel %vm393, %v384, 0
      %v425 = vsel %vm393, %v385, 0
      %v428 = vsel %vm393, %v386, 0
      %v431 = vsel %vm393, %v387, 0
      %v434 = vsel %vm393, %v388, 0
      %v437 = vsel %vm393, %v389, 0
      %v440 = vsel %vm393, %v390, 0
      %v443 = vsel %vm393, %v391, 0
      %v446 = vsel %vm393, %v392, 0
      %vm448 = vcmask 1041408
      %v450 = vsel %vm448, %v302, 0
      %452 = vmatpush.bf16.msra.mxu0 0
      %453 = vmatpush.bf16.msra.mxu0 0
      %454 = vmatpush.bf16.msra.mxu0 0
      %455 = vmatpush.bf16.msra.mxu0 0
      %456 = vmatpush.bf16.msra.mxu0 0
      %457 = vmatpush.bf16.msra.mxu0 0
      %458 = vmatpush.bf16.msra.mxu0 0
      %459 = vmatpush.bf16.msra.mxu0 %v450
      %460 = vmatmul.bf16.gmra.mxu0 %v395
      %v461 = vpop.f32.mrf.mxu0
      %v462 = vadd.f32 0.0, %v461
      %v463 = vpop.f32.mrf.mxu0
      %v464 = vadd.f32 0.0, %v463
      %465 = vmatmul.bf16.gmra.mxu0 %v398
      %v466 = vpop.f32.mrf.mxu0
      %v467 = vadd.f32 0.0, %v466
      %v468 = vpop.f32.mrf.mxu0
      %v469 = vadd.f32 0.0, %v468
      %470 = vmatmul.bf16.gmra.mxu0 %v401
      %v471 = vpop.f32.mrf.mxu0
      %v472 = vadd.f32 0.0, %v471
      %v473 = vpop.f32.mrf.mxu0
      %v474 = vadd.f32 0.0, %v473
      %475 = vmatmul.bf16.gmra.mxu0 %v404
      %v476 = vpop.f32.mrf.mxu0
      %v477 = vadd.f32 0.0, %v476
      %v478 = vpop.f32.mrf.mxu0
      %v479 = vadd.f32 0.0, %v478
      %480 = vmatmul.bf16.gmra.mxu0 %v407
      %v481 = vpop.f32.mrf.mxu0
      %v482 = vadd.f32 0.0, %v481
      %v483 = vpop.f32.mrf.mxu0
      %v484 = vadd.f32 0.0, %v483
      %485 = vmatmul.bf16.gmra.mxu0 %v410
      %v486 = vpop.f32.mrf.mxu0
      %v487 = vadd.f32 0.0, %v486
      %v488 = vpop.f32.mrf.mxu0
      %v489 = vadd.f32 0.0, %v488
      %490 = vmatmul.bf16.gmra.mxu0 %v413
      %v491 = vpop.f32.mrf.mxu0
      %v492 = vadd.f32 0.0, %v491
      %v493 = vpop.f32.mrf.mxu0
      %v494 = vadd.f32 0.0, %v493
      %495 = vmatmul.bf16.gmra.mxu0 %v416
      %v496 = vpop.f32.mrf.mxu0
      %v497 = vadd.f32 0.0, %v496
      %v498 = vpop.f32.mrf.mxu0
      %v499 = vadd.f32 0.0, %v498
      %500 = vmatmul.bf16.gmra.mxu0 %v419
      %v501 = vpop.f32.mrf.mxu0
      %v502 = vadd.f32 0.0, %v501
      %v503 = vpop.f32.mrf.mxu0
      %v504 = vadd.f32 0.0, %v503
      %505 = vmatmul.bf16.gmra.mxu0 %v422
      %v506 = vpop.f32.mrf.mxu0
      %v507 = vadd.f32 0.0, %v506
      %v508 = vpop.f32.mrf.mxu0
      %v509 = vadd.f32 0.0, %v508
      %510 = vmatmul.bf16.gmra.mxu0 %v425
      %v511 = vpop.f32.mrf.mxu0
      %v512 = vadd.f32 0.0, %v511
      %v513 = vpop.f32.mrf.mxu0
      %v514 = vadd.f32 0.0, %v513
      %515 = vmatmul.bf16.gmra.mxu0 %v428
      %v516 = vpop.f32.mrf.mxu0
      %v517 = vadd.f32 0.0, %v516
      %v518 = vpop.f32.mrf.mxu0
      %v519 = vadd.f32 0.0, %v518
      %520 = vmatmul.bf16.gmra.mxu0 %v431
      %v521 = vpop.f32.mrf.mxu0
      %v522 = vadd.f32 0.0, %v521
      %v523 = vpop.f32.mrf.mxu0
      %v524 = vadd.f32 0.0, %v523
      %525 = vmatmul.bf16.gmra.mxu0 %v434
      %v526 = vpop.f32.mrf.mxu0
      %v527 = vadd.f32 0.0, %v526
      %v528 = vpop.f32.mrf.mxu0
      %v529 = vadd.f32 0.0, %v528
      %530 = vmatmul.bf16.gmra.mxu0 %v437
      %v531 = vpop.f32.mrf.mxu0
      %v532 = vadd.f32 0.0, %v531
      %v533 = vpop.f32.mrf.mxu0
      %v534 = vadd.f32 0.0, %v533
      %535 = vmatmul.bf16.gmra.mxu0 %v440
      %v536 = vpop.f32.mrf.mxu0
      %v537 = vadd.f32 0.0, %v536
      %v538 = vpop.f32.mrf.mxu0
      %v539 = vadd.f32 0.0, %v538
      %540 = vmatmul.bf16.gmra.mxu0 %v443
      %v541 = vpop.f32.mrf.mxu0
      %v542 = vadd.f32 0.0, %v541
      %v543 = vpop.f32.mrf.mxu0
      %v544 = vadd.f32 0.0, %v543
      %545 = vmatmul.bf16.gmra.mxu0 %v446
      %v546 = vpop.f32.mrf.mxu0
      %v547 = vadd.f32 0.0, %v546
      %v548 = vpop.f32.mrf.mxu0
      %v549 = vadd.f32 0.0, %v548
      %550 = vdwg.mxu0
      %v551 = vadd.f32 %v266, %v462
      %v552 = vadd.f32 %v267, %v464
      %v553 = vadd.f32 %v268, %v467
      %v554 = vadd.f32 %v269, %v469
      %v555 = vadd.f32 %v270, %v472
      %v556 = vadd.f32 %v271, %v474
      %v557 = vadd.f32 %v272, %v477
      %v558 = vadd.f32 %v273, %v479
      %v559 = vadd.f32 %v274, %v482
      %v560 = vadd.f32 %v275, %v484
      %v561 = vadd.f32 %v276, %v487
      %v562 = vadd.f32 %v277, %v489
      %v563 = vadd.f32 %v278, %v492
      %v564 = vadd.f32 %v279, %v494
      %v565 = vadd.f32 %v280, %v497
      %v566 = vadd.f32 %v281, %v499
      %v567 = vadd.f32 %v282, %v502
      %v568 = vadd.f32 %v283, %v504
      %v569 = vadd.f32 %v284, %v507
      %v570 = vadd.f32 %v285, %v509
      %v571 = vadd.f32 %v286, %v512
      %v572 = vadd.f32 %v287, %v514
      %v573 = vadd.f32 %v288, %v517
      %v574 = vadd.f32 %v289, %v519
      %v575 = vadd.f32 %v290, %v522
      %v576 = vadd.f32 %v291, %v524
      %v577 = vadd.f32 %v292, %v527
      %v578 = vadd.f32 %v293, %v529
      %v579 = vadd.f32 %v294, %v532
      %v580 = vadd.f32 %v295, %v534
      %v581 = vadd.f32 %v296, %v537
      %v582 = vadd.f32 %v297, %v539
      %v583 = vadd.f32 %v298, %v542
      %v584 = vadd.f32 %v299, %v544
      %v585 = vadd.f32 %v300, %v547
      %v586 = vadd.f32 %v301, %v549
      %587 = vst [vmem:[#allocation2] sm:$0xff] %v551
      %588 = vst [vmem:[#allocation2 + $0x8] sm:$0xff] %v552
      %589 = vst [vmem:[#allocation2 + $0x10] sm:$0xff] %v553
      %590 = vst [vmem:[#allocation2 + $0x18] sm:$0xff] %v554
      %591 = vst [vmem:[#allocation2 + $0x20] sm:$0xff] %v555
      %592 = vst [vmem:[#allocation2 + $0x28] sm:$0xff] %v556
      %593 = vst [vmem:[#allocation2 + $0x30] sm:$0xff] %v557
      %594 = vst [vmem:[#allocation2 + $0x38] sm:$0xff] %v558
      %595 = vst [vmem:[#allocation2 + $0x40] sm:$0xff] %v559
      %596 = vst [vmem:[#allocation2 + $0x48] sm:$0xff] %v560
      %597 = vst [vmem:[#allocation2 + $0x50] sm:$0xff] %v561
      %598 = vst [vmem:[#allocation2 + $0x58] sm:$0xff] %v562
      %599 = vst [vmem:[#allocation2 + $0x60] sm:$0xff] %v563
      %600 = vst [vmem:[#allocation2 + $0x68] sm:$0xff] %v564
      %601 = vst [vmem:[#allocation2 + $0x70] sm:$0xff] %v565
      %602 = vst [vmem:[#allocation2 + $0x78] sm:$0xff] %v566
      %603 = vst [vmem:[#allocation2 + $0x80] sm:$0xff] %v567
      %604 = vst [vmem:[#allocation2 + $0x88] sm:$0xff] %v568
      %605 = vst [vmem:[#allocation2 + $0x90] sm:$0xff] %v569
      %606 = vst [vmem:[#allocation2 + $0x98] sm:$0xff] %v570
      %607 = vst [vmem:[#allocation2 + $0xa0] sm:$0xff] %v571
      %608 = vst [vmem:[#allocation2 + $0xa8] sm:$0xff] %v572
      %609 = vst [vmem:[#allocation2 + $0xb0] sm:$0xff] %v573
      %610 = vst [vmem:[#allocation2 + $0xb8] sm:$0xff] %v574
      %611 = vst [vmem:[#allocation2 + $0xc0] sm:$0xff] %v575
      %612 = vst [vmem:[#allocation2 + $0xc8] sm:$0xff] %v576
      %613 = vst [vmem:[#allocation2 + $0xd0] sm:$0xff] %v577
      %614 = vst [vmem:[#allocation2 + $0xd8] sm:$0xff] %v578
      %615 = vst [vmem:[#allocation2 + $0xe0] sm:$0xff] %v579
      %616 = vst [vmem:[#allocation2 + $0xe8] sm:$0xff] %v580
      %617 = vst [vmem:[#allocation2 + $0xf0] sm:$0xff] %v581
      %618 = vst [vmem:[#allocation2 + $0xf8] sm:$0xff] %v582
      %619 = vst [vmem:[#allocation2 + $0x100] sm:$0xff] %v583
      %620 = vst [vmem:[#allocation2 + $0x108] sm:$0xff] %v584
      %621 = vst [vmem:[#allocation2 + $0x110] sm:$0xff] %v585
      %622 = vst [vmem:[#allocation2 + $0x118] sm:$0xff] %v586
      %v623 = vld [vmem:[%s183] sm:$0xf]
      %v624 = vld [vmem:[%s183 + $0x4] sm:$0xf]
      %v625 = vld [vmem:[%s183 + $0x8] sm:$0xf]
      %v626 = vld [vmem:[%s183 + $0xc] sm:$0xf]
      %v627 = vld [vmem:[%s183 + $0x10] sm:$0xf]
      %v628 = vld [vmem:[%s183 + $0x14] sm:$0xf]
      %v629 = vld [vmem:[%s183 + $0x18] sm:$0xf]
      %v630 = vld [vmem:[%s183 + $0x1c] sm:$0xf]
      %v631 = vld [vmem:[%s183 + $0x20] sm:$0xf]
      %v632 = vld [vmem:[%s183 + $0x24] sm:$0xf]
      %v633 = vld [vmem:[%s183 + $0x28] sm:$0xf]
      %v634 = vld [vmem:[%s183 + $0x2c] sm:$0xf]
      %v635 = vld [vmem:[%s183 + $0x30] sm:$0xf]
      %v636 = vld [vmem:[%s183 + $0x34] sm:$0xf]
      %v637 = vld [vmem:[%s183 + $0x38] sm:$0xf]
      %v638 = vld [vmem:[%s183 + $0x3c] sm:$0xf]
      %v639 = vld [vmem:[%s183 + $0x40] sm:$0xf]
      %v640 = vld [vmem:[%s183 + $0x44] sm:$0xf]
      %v641 = vld [vmem:[%s183 + $0x48] sm:$0xf]
      %v642 = vld [vmem:[%s183 + $0x4c] sm:$0xf]
      %v643 = vld [vmem:[%s183 + $0x50] sm:$0xf]
      %v644 = vld [vmem:[%s183 + $0x54] sm:$0xf]
      %v645 = vld [vmem:[%s183 + $0x58] sm:$0xf]
      %v646 = vld [vmem:[%s183 + $0x5c] sm:$0xf]
      %v647 = vld [vmem:[%s183 + $0x60] sm:$0xf]
      %v648 = vld [vmem:[%s183 + $0x64] sm:$0xf]
      %v649 = vld [vmem:[%s183 + $0x68] sm:$0xf]
      %v650 = vld [vmem:[%s183 + $0x6c] sm:$0xf]
      %v651 = vld [vmem:[%s183 + $0x70] sm:$0xf]
      %v652 = vld [vmem:[%s183 + $0x74] sm:$0xf]
      %v653 = vld [vmem:[%s183 + $0x78] sm:$0xf]
      %v654 = vld [vmem:[%s183 + $0x7c] sm:$0xf]
      %v655 = vld [vmem:[%s183 + $0x80] sm:$0xf]
      %v656 = vld [vmem:[%s183 + $0x84] sm:$0xf]
      %v657 = vld [vmem:[%s183 + $0x88] sm:$0xf]
      %v658 = vld [vmem:[%s183 + $0x8c] sm:$0xf]
      %v659 = vld [vmem:[%s183 + $0x90] sm:$0x1]
      %v660 = vld [vmem:[#allocation2] sm:$0xff]
      %v661 = vld [vmem:[#allocation2 + $0x8] sm:$0xff]
      %v662 = vld [vmem:[#allocation2 + $0x10] sm:$0xff]
      %v663 = vld [vmem:[#allocation2 + $0x18] sm:$0xff]
      %v664 = vld [vmem:[#allocation2 + $0x20] sm:$0xff]
      %v665 = vld [vmem:[#allocation2 + $0x28] sm:$0xff]
      %v666 = vld [vmem:[#allocation2 + $0x30] sm:$0xff]
      %v667 = vld [vmem:[#allocation2 + $0x38] sm:$0xff]
      %v668 = vld [vmem:[#allocation2 + $0x40] sm:$0xff]
      %v669 = vld [vmem:[#allocation2 + $0x48] sm:$0xff]
      %v670 = vld [vmem:[#allocation2 + $0x50] sm:$0xff]
      %v671 = vld [vmem:[#allocation2 + $0x58] sm:$0xff]
      %v672 = vld [vmem:[#allocation2 + $0x60] sm:$0xff]
      %v673 = vld [vmem:[#allocation2 + $0x68] sm:$0xff]
      %v674 = vld [vmem:[#allocation2 + $0x70] sm:$0xff]
      %v675 = vld [vmem:[#allocation2 + $0x78] sm:$0xff]
      %v676 = vld [vmem:[#allocation2 + $0x80] sm:$0xff]
      %v677 = vld [vmem:[#allocation2 + $0x88] sm:$0xff]
      %v678 = vld [vmem:[#allocation2 + $0x90] sm:$0xff]
      %v679 = vld [vmem:[#allocation2 + $0x98] sm:$0xff]
      %v680 = vld [vmem:[#allocation2 + $0xa0] sm:$0xff]
      %v681 = vld [vmem:[#allocation2 + $0xa8] sm:$0xff]
      %v682 = vld [vmem:[#allocation2 + $0xb0] sm:$0xff]
      %v683 = vld [vmem:[#allocation2 + $0xb8] sm:$0xff]
      %v684 = vld [vmem:[#allocation2 + $0xc0] sm:$0xff]
      %v685 = vld [vmem:[#allocation2 + $0xc8] sm:$0xff]
      %v686 = vld [vmem:[#allocation2 + $0xd0] sm:$0xff]
      %v687 = vld [vmem:[#allocation2 + $0xd8] sm:$0xff]
      %v688 = vld [vmem:[#allocation2 + $0xe0] sm:$0xff]
      %v689 = vld [vmem:[#allocation2 + $0xe8] sm:$0xff]
      %v690 = vld [vmem:[#allocation2 + $0xf0] sm:$0xff]
      %v691 = vld [vmem:[#allocation2 + $0xf8] sm:$0xff]
      %v692 = vld [vmem:[#allocation2 + $0x100] sm:$0xff]
      %v693 = vld [vmem:[#allocation2 + $0x108] sm:$0xff]
      %v694 = vld [vmem:[#allocation2 + $0x110] sm:$0xff]
      %v695 = vld [vmem:[#allocation2 + $0x118] sm:$0xff]
      %s696 = scalar_lea.vmem %s1, 2
      %v697 = vld [vmem:[%s696] sm:$0x3]
      %v735 = vunpack.c.l.b16 %v623
      %v736 = vunpack.c.l.b16 %v624
      %v737 = vunpack.c.l.b16 %v625
      %v738 = vunpack.c.l.b16 %v626
      %v739 = vunpack.c.l.b16 %v627
      %v740 = vunpack.c.l.b16 %v628
      %v741 = vunpack.c.l.b16 %v629
      %v742 = vunpack.c.l.b16 %v630
      %v743 = vunpack.c.l.b16 %v631
      %v744 = vunpack.c.l.b16 %v632
      %v745 = vunpack.c.l.b16 %v633
      %v746 = vunpack.c.l.b16 %v634
      %v747 = vunpack.c.l.b16 %v635
      %v748 = vunpack.c.l.b16 %v636
      %v749 = vunpack.c.l.b16 %v637
      %v750 = vunpack.c.l.b16 %v638
      %v751 = vunpack.c.l.b16 %v639
      %v752 = vunpack.c.l.b16 %v640
      %v753 = vunpack.c.l.b16 %v641
      %v754 = vunpack.c.l.b16 %v642
      %v755 = vunpack.c.l.b16 %v643
      %v756 = vunpack.c.l.b16 %v644
      %v757 = vunpack.c.l.b16 %v645
      %v758 = vunpack.c.l.b16 %v646
      %v759 = vunpack.c.l.b16 %v647
      %v760 = vunpack.c.l.b16 %v648
      %v761 = vunpack.c.l.b16 %v649
      %v762 = vunpack.c.l.b16 %v650
      %v763 = vunpack.c.l.b16 %v651
      %v764 = vunpack.c.l.b16 %v652
      %v765 = vunpack.c.l.b16 %v653
      %v766 = vunpack.c.l.b16 %v654
      %v767 = vunpack.c.l.b16 %v655
      %v768 = vunpack.c.l.b16 %v656
      %v769 = vunpack.c.l.b16 %v657
      %v770 = vunpack.c.l.b16 %v658
      %v771 = vunpack.c.l.b16 %v659
      %v772 = vpack.c.b16 %v736, %v735
      %v773 = vpack.c.b16 %v738, %v737
      %v774 = vpack.c.b16 %v740, %v739
      %v775 = vpack.c.b16 %v742, %v741
      %v776 = vpack.c.b16 %v744, %v743
      %v777 = vpack.c.b16 %v746, %v745
      %v778 = vpack.c.b16 %v748, %v747
      %v779 = vpack.c.b16 %v750, %v749
      %v780 = vpack.c.b16 %v752, %v751
      %v781 = vpack.c.b16 %v754, %v753
      %v782 = vpack.c.b16 %v756, %v755
      %v783 = vpack.c.b16 %v758, %v757
      %v784 = vpack.c.b16 %v760, %v759
      %v785 = vpack.c.b16 %v762, %v761
      %v786 = vpack.c.b16 %v764, %v763
      %v787 = vpack.c.b16 %v766, %v765
      %v788 = vpack.c.b16 %v768, %v767
      %v789 = vpack.c.b16 %v770, %v769
      %v790 = vpack.c.b16 %v771, %v771
      %vm791 = vsmask.f32 7424
      %v793 = vshrl.u32 %v772, 16
      %v795 = vshll.u32 %v772, 16
      %v797 = vrot.slane %v795, 1
      %v798 = vor.u32 %v793, %v797
      %v800 = vshll.u32 %v773, 16
      %v802 = vrot.slane %v800, 1
      %v803 = vsel %vm791, %v798, %v802
      %v804 = vshrl.u32 %v773, 16
      %v806 = vor.u32 %v804, %v802
      %v808 = vshll.u32 %v774, 16
      %v810 = vrot.slane %v808, 1
      %v811 = vsel %vm791, %v806, %v810
      %v812 = vshrl.u32 %v774, 16
      %v814 = vor.u32 %v812, %v810
      %v816 = vshll.u32 %v775, 16
      %v818 = vrot.slane %v816, 1
      %v819 = vsel %vm791, %v814, %v818
      %v820 = vshrl.u32 %v775, 16
      %v822 = vor.u32 %v820, %v818
      %v824 = vshll.u32 %v776, 16
      %v826 = vrot.slane %v824, 1
      %v827 = vsel %vm791, %v822, %v826
      %v828 = vshrl.u32 %v776, 16
      %v830 = vor.u32 %v828, %v826
      %v832 = vshll.u32 %v777, 16
      %v834 = vrot.slane %v832, 1
      %v835 = vsel %vm791, %v830, %v834
      %v836 = vshrl.u32 %v777, 16
      %v838 = vor.u32 %v836, %v834
      %v840 = vshll.u32 %v778, 16
      %v842 = vrot.slane %v840, 1
      %v843 = vsel %vm791, %v838, %v842
      %v844 = vshrl.u32 %v778, 16
      %v846 = vor.u32 %v844, %v842
      %v848 = vshll.u32 %v779, 16
      %v850 = vrot.slane %v848, 1
      %v851 = vsel %vm791, %v846, %v850
      %v852 = vshrl.u32 %v779, 16
      %v854 = vor.u32 %v852, %v850
      %v856 = vshll.u32 %v780, 16
      %v858 = vrot.slane %v856, 1
      %v859 = vsel %vm791, %v854, %v858
      %v860 = vshrl.u32 %v780, 16
      %v862 = vor.u32 %v860, %v858
      %v864 = vshll.u32 %v781, 16
      %v866 = vrot.slane %v864, 1
      %v867 = vsel %vm791, %v862, %v866
      %v868 = vshrl.u32 %v781, 16
      %v870 = vor.u32 %v868, %v866
      %v872 = vshll.u32 %v782, 16
      %v874 = vrot.slane %v872, 1
      %v875 = vsel %vm791, %v870, %v874
      %v876 = vshrl.u32 %v782, 16
      %v878 = vor.u32 %v876, %v874
      %v880 = vshll.u32 %v783, 16
      %v882 = vrot.slane %v880, 1
      %v883 = vsel %vm791, %v878, %v882
      %v884 = vshrl.u32 %v783, 16
      %v886 = vor.u32 %v884, %v882
      %v888 = vshll.u32 %v784, 16
      %v890 = vrot.slane %v888, 1
      %v891 = vsel %vm791, %v886, %v890
      %v892 = vshrl.u32 %v784, 16
      %v894 = vor.u32 %v892, %v890
      %v896 = vshll.u32 %v785, 16
      %v898 = vrot.slane %v896, 1
      %v899 = vsel %vm791, %v894, %v898
      %v900 = vshrl.u32 %v785, 16
      %v902 = vor.u32 %v900, %v898
      %v904 = vshll.u32 %v786, 16
      %v906 = vrot.slane %v904, 1
      %v907 = vsel %vm791, %v902, %v906
      %v908 = vshrl.u32 %v786, 16
      %v910 = vor.u32 %v908, %v906
      %v912 = vshll.u32 %v787, 16
      %v914 = vrot.slane %v912, 1
      %v915 = vsel %vm791, %v910, %v914
      %v916 = vshrl.u32 %v787, 16
      %v918 = vor.u32 %v916, %v914
      %v920 = vshll.u32 %v788, 16
      %v922 = vrot.slane %v920, 1
      %v923 = vsel %vm791, %v918, %v922
      %v924 = vshrl.u32 %v788, 16
      %v926 = vor.u32 %v924, %v922
      %v928 = vshll.u32 %v789, 16
      %v930 = vrot.slane %v928, 1
      %v931 = vsel %vm791, %v926, %v930
      %v932 = vshrl.u32 %v789, 16
      %v934 = vor.u32 %v932, %v930
      %v936 = vshll.u32 %v790, 16
      %v938 = vrot.slane %v936, 1
      %v939 = vsel %vm791, %v934, %v938
      %v941 = vsel %vm393, %v803, 0
      %v944 = vsel %vm393, %v811, 0
      %v947 = vsel %vm393, %v819, 0
      %v950 = vsel %vm393, %v827, 0
      %v953 = vsel %vm393, %v835, 0
      %v956 = vsel %vm393, %v843, 0
      %v959 = vsel %vm393, %v851, 0
      %v962 = vsel %vm393, %v859, 0
      %v965 = vsel %vm393, %v867, 0
      %v968 = vsel %vm393, %v875, 0
      %v971 = vsel %vm393, %v883, 0
      %v974 = vsel %vm393, %v891, 0
      %v977 = vsel %vm393, %v899, 0
      %v980 = vsel %vm393, %v907, 0
      %v983 = vsel %vm393, %v915, 0
      %v986 = vsel %vm393, %v923, 0
      %v989 = vsel %vm393, %v931, 0
      %v992 = vsel %vm393, %v939, 0
      %v995 = vsel %vm448, %v697, 0
      %997 = vmatpush.bf16.msra.mxu0 0
      %998 = vmatpush.bf16.msra.mxu0 0
      %999 = vmatpush.bf16.msra.mxu0 0
      %1000 = vmatpush.bf16.msra.mxu0 0
      %1001 = vmatpush.bf16.msra.mxu0 0
      %1002 = vmatpush.bf16.msra.mxu0 0
      %1003 = vmatpush.bf16.msra.mxu0 0
      %1004 = vmatpush.bf16.msra.mxu0 %v995
      %1005 = vmatmul.bf16.gmra.mxu0 %v941
      %v1006 = vpop.f32.mrf.mxu0
      %v1007 = vadd.f32 0.0, %v1006
      %v1008 = vpop.f32.mrf.mxu0
      %v1009 = vadd.f32 0.0, %v1008
      %1010 = vmatmul.bf16.gmra.mxu0 %v944
      %v1011 = vpop.f32.mrf.mxu0
      %v1012 = vadd.f32 0.0, %v1011
      %v1013 = vpop.f32.mrf.mxu0
      %v1014 = vadd.f32 0.0, %v1013
      %1015 = vmatmul.bf16.gmra.mxu0 %v947
      %v1016 = vpop.f32.mrf.mxu0
      %v1017 = vadd.f32 0.0, %v1016
      %v1018 = vpop.f32.mrf.mxu0
      %v1019 = vadd.f32 0.0, %v1018
      %1020 = vmatmul.bf16.gmra.mxu0 %v950
      %v1021 = vpop.f32.mrf.mxu0
      %v1022 = vadd.f32 0.0, %v1021
      %v1023 = vpop.f32.mrf.mxu0
      %v1024 = vadd.f32 0.0, %v1023
      %1025 = vmatmul.bf16.gmra.mxu0 %v953
      %v1026 = vpop.f32.mrf.mxu0
      %v1027 = vadd.f32 0.0, %v1026
      %v1028 = vpop.f32.mrf.mxu0
      %v1029 = vadd.f32 0.0, %v1028
      %1030 = vmatmul.bf16.gmra.mxu0 %v956
      %v1031 = vpop.f32.mrf.mxu0
      %v1032 = vadd.f32 0.0, %v1031
      %v1033 = vpop.f32.mrf.mxu0
      %v1034 = vadd.f32 0.0, %v1033
      %1035 = vmatmul.bf16.gmra.mxu0 %v959
      %v1036 = vpop.f32.mrf.mxu0
      %v1037 = vadd.f32 0.0, %v1036
      %v1038 = vpop.f32.mrf.mxu0
      %v1039 = vadd.f32 0.0, %v1038
      %1040 = vmatmul.bf16.gmra.mxu0 %v962
      %v1041 = vpop.f32.mrf.mxu0
      %v1042 = vadd.f32 0.0, %v1041
      %v1043 = vpop.f32.mrf.mxu0
      %v1044 = vadd.f32 0.0, %v1043
      %1045 = vmatmul.bf16.gmra.mxu0 %v965
      %v1046 = vpop.f32.mrf.mxu0
      %v1047 = vadd.f32 0.0, %v1046
      %v1048 = vpop.f32.mrf.mxu0
      %v1049 = vadd.f32 0.0, %v1048
      %1050 = vmatmul.bf16.gmra.mxu0 %v968
      %v1051 = vpop.f32.mrf.mxu0
      %v1052 = vadd.f32 0.0, %v1051
      %v1053 = vpop.f32.mrf.mxu0
      %v1054 = vadd.f32 0.0, %v1053
      %1055 = vmatmul.bf16.gmra.mxu0 %v971
      %v1056 = vpop.f32.mrf.mxu0
      %v1057 = vadd.f32 0.0, %v1056
      %v1058 = vpop.f32.mrf.mxu0
      %v1059 = vadd.f32 0.0, %v1058
      %1060 = vmatmul.bf16.gmra.mxu0 %v974
      %v1061 = vpop.f32.mrf.mxu0
      %v1062 = vadd.f32 0.0, %v1061
      %v1063 = vpop.f32.mrf.mxu0
      %v1064 = vadd.f32 0.0, %v1063
      %1065 = vmatmul.bf16.gmra.mxu0 %v977
      %v1066 = vpop.f32.mrf.mxu0
      %v1067 = vadd.f32 0.0, %v1066
      %v1068 = vpop.f32.mrf.mxu0
      %v1069 = vadd.f32 0.0, %v1068
      %1070 = vmatmul.bf16.gmra.mxu0 %v980
      %v1071 = vpop.f32.mrf.mxu0
      %v1072 = vadd.f32 0.0, %v1071
      %v1073 = vpop.f32.mrf.mxu0
      %v1074 = vadd.f32 0.0, %v1073
      %1075 = vmatmul.bf16.gmra.mxu0 %v983
      %v1076 = vpop.f32.mrf.mxu0
      %v1077 = vadd.f32 0.0, %v1076
      %v1078 = vpop.f32.mrf.mxu0
      %v1079 = vadd.f32 0.0, %v1078
      %1080 = vmatmul.bf16.gmra.mxu0 %v986
      %v1081 = vpop.f32.mrf.mxu0
      %v1082 = vadd.f32 0.0, %v1081
      %v1083 = vpop.f32.mrf.mxu0
      %v1084 = vadd.f32 0.0, %v1083
      %1085 = vmatmul.bf16.gmra.mxu0 %v989
      %v1086 = vpop.f32.mrf.mxu0
      %v1087 = vadd.f32 0.0, %v1086
      %v1088 = vpop.f32.mrf.mxu0
      %v1089 = vadd.f32 0.0, %v1088
      %1090 = vmatmul.bf16.gmra.mxu0 %v992
      %v1091 = vpop.f32.mrf.mxu0
      %v1092 = vadd.f32 0.0, %v1091
      %v1093 = vpop.f32.mrf.mxu0
      %v1094 = vadd.f32 0.0, %v1093
      %1095 = vdwg.mxu0
      %v1096 = vadd.f32 %v660, %v1007
      %v1097 = vadd.f32 %v661, %v1009
      %v1098 = vadd.f32 %v662, %v1012
      %v1099 = vadd.f32 %v663, %v1014
      %v1100 = vadd.f32 %v664, %v1017
      %v1101 = vadd.f32 %v665, %v1019
      %v1102 = vadd.f32 %v666, %v1022
      %v1103 = vadd.f32 %v667, %v1024
      %v1104 = vadd.f32 %v668, %v1027
      %v1105 = vadd.f32 %v669, %v1029
      %v1106 = vadd.f32 %v670, %v1032
      %v1107 = vadd.f32 %v671, %v1034
      %v1108 = vadd.f32 %v672, %v1037
      %v1109 = vadd.f32 %v673, %v1039
      %v1110 = vadd.f32 %v674, %v1042
      %v1111 = vadd.f32 %v675, %v1044
      %v1112 = vadd.f32 %v676, %v1047
      %v1113 = vadd.f32 %v677, %v1049
      %v1114 = vadd.f32 %v678, %v1052
      %v1115 = vadd.f32 %v679, %v1054
      %v1116 = vadd.f32 %v680, %v1057
      %v1117 = vadd.f32 %v681, %v1059
      %v1118 = vadd.f32 %v682, %v1062
      %v1119 = vadd.f32 %v683, %v1064
      %v1120 = vadd.f32 %v684, %v1067
      %v1121 = vadd.f32 %v685, %v1069
      %v1122 = vadd.f32 %v686, %v1072
      %v1123 = vadd.f32 %v687, %v1074
      %v1124 = vadd.f32 %v688, %v1077
      %v1125 = vadd.f32 %v689, %v1079
      %v1126 = vadd.f32 %v690, %v1082
      %v1127 = vadd.f32 %v691, %v1084
      %v1128 = vadd.f32 %v692, %v1087
      %v1129 = vadd.f32 %v693, %v1089
      %v1130 = vadd.f32 %v694, %v1092
      %v1131 = vadd.f32 %v695, %v1094
      %1132 = vst [vmem:[#allocation2] sm:$0xff] %v1096
      %1133 = vst [vmem:[#allocation2 + $0x8] sm:$0xff] %v1097
      %1134 = vst [vmem:[#allocation2 + $0x10] sm:$0xff] %v1098
      %1135 = vst [vmem:[#allocation2 + $0x18] sm:$0xff] %v1099
      %1136 = vst [vmem:[#allocation2 + $0x20] sm:$0xff] %v1100
      %1137 = vst [vmem:[#allocation2 + $0x28] sm:$0xff] %v1101
      %1138 = vst [vmem:[#allocation2 + $0x30] sm:$0xff] %v1102
      %1139 = vst [vmem:[#allocation2 + $0x38] sm:$0xff] %v1103
      %1140 = vst [vmem:[#allocation2 + $0x40] sm:$0xff] %v1104
      %1141 = vst [vmem:[#allocation2 + $0x48] sm:$0xff] %v1105
      %1142 = vst [vmem:[#allocation2 + $0x50] sm:$0xff] %v1106
      %1143 = vst [vmem:[#allocation2 + $0x58] sm:$0xff] %v1107
      %1144 = vst [vmem:[#allocation2 + $0x60] sm:$0xff] %v1108
      %1145 = vst [vmem:[#allocation2 + $0x68] sm:$0xff] %v1109
      %1146 = vst [vmem:[#allocation2 + $0x70] sm:$0xff] %v1110
      %1147 = vst [vmem:[#allocation2 + $0x78] sm:$0xff] %v1111
      %1148 = vst [vmem:[#allocation2 + $0x80] sm:$0xff] %v1112
      %1149 = vst [vmem:[#allocation2 + $0x88] sm:$0xff] %v1113
      %1150 = vst [vmem:[#allocation2 + $0x90] sm:$0xff] %v1114
      %1151 = vst [vmem:[#allocation2 + $0x98] sm:$0xff] %v1115
      %1152 = vst [vmem:[#allocation2 + $0xa0] sm:$0xff] %v1116
      %1153 = vst [vmem:[#allocation2 + $0xa8] sm:$0xff] %v1117
      %1154 = vst [vmem:[#allocation2 + $0xb0] sm:$0xff] %v1118
      %1155 = vst [vmem:[#allocation2 + $0xb8] sm:$0xff] %v1119
      %1156 = vst [vmem:[#allocation2 + $0xc0] sm:$0xff] %v1120
      %1157 = vst [vmem:[#allocation2 + $0xc8] sm:$0xff] %v1121
      %1158 = vst [vmem:[#allocation2 + $0xd0] sm:$0xff] %v1122
      %1159 = vst [vmem:[#allocation2 + $0xd8] sm:$0xff] %v1123
      %1160 = vst [vmem:[#allocation2 + $0xe0] sm:$0xff] %v1124
      %1161 = vst [vmem:[#allocation2 + $0xe8] sm:$0xff] %v1125
      %1162 = vst [vmem:[#allocation2 + $0xf0] sm:$0xff] %v1126
      %1163 = vst [vmem:[#allocation2 + $0xf8] sm:$0xff] %v1127
      %1164 = vst [vmem:[#allocation2 + $0x100] sm:$0xff] %v1128
      %1165 = vst [vmem:[#allocation2 + $0x108] sm:$0xff] %v1129
      %1166 = vst [vmem:[#allocation2 + $0x110] sm:$0xff] %v1130
      %1167 = vst [vmem:[#allocation2 + $0x118] sm:$0xff] %v1131
      %v1168 = vld [vmem:[%s183] sm:$0xe]
      %v1169 = vld [vmem:[%s183 + $0x4] sm:$0xf]
      %v1170 = vld [vmem:[%s183 + $0x8] sm:$0xf]
      %v1171 = vld [vmem:[%s183 + $0xc] sm:$0xf]
      %v1172 = vld [vmem:[%s183 + $0x10] sm:$0xf]
      %v1173 = vld [vmem:[%s183 + $0x14] sm:$0xf]
      %v1174 = vld [vmem:[%s183 + $0x18] sm:$0xf]
      %v1175 = vld [vmem:[%s183 + $0x1c] sm:$0xf]
      %v1176 = vld [vmem:[%s183 + $0x20] sm:$0xf]
      %v1177 = vld [vmem:[%s183 + $0x24] sm:$0xf]
      %v1178 = vld [vmem:[%s183 + $0x28] sm:$0xf]
      %v1179 = vld [vmem:[%s183 + $0x2c] sm:$0xf]
      %v1180 = vld [vmem:[%s183 + $0x30] sm:$0xf]
      %v1181 = vld [vmem:[%s183 + $0x34] sm:$0xf]
      %v1182 = vld [vmem:[%s183 + $0x38] sm:$0xf]
      %v1183 = vld [vmem:[%s183 + $0x3c] sm:$0xf]
      %v1184 = vld [vmem:[%s183 + $0x40] sm:$0xf]
      %v1185 = vld [vmem:[%s183 + $0x44] sm:$0xf]
      %v1186 = vld [vmem:[%s183 + $0x48] sm:$0xf]
      %v1187 = vld [vmem:[%s183 + $0x4c] sm:$0xf]
      %v1188 = vld [vmem:[%s183 + $0x50] sm:$0xf]
      %v1189 = vld [vmem:[%s183 + $0x54] sm:$0xf]
      %v1190 = vld [vmem:[%s183 + $0x58] sm:$0xf]
      %v1191 = vld [vmem:[%s183 + $0x5c] sm:$0xf]
      %v1192 = vld [vmem:[%s183 + $0x60] sm:$0xf]
      %v1193 = vld [vmem:[%s183 + $0x64] sm:$0xf]
      %v1194 = vld [vmem:[%s183 + $0x68] sm:$0xf]
      %v1195 = vld [vmem:[%s183 + $0x6c] sm:$0xf]
      %v1196 = vld [vmem:[%s183 + $0x70] sm:$0xf]
      %v1197 = vld [vmem:[%s183 + $0x74] sm:$0xf]
      %v1198 = vld [vmem:[%s183 + $0x78] sm:$0xf]
      %v1199 = vld [vmem:[%s183 + $0x7c] sm:$0xf]
      %v1200 = vld [vmem:[%s183 + $0x80] sm:$0xf]
      %v1201 = vld [vmem:[%s183 + $0x84] sm:$0xf]
      %v1202 = vld [vmem:[%s183 + $0x88] sm:$0xf]
      %v1203 = vld [vmem:[%s183 + $0x8c] sm:$0xf]
      %v1204 = vld [vmem:[%s183 + $0x90] sm:$0x1]
      %v1205 = vld [vmem:[#allocation2] sm:$0xff]
      %v1206 = vld [vmem:[#allocation2 + $0x8] sm:$0xff]
      %v1207 = vld [vmem:[#allocation2 + $0x10] sm:$0xff]
      %v1208 = vld [vmem:[#allocation2 + $0x18] sm:$0xff]
      %v1209 = vld [vmem:[#allocation2 + $0x20] sm:$0xff]
      %v1210 = vld [vmem:[#allocation2 + $0x28] sm:$0xff]
      %v1211 = vld [vmem:[#allocation2 + $0x30] sm:$0xff]
      %v1212 = vld [vmem:[#allocation2 + $0x38] sm:$0xff]
      %v1213 = vld [vmem:[#allocation2 + $0x40] sm:$0xff]
      %v1214 = vld [vmem:[#allocation2 + $0x48] sm:$0xff]
      %v1215 = vld [vmem:[#allocation2 + $0x50] sm:$0xff]
      %v1216 = vld [vmem:[#allocation2 + $0x58] sm:$0xff]
      %v1217 = vld [vmem:[#allocation2 + $0x60] sm:$0xff]
      %v1218 = vld [vmem:[#allocation2 + $0x68] sm:$0xff]
      %v1219 = vld [vmem:[#allocation2 + $0x70] sm:$0xff]
      %v1220 = vld [vmem:[#allocation2 + $0x78] sm:$0xff]
      %v1221 = vld [vmem:[#allocation2 + $0x80] sm:$0xff]
      %v1222 = vld [vmem:[#allocation2 + $0x88] sm:$0xff]
      %v1223 = vld [vmem:[#allocation2 + $0x90] sm:$0xff]
      %v1224 = vld [vmem:[#allocation2 + $0x98] sm:$0xff]
      %v1225 = vld [vmem:[#allocation2 + $0xa0] sm:$0xff]
      %v1226 = vld [vmem:[#allocation2 + $0xa8] sm:$0xff]
      %v1227 = vld [vmem:[#allocation2 + $0xb0] sm:$0xff]
      %v1228 = vld [vmem:[#allocation2 + $0xb8] sm:$0xff]
      %v1229 = vld [vmem:[#allocation2 + $0xc0] sm:$0xff]
      %v1230 = vld [vmem:[#allocation2 + $0xc8] sm:$0xff]
      %v1231 = vld [vmem:[#allocation2 + $0xd0] sm:$0xff]
      %v1232 = vld [vmem:[#allocation2 + $0xd8] sm:$0xff]
      %v1233 = vld [vmem:[#allocation2 + $0xe0] sm:$0xff]
      %v1234 = vld [vmem:[#allocation2 + $0xe8] sm:$0xff]
      %v1235 = vld [vmem:[#allocation2 + $0xf0] sm:$0xff]
      %v1236 = vld [vmem:[#allocation2 + $0xf8] sm:$0xff]
      %v1237 = vld [vmem:[#allocation2 + $0x100] sm:$0xff]
      %v1238 = vld [vmem:[#allocation2 + $0x108] sm:$0xff]
      %v1239 = vld [vmem:[#allocation2 + $0x110] sm:$0xff]
      %v1240 = vld [vmem:[#allocation2 + $0x118] sm:$0xff]
      %s1241 = scalar_lea.vmem %s1, 4
      %v1242 = vld [vmem:[%s1241] sm:$0x3]
      %v1280 = vunpack.c.l.b16 %v1168
      %v1281 = vunpack.c.l.b16 %v1169
      %v1282 = vunpack.c.l.b16 %v1170
      %v1283 = vunpack.c.l.b16 %v1171
      %v1284 = vunpack.c.l.b16 %v1172
      %v1285 = vunpack.c.l.b16 %v1173
      %v1286 = vunpack.c.l.b16 %v1174
      %v1287 = vunpack.c.l.b16 %v1175
      %v1288 = vunpack.c.l.b16 %v1176
      %v1289 = vunpack.c.l.b16 %v1177
      %v1290 = vunpack.c.l.b16 %v1178
      %v1291 = vunpack.c.l.b16 %v1179
      %v1292 = vunpack.c.l.b16 %v1180
      %v1293 = vunpack.c.l.b16 %v1181
      %v1294 = vunpack.c.l.b16 %v1182
      %v1295 = vunpack.c.l.b16 %v1183
      %v1296 = vunpack.c.l.b16 %v1184
      %v1297 = vunpack.c.l.b16 %v1185
      %v1298 = vunpack.c.l.b16 %v1186
      %v1299 = vunpack.c.l.b16 %v1187
      %v1300 = vunpack.c.l.b16 %v1188
      %v1301 = vunpack.c.l.b16 %v1189
      %v1302 = vunpack.c.l.b16 %v1190
      %v1303 = vunpack.c.l.b16 %v1191
      %v1304 = vunpack.c.l.b16 %v1192
      %v1305 = vunpack.c.l.b16 %v1193
      %v1306 = vunpack.c.l.b16 %v1194
      %v1307 = vunpack.c.l.b16 %v1195
      %v1308 = vunpack.c.l.b16 %v1196
      %v1309 = vunpack.c.l.b16 %v1197
      %v1310 = vunpack.c.l.b16 %v1198
      %v1311 = vunpack.c.l.b16 %v1199
      %v1312 = vunpack.c.l.b16 %v1200
      %v1313 = vunpack.c.l.b16 %v1201
      %v1314 = vunpack.c.l.b16 %v1202
      %v1315 = vunpack.c.l.b16 %v1203
      %v1316 = vunpack.c.l.b16 %v1204
      %v1317 = vpack.c.b16 %v1281, %v1280
      %v1318 = vpack.c.b16 %v1283, %v1282
      %v1319 = vpack.c.b16 %v1285, %v1284
      %v1320 = vpack.c.b16 %v1287, %v1286
      %v1321 = vpack.c.b16 %v1289, %v1288
      %v1322 = vpack.c.b16 %v1291, %v1290
      %v1323 = vpack.c.b16 %v1293, %v1292
      %v1324 = vpack.c.b16 %v1295, %v1294
      %v1325 = vpack.c.b16 %v1297, %v1296
      %v1326 = vpack.c.b16 %v1299, %v1298
      %v1327 = vpack.c.b16 %v1301, %v1300
      %v1328 = vpack.c.b16 %v1303, %v1302
      %v1329 = vpack.c.b16 %v1305, %v1304
      %v1330 = vpack.c.b16 %v1307, %v1306
      %v1331 = vpack.c.b16 %v1309, %v1308
      %v1332 = vpack.c.b16 %v1311, %v1310
      %v1333 = vpack.c.b16 %v1313, %v1312
      %v1334 = vpack.c.b16 %v1315, %v1314
      %v1335 = vpack.c.b16 %v1316, %v1316
      %vm1336 = vcmask 1046528
      %v1337 = vrot.slane %v1317, 1
      %v1338 = vrot.slane %v1318, 1
      %v1339 = vsel %vm1336, %v1337, %v1338
      %v1340 = vrot.slane %v1319, 1
      %v1341 = vsel %vm1336, %v1338, %v1340
      %v1342 = vrot.slane %v1320, 1
      %v1343 = vsel %vm1336, %v1340, %v1342
      %v1344 = vrot.slane %v1321, 1
      %v1345 = vsel %vm1336, %v1342, %v1344
      %v1346 = vrot.slane %v1322, 1
      %v1347 = vsel %vm1336, %v1344, %v1346
      %v1348 = vrot.slane %v1323, 1
      %v1349 = vsel %vm1336, %v1346, %v1348
      %v1350 = vrot.slane %v1324, 1
      %v1351 = vsel %vm1336, %v1348, %v1350
      %v1352 = vrot.slane %v1325, 1
      %v1353 = vsel %vm1336, %v1350, %v1352
      %v1354 = vrot.slane %v1326, 1
      %v1355 = vsel %vm1336, %v1352, %v1354
      %v1356 = vrot.slane %v1327, 1
      %v1357 = vsel %vm1336, %v1354, %v1356
      %v1358 = vrot.slane %v1328, 1
      %v1359 = vsel %vm1336, %v1356, %v1358
      %v1360 = vrot.slane %v1329, 1
      %v1361 = vsel %vm1336, %v1358, %v1360
      %v1362 = vrot.slane %v1330, 1
      %v1363 = vsel %vm1336, %v1360, %v1362
      %v1364 = vrot.slane %v1331, 1
      %v1365 = vsel %vm1336, %v1362, %v1364
      %v1366 = vrot.slane %v1332, 1
      %v1367 = vsel %vm1336, %v1364, %v1366
      %v1368 = vrot.slane %v1333, 1
      %v1369 = vsel %vm1336, %v1366, %v1368
      %v1370 = vrot.slane %v1334, 1
      %v1371 = vsel %vm1336, %v1368, %v1370
      %v1372 = vrot.slane %v1335, 1
      %v1373 = vsel %vm1336, %v1370, %v1372
      %v1375 = vsel %vm393, %v1339, 0
      %v1378 = vsel %vm393, %v1341, 0
      %v1381 = vsel %vm393, %v1343, 0
      %v1384 = vsel %vm393, %v1345, 0
      %v1387 = vsel %vm393, %v1347, 0
      %v1390 = vsel %vm393, %v1349, 0
      %v1393 = vsel %vm393, %v1351, 0
      %v1396 = vsel %vm393, %v1353, 0
      %v1399 = vsel %vm393, %v1355, 0
      %v1402 = vsel %vm393, %v1357, 0
      %v1405 = vsel %vm393, %v1359, 0
      %v1408 = vsel %vm393, %v1361, 0
      %v1411 = vsel %vm393, %v1363, 0
      %v1414 = vsel %vm393, %v1365, 0
      %v1417 = vsel %vm393, %v1367, 0
      %v1420 = vsel %vm393, %v1369, 0
      %v1423 = vsel %vm393, %v1371, 0
      %v1426 = vsel %vm393, %v1373, 0
      %v1429 = vsel %vm448, %v1242, 0
      %1431 = vmatpush.bf16.msra.mxu0 0
      %1432 = vmatpush.bf16.msra.mxu0 0
      %1433 = vmatpush.bf16.msra.mxu0 0
      %1434 = vmatpush.bf16.msra.mxu0 0
      %1435 = vmatpush.bf16.msra.mxu0 0
      %1436 = vmatpush.bf16.msra.mxu0 0
      %1437 = vmatpush.bf16.msra.mxu0 0
      %1438 = vmatpush.bf16.msra.mxu0 %v1429
      %1439 = vmatmul.bf16.gmra.mxu0 %v1375
      %v1440 = vpop.f32.mrf.mxu0
      %v1441 = vadd.f32 0.0, %v1440
      %v1442 = vpop.f32.mrf.mxu0
      %v1443 = vadd.f32 0.0, %v1442
      %1444 = vmatmul.bf16.gmra.mxu0 %v1378
      %v1445 = vpop.f32.mrf.mxu0
      %v1446 = vadd.f32 0.0, %v1445
      %v1447 = vpop.f32.mrf.mxu0
      %v1448 = vadd.f32 0.0, %v1447
      %1449 = vmatmul.bf16.gmra.mxu0 %v1381
      %v1450 = vpop.f32.mrf.mxu0
      %v1451 = vadd.f32 0.0, %v1450
      %v1452 = vpop.f32.mrf.mxu0
      %v1453 = vadd.f32 0.0, %v1452
      %1454 = vmatmul.bf16.gmra.mxu0 %v1384
      %v1455 = vpop.f32.mrf.mxu0
      %v1456 = vadd.f32 0.0, %v1455
      %v1457 = vpop.f32.mrf.mxu0
      %v1458 = vadd.f32 0.0, %v1457
      %1459 = vmatmul.bf16.gmra.mxu0 %v1387
      %v1460 = vpop.f32.mrf.mxu0
      %v1461 = vadd.f32 0.0, %v1460
      %v1462 = vpop.f32.mrf.mxu0
      %v1463 = vadd.f32 0.0, %v1462
      %1464 = vmatmul.bf16.gmra.mxu0 %v1390
      %v1465 = vpop.f32.mrf.mxu0
      %v1466 = vadd.f32 0.0, %v1465
      %v1467 = vpop.f32.mrf.mxu0
      %v1468 = vadd.f32 0.0, %v1467
      %1469 = vmatmul.bf16.gmra.mxu0 %v1393
      %v1470 = vpop.f32.mrf.mxu0
      %v1471 = vadd.f32 0.0, %v1470
      %v1472 = vpop.f32.mrf.mxu0
      %v1473 = vadd.f32 0.0, %v1472
      %1474 = vmatmul.bf16.gmra.mxu0 %v1396
      %v1475 = vpop.f32.mrf.mxu0
      %v1476 = vadd.f32 0.0, %v1475
      %v1477 = vpop.f32.mrf.mxu0
      %v1478 = vadd.f32 0.0, %v1477
      %1479 = vmatmul.bf16.gmra.mxu0 %v1399
      %v1480 = vpop.f32.mrf.mxu0
      %v1481 = vadd.f32 0.0, %v1480
      %v1482 = vpop.f32.mrf.mxu0
      %v1483 = vadd.f32 0.0, %v1482
      %1484 = vmatmul.bf16.gmra.mxu0 %v1402
      %v1485 = vpop.f32.mrf.mxu0
      %v1486 = vadd.f32 0.0, %v1485
      %v1487 = vpop.f32.mrf.mxu0
      %v1488 = vadd.f32 0.0, %v1487
      %1489 = vmatmul.bf16.gmra.mxu0 %v1405
      %v1490 = vpop.f32.mrf.mxu0
      %v1491 = vadd.f32 0.0, %v1490
      %v1492 = vpop.f32.mrf.mxu0
      %v1493 = vadd.f32 0.0, %v1492
      %1494 = vmatmul.bf16.gmra.mxu0 %v1408
      %v1495 = vpop.f32.mrf.mxu0
      %v1496 = vadd.f32 0.0, %v1495
      %v1497 = vpop.f32.mrf.mxu0
      %v1498 = vadd.f32 0.0, %v1497
      %1499 = vmatmul.bf16.gmra.mxu0 %v1411
      %v1500 = vpop.f32.mrf.mxu0
      %v1501 = vadd.f32 0.0, %v1500
      %v1502 = vpop.f32.mrf.mxu0
      %v1503 = vadd.f32 0.0, %v1502
      %1504 = vmatmul.bf16.gmra.mxu0 %v1414
      %v1505 = vpop.f32.mrf.mxu0
      %v1506 = vadd.f32 0.0, %v1505
      %v1507 = vpop.f32.mrf.mxu0
      %v1508 = vadd.f32 0.0, %v1507
      %1509 = vmatmul.bf16.gmra.mxu0 %v1417
      %v1510 = vpop.f32.mrf.mxu0
      %v1511 = vadd.f32 0.0, %v1510
      %v1512 = vpop.f32.mrf.mxu0
      %v1513 = vadd.f32 0.0, %v1512
      %1514 = vmatmul.bf16.gmra.mxu0 %v1420
      %v1515 = vpop.f32.mrf.mxu0
      %v1516 = vadd.f32 0.0, %v1515
      %v1517 = vpop.f32.mrf.mxu0
      %v1518 = vadd.f32 0.0, %v1517
      %1519 = vmatmul.bf16.gmra.mxu0 %v1423
      %v1520 = vpop.f32.mrf.mxu0
      %v1521 = vadd.f32 0.0, %v1520
      %v1522 = vpop.f32.mrf.mxu0
      %v1523 = vadd.f32 0.0, %v1522
      %1524 = vmatmul.bf16.gmra.mxu0 %v1426
      %v1525 = vpop.f32.mrf.mxu0
      %v1526 = vadd.f32 0.0, %v1525
      %v1527 = vpop.f32.mrf.mxu0
      %v1528 = vadd.f32 0.0, %v1527
      %1529 = vdwg.mxu0
      %v1530 = vadd.f32 %v1205, %v1441
      %v1531 = vadd.f32 %v1206, %v1443
      %v1532 = vadd.f32 %v1207, %v1446
      %v1533 = vadd.f32 %v1208, %v1448
      %v1534 = vadd.f32 %v1209, %v1451
      %v1535 = vadd.f32 %v1210, %v1453
      %v1536 = vadd.f32 %v1211, %v1456
      %v1537 = vadd.f32 %v1212, %v1458
      %v1538 = vadd.f32 %v1213, %v1461
      %v1539 = vadd.f32 %v1214, %v1463
      %v1540 = vadd.f32 %v1215, %v1466
      %v1541 = vadd.f32 %v1216, %v1468
      %v1542 = vadd.f32 %v1217, %v1471
      %v1543 = vadd.f32 %v1218, %v1473
      %v1544 = vadd.f32 %v1219, %v1476
      %v1545 = vadd.f32 %v1220, %v1478
      %v1546 = vadd.f32 %v1221, %v1481
      %v1547 = vadd.f32 %v1222, %v1483
      %v1548 = vadd.f32 %v1223, %v1486
      %v1549 = vadd.f32 %v1224, %v1488
      %v1550 = vadd.f32 %v1225, %v1491
      %v1551 = vadd.f32 %v1226, %v1493
      %v1552 = vadd.f32 %v1227, %v1496
      %v1553 = vadd.f32 %v1228, %v1498
      %v1554 = vadd.f32 %v1229, %v1501
      %v1555 = vadd.f32 %v1230, %v1503
      %v1556 = vadd.f32 %v1231, %v1506
      %v1557 = vadd.f32 %v1232, %v1508
      %v1558 = vadd.f32 %v1233, %v1511
      %v1559 = vadd.f32 %v1234, %v1513
      %v1560 = vadd.f32 %v1235, %v1516
      %v1561 = vadd.f32 %v1236, %v1518
      %v1562 = vadd.f32 %v1237, %v1521
      %v1563 = vadd.f32 %v1238, %v1523
      %v1564 = vadd.f32 %v1239, %v1526
      %v1565 = vadd.f32 %v1240, %v1528
      %1566 = vst [vmem:[#allocation2] sm:$0xff] %v1530
      %1567 = vst [vmem:[#allocation2 + $0x8] sm:$0xff] %v1531
      %1568 = vst [vmem:[#allocation2 + $0x10] sm:$0xff] %v1532
      %1569 = vst [vmem:[#allocation2 + $0x18] sm:$0xff] %v1533
      %1570 = vst [vmem:[#allocation2 + $0x20] sm:$0xff] %v1534
      %1571 = vst [vmem:[#allocation2 + $0x28] sm:$0xff] %v1535
      %1572 = vst [vmem:[#allocation2 + $0x30] sm:$0xff] %v1536
      %1573 = vst [vmem:[#allocation2 + $0x38] sm:$0xff] %v1537
      %1574 = vst [vmem:[#allocation2 + $0x40] sm:$0xff] %v1538
      %1575 = vst [vmem:[#allocation2 + $0x48] sm:$0xff] %v1539
      %1576 = vst [vmem:[#allocation2 + $0x50] sm:$0xff] %v1540
      %1577 = vst [vmem:[#allocation2 + $0x58] sm:$0xff] %v1541
      %1578 = vst [vmem:[#allocation2 + $0x60] sm:$0xff] %v1542
      %1579 = vst [vmem:[#allocation2 + $0x68] sm:$0xff] %v1543
      %1580 = vst [vmem:[#allocation2 + $0x70] sm:$0xff] %v1544
      %1581 = vst [vmem:[#allocation2 + $0x78] sm:$0xff] %v1545
      %1582 = vst [vmem:[#allocation2 + $0x80] sm:$0xff] %v1546
      %1583 = vst [vmem:[#allocation2 + $0x88] sm:$0xff] %v1547
      %1584 = vst [vmem:[#allocation2 + $0x90] sm:$0xff] %v1548
      %1585 = vst [vmem:[#allocation2 + $0x98] sm:$0xff] %v1549
      %1586 = vst [vmem:[#allocation2 + $0xa0] sm:$0xff] %v1550
      %1587 = vst [vmem:[#allocation2 + $0xa8] sm:$0xff] %v1551
      %1588 = vst [vmem:[#allocation2 + $0xb0] sm:$0xff] %v1552
      %1589 = vst [vmem:[#allocation2 + $0xb8] sm:$0xff] %v1553
      %1590 = vst [vmem:[#allocation2 + $0xc0] sm:$0xff] %v1554
      %1591 = vst [vmem:[#allocation2 + $0xc8] sm:$0xff] %v1555
      %1592 = vst [vmem:[#allocation2 + $0xd0] sm:$0xff] %v1556
      %1593 = vst [vmem:[#allocation2 + $0xd8] sm:$0xff] %v1557
      %1594 = vst [vmem:[#allocation2 + $0xe0] sm:$0xff] %v1558
      %1595 = vst [vmem:[#allocation2 + $0xe8] sm:$0xff] %v1559
      %1596 = vst [vmem:[#allocation2 + $0xf0] sm:$0xff] %v1560
      %1597 = vst [vmem:[#allocation2 + $0xf8] sm:$0xff] %v1561
      %1598 = vst [vmem:[#allocation2 + $0x100] sm:$0xff] %v1562
      %1599 = vst [vmem:[#allocation2 + $0x108] sm:$0xff] %v1563
      %1600 = vst [vmem:[#allocation2 + $0x110] sm:$0xff] %v1564
      %1601 = vst [vmem:[#allocation2 + $0x118] sm:$0xff] %v1565
      %v1602 = vld [vmem:[%s183 + $0x8] sm:$0xe]
      %v1603 = vld [vmem:[%s183 + $0xc] sm:$0xf]
      %v1604 = vld [vmem:[%s183 + $0x10] sm:$0xf]
      %v1605 = vld [vmem:[%s183 + $0x14] sm:$0xf]
      %v1606 = vld [vmem:[%s183 + $0x18] sm:$0xf]
      %v1607 = vld [vmem:[%s183 + $0x1c] sm:$0xf]
      %v1608 = vld [vmem:[%s183 + $0x20] sm:$0xf]
      %v1609 = vld [vmem:[%s183 + $0x24] sm:$0xf]
      %v1610 = vld [vmem:[%s183 + $0x28] sm:$0xf]
      %v1611 = vld [vmem:[%s183 + $0x2c] sm:$0xf]
      %v1612 = vld [vmem:[%s183 + $0x30] sm:$0xf]
      %v1613 = vld [vmem:[%s183 + $0x34] sm:$0xf]
      %v1614 = vld [vmem:[%s183 + $0x38] sm:$0xf]
      %v1615 = vld [vmem:[%s183 + $0x3c] sm:$0xf]
      %v1616 = vld [vmem:[%s183 + $0x40] sm:$0xf]
      %v1617 = vld [vmem:[%s183 + $0x44] sm:$0xf]
      %v1618 = vld [vmem:[%s183 + $0x48] sm:$0xf]
      %v1619 = vld [vmem:[%s183 + $0x4c] sm:$0xf]
      %v1620 = vld [vmem:[%s183 + $0x50] sm:$0xf]
      %v1621 = vld [vmem:[%s183 + $0x54] sm:$0xf]
      %v1622 = vld [vmem:[%s183 + $0x58] sm:$0xf]
      %v1623 = vld [vmem:[%s183 + $0x5c] sm:$0xf]
      %v1624 = vld [vmem:[%s183 + $0x60] sm:$0xf]
      %v1625 = vld [vmem:[%s183 + $0x64] sm:$0xf]
      %v1626 = vld [vmem:[%s183 + $0x68] sm:$0xf]
      %v1627 = vld [vmem:[%s183 + $0x6c] sm:$0xf]
      %v1628 = vld [vmem:[%s183 + $0x70] sm:$0xf]
      %v1629 = vld [vmem:[%s183 + $0x74] sm:$0xf]
      %v1630 = vld [vmem:[%s183 + $0x78] sm:$0xf]
      %v1631 = vld [vmem:[%s183 + $0x7c] sm:$0xf]
      %v1632 = vld [vmem:[%s183 + $0x80] sm:$0xf]
      %v1633 = vld [vmem:[%s183 + $0x84] sm:$0xf]
      %v1634 = vld [vmem:[%s183 + $0x88] sm:$0xf]
      %v1635 = vld [vmem:[%s183 + $0x8c] sm:$0xf]
      %v1636 = vld [vmem:[%s183 + $0x90] sm:$0xf]
      %v1637 = vld [vmem:[%s183 + $0x94] sm:$0xf]
      %v1638 = vld [vmem:[%s183 + $0x98] sm:$0x1]
      %v1639 = vld [vmem:[#allocation2] sm:$0xff]
      %v1640 = vld [vmem:[#allocation2 + $0x8] sm:$0xff]
      %v1641 = vld [vmem:[#allocation2 + $0x10] sm:$0xff]
      %v1642 = vld [vmem:[#allocation2 + $0x18] sm:$0xff]
      %v1643 = vld [vmem:[#allocation2 + $0x20] sm:$0xff]
      %v1644 = vld [vmem:[#allocation2 + $0x28] sm:$0xff]
      %v1645 = vld [vmem:[#allocation2 + $0x30] sm:$0xff]
      %v1646 = vld [vmem:[#allocation2 + $0x38] sm:$0xff]
      %v1647 = vld [vmem:[#allocation2 + $0x40] sm:$0xff]
      %v1648 = vld [vmem:[#allocation2 + $0x48] sm:$0xff]
      %v1649 = vld [vmem:[#allocation2 + $0x50] sm:$0xff]
      %v1650 = vld [vmem:[#allocation2 + $0x58] sm:$0xff]
      %v1651 = vld [vmem:[#allocation2 + $0x60] sm:$0xff]
      %v1652 = vld [vmem:[#allocation2 + $0x68] sm:$0xff]
      %v1653 = vld [vmem:[#allocation2 + $0x70] sm:$0xff]
      %v1654 = vld [vmem:[#allocation2 + $0x78] sm:$0xff]
      %v1655 = vld [vmem:[#allocation2 + $0x80] sm:$0xff]
      %v1656 = vld [vmem:[#allocation2 + $0x88] sm:$0xff]
      %v1657 = vld [vmem:[#allocation2 + $0x90] sm:$0xff]
      %v1658 = vld [vmem:[#allocation2 + $0x98] sm:$0xff]
      %v1659 = vld [vmem:[#allocation2 + $0xa0] sm:$0xff]
      %v1660 = vld [vmem:[#allocation2 + $0xa8] sm:$0xff]
      %v1661 = vld [vmem:[#allocation2 + $0xb0] sm:$0xff]
      %v1662 = vld [vmem:[#allocation2 + $0xb8] sm:$0xff]
      %v1663 = vld [vmem:[#allocation2 + $0xc0] sm:$0xff]
      %v1664 = vld [vmem:[#allocation2 + $0xc8] sm:$0xff]
      %v1665 = vld [vmem:[#allocation2 + $0xd0] sm:$0xff]
      %v1666 = vld [vmem:[#allocation2 + $0xd8] sm:$0xff]
      %v1667 = vld [vmem:[#allocation2 + $0xe0] sm:$0xff]
      %v1668 = vld [vmem:[#allocation2 + $0xe8] sm:$0xff]
      %v1669 = vld [vmem:[#allocation2 + $0xf0] sm:$0xff]
      %v1670 = vld [vmem:[#allocation2 + $0xf8] sm:$0xff]
      %v1671 = vld [vmem:[#allocation2 + $0x100] sm:$0xff]
      %v1672 = vld [vmem:[#allocation2 + $0x108] sm:$0xff]
      %v1673 = vld [vmem:[#allocation2 + $0x110] sm:$0xff]
      %v1674 = vld [vmem:[#allocation2 + $0x118] sm:$0xff]
      %s1675 = scalar_lea.vmem %s1, 6
      %v1676 = vld [vmem:[%s1675] sm:$0x3]
      %v1714 = vunpack.c.l.b16 %v1602
      %v1715 = vunpack.c.l.b16 %v1603
      %v1716 = vunpack.c.l.b16 %v1604
      %v1717 = vunpack.c.l.b16 %v1605
      %v1718 = vunpack.c.l.b16 %v1606
      %v1719 = vunpack.c.l.b16 %v1607
      %v1720 = vunpack.c.l.b16 %v1608
      %v1721 = vunpack.c.l.b16 %v1609
      %v1722 = vunpack.c.l.b16 %v1610
      %v1723 = vunpack.c.l.b16 %v1611
      %v1724 = vunpack.c.l.b16 %v1612
      %v1725 = vunpack.c.l.b16 %v1613
      %v1726 = vunpack.c.l.b16 %v1614
      %v1727 = vunpack.c.l.b16 %v1615
      %v1728 = vunpack.c.l.b16 %v1616
      %v1729 = vunpack.c.l.b16 %v1617
      %v1730 = vunpack.c.l.b16 %v1618
      %v1731 = vunpack.c.l.b16 %v1619
      %v1732 = vunpack.c.l.b16 %v1620
      %v1733 = vunpack.c.l.b16 %v1621
      %v1734 = vunpack.c.l.b16 %v1622
      %v1735 = vunpack.c.l.b16 %v1623
      %v1736 = vunpack.c.l.b16 %v1624
      %v1737 = vunpack.c.l.b16 %v1625
      %v1738 = vunpack.c.l.b16 %v1626
      %v1739 = vunpack.c.l.b16 %v1627
      %v1740 = vunpack.c.l.b16 %v1628
      %v1741 = vunpack.c.l.b16 %v1629
      %v1742 = vunpack.c.l.b16 %v1630
      %v1743 = vunpack.c.l.b16 %v1631
      %v1744 = vunpack.c.l.b16 %v1632
      %v1745 = vunpack.c.l.b16 %v1633
      %v1746 = vunpack.c.l.b16 %v1634
      %v1747 = vunpack.c.l.b16 %v1635
      %v1748 = vunpack.c.l.b16 %v1636
      %v1749 = vunpack.c.l.b16 %v1637
      %v1750 = vunpack.c.l.b16 %v1638
      %v1751 = vpack.c.b16 %v1715, %v1714
      %v1752 = vpack.c.b16 %v1717, %v1716
      %v1753 = vpack.c.b16 %v1719, %v1718
      %v1754 = vpack.c.b16 %v1721, %v1720
      %v1755 = vpack.c.b16 %v1723, %v1722
      %v1756 = vpack.c.b16 %v1725, %v1724
      %v1757 = vpack.c.b16 %v1727, %v1726
      %v1758 = vpack.c.b16 %v1729, %v1728
      %v1759 = vpack.c.b16 %v1731, %v1730
      %v1760 = vpack.c.b16 %v1733, %v1732
      %v1761 = vpack.c.b16 %v1735, %v1734
      %v1762 = vpack.c.b16 %v1737, %v1736
      %v1763 = vpack.c.b16 %v1739, %v1738
      %v1764 = vpack.c.b16 %v1741, %v1740
      %v1765 = vpack.c.b16 %v1743, %v1742
      %v1766 = vpack.c.b16 %v1745, %v1744
      %v1767 = vpack.c.b16 %v1747, %v1746
      %v1768 = vpack.c.b16 %v1749, %v1748
      %v1769 = vpack.c.b16 %v1750, %v1750
      %v1770 = vrot.slane %v1751, 1
      %v1771 = vrot.slane %v1752, 1
      %v1772 = vsel %vm1336, %v1770, %v1771
      %v1773 = vrot.slane %v1753, 1
      %v1774 = vsel %vm1336, %v1771, %v1773
      %v1775 = vrot.slane %v1754, 1
      %v1776 = vsel %vm1336, %v1773, %v1775
      %v1777 = vrot.slane %v1755, 1
      %v1778 = vsel %vm1336, %v1775, %v1777
      %v1779 = vrot.slane %v1756, 1
      %v1780 = vsel %vm1336, %v1777, %v1779
      %v1781 = vrot.slane %v1757, 1
      %v1782 = vsel %vm1336, %v1779, %v1781
      %v1783 = vrot.slane %v1758, 1
      %v1784 = vsel %vm1336, %v1781, %v1783
      %v1785 = vrot.slane %v1759, 1
      %v1786 = vsel %vm1336, %v1783, %v1785
      %v1787 = vrot.slane %v1760, 1
      %v1788 = vsel %vm1336, %v1785, %v1787
      %v1789 = vrot.slane %v1761, 1
      %v1790 = vsel %vm1336, %v1787, %v1789
      %v1791 = vrot.slane %v1762, 1
      %v1792 = vsel %vm1336, %v1789, %v1791
      %v1793 = vrot.slane %v1763, 1
      %v1794 = vsel %vm1336, %v1791, %v1793
      %v1795 = vrot.slane %v1764, 1
      %v1796 = vsel %vm1336, %v1793, %v1795
      %v1797 = vrot.slane %v1765, 1
      %v1798 = vsel %vm1336, %v1795, %v1797
      %v1799 = vrot.slane %v1766, 1
      %v1800 = vsel %vm1336, %v1797, %v1799
      %v1801 = vrot.slane %v1767, 1
      %v1802 = vsel %vm1336, %v1799, %v1801
      %v1803 = vrot.slane %v1768, 1
      %v1804 = vsel %vm1336, %v1801, %v1803
      %v1805 = vrot.slane %v1769, 1
      %v1806 = vsel %vm1336, %v1803, %v1805
      %v1808 = vsel %vm393, %v1772, 0
      %v1811 = vsel %vm393, %v1774, 0
      %v1814 = vsel %vm393, %v1776, 0
      %v1817 = vsel %vm393, %v1778, 0
      %v1820 = vsel %vm393, %v1780, 0
      %v1823 = vsel %vm393, %v1782, 0
      %v1826 = vsel %vm393, %v1784, 0
      %v1829 = vsel %vm393, %v1786, 0
      %v1832 = vsel %vm393, %v1788, 0
      %v1835 = vsel %vm393, %v1790, 0
      %v1838 = vsel %vm393, %v1792, 0
      %v1841 = vsel %vm393, %v1794, 0
      %v1844 = vsel %vm393, %v1796, 0
      %v1847 = vsel %vm393, %v1798, 0
      %v1850 = vsel %vm393, %v1800, 0
      %v1853 = vsel %vm393, %v1802, 0
      %v1856 = vsel %vm393, %v1804, 0
      %v1859 = vsel %vm393, %v1806, 0
      %v1862 = vsel %vm448, %v1676, 0
      %1864 = vmatpush.bf16.msra.mxu0 0
      %1865 = vmatpush.bf16.msra.mxu0 0
      %1866 = vmatpush.bf16.msra.mxu0 0
      %1867 = vmatpush.bf16.msra.mxu0 0
      %1868 = vmatpush.bf16.msra.mxu0 0
      %1869 = vmatpush.bf16.msra.mxu0 0
      %1870 = vmatpush.bf16.msra.mxu0 0
      %1871 = vmatpush.bf16.msra.mxu0 %v1862
      %1872 = vmatmul.bf16.gmra.mxu0 %v1808
      %v1873 = vpop.f32.mrf.mxu0
      %v1874 = vadd.f32 0.0, %v1873
      %v1875 = vpop.f32.mrf.mxu0
      %v1876 = vadd.f32 0.0, %v1875
      %1877 = vmatmul.bf16.gmra.mxu0 %v1811
      %v1878 = vpop.f32.mrf.mxu0
      %v1879 = vadd.f32 0.0, %v1878
      %v1880 = vpop.f32.mrf.mxu0
      %v1881 = vadd.f32 0.0, %v1880
      %1882 = vmatmul.bf16.gmra.mxu0 %v1814
      %v1883 = vpop.f32.mrf.mxu0
      %v1884 = vadd.f32 0.0, %v1883
      %v1885 = vpop.f32.mrf.mxu0
      %v1886 = vadd.f32 0.0, %v1885
      %1887 = vmatmul.bf16.gmra.mxu0 %v1817
      %v1888 = vpop.f32.mrf.mxu0
      %v1889 = vadd.f32 0.0, %v1888
      %v1890 = vpop.f32.mrf.mxu0
      %v1891 = vadd.f32 0.0, %v1890
      %1892 = vmatmul.bf16.gmra.mxu0 %v1820
      %v1893 = vpop.f32.mrf.mxu0
      %v1894 = vadd.f32 0.0, %v1893
      %v1895 = vpop.f32.mrf.mxu0
      %v1896 = vadd.f32 0.0, %v1895
      %1897 = vmatmul.bf16.gmra.mxu0 %v1823
      %v1898 = vpop.f32.mrf.mxu0
      %v1899 = vadd.f32 0.0, %v1898
      %v1900 = vpop.f32.mrf.mxu0
      %v1901 = vadd.f32 0.0, %v1900
      %1902 = vmatmul.bf16.gmra.mxu0 %v1826
      %v1903 = vpop.f32.mrf.mxu0
      %v1904 = vadd.f32 0.0, %v1903
      %v1905 = vpop.f32.mrf.mxu0
      %v1906 = vadd.f32 0.0, %v1905
      %1907 = vmatmul.bf16.gmra.mxu0 %v1829
      %v1908 = vpop.f32.mrf.mxu0
      %v1909 = vadd.f32 0.0, %v1908
      %v1910 = vpop.f32.mrf.mxu0
      %v1911 = vadd.f32 0.0, %v1910
      %1912 = vmatmul.bf16.gmra.mxu0 %v1832
      %v1913 = vpop.f32.mrf.mxu0
      %v1914 = vadd.f32 0.0, %v1913
      %v1915 = vpop.f32.mrf.mxu0
      %v1916 = vadd.f32 0.0, %v1915
      %1917 = vmatmul.bf16.gmra.mxu0 %v1835
      %v1918 = vpop.f32.mrf.mxu0
      %v1919 = vadd.f32 0.0, %v1918
      %v1920 = vpop.f32.mrf.mxu0
      %v1921 = vadd.f32 0.0, %v1920
      %1922 = vmatmul.bf16.gmra.mxu0 %v1838
      %v1923 = vpop.f32.mrf.mxu0
      %v1924 = vadd.f32 0.0, %v1923
      %v1925 = vpop.f32.mrf.mxu0
      %v1926 = vadd.f32 0.0, %v1925
      %1927 = vmatmul.bf16.gmra.mxu0 %v1841
      %v1928 = vpop.f32.mrf.mxu0
      %v1929 = vadd.f32 0.0, %v1928
      %v1930 = vpop.f32.mrf.mxu0
      %v1931 = vadd.f32 0.0, %v1930
      %1932 = vmatmul.bf16.gmra.mxu0 %v1844
      %v1933 = vpop.f32.mrf.mxu0
      %v1934 = vadd.f32 0.0, %v1933
      %v1935 = vpop.f32.mrf.mxu0
      %v1936 = vadd.f32 0.0, %v1935
      %1937 = vmatmul.bf16.gmra.mxu0 %v1847
      %v1938 = vpop.f32.mrf.mxu0
      %v1939 = vadd.f32 0.0, %v1938
      %v1940 = vpop.f32.mrf.mxu0
      %v1941 = vadd.f32 0.0, %v1940
      %1942 = vmatmul.bf16.gmra.mxu0 %v1850
      %v1943 = vpop.f32.mrf.mxu0
      %v1944 = vadd.f32 0.0, %v1943
      %v1945 = vpop.f32.mrf.mxu0
      %v1946 = vadd.f32 0.0, %v1945
      %1947 = vmatmul.bf16.gmra.mxu0 %v1853
      %v1948 = vpop.f32.mrf.mxu0
      %v1949 = vadd.f32 0.0, %v1948
      %v1950 = vpop.f32.mrf.mxu0
      %v1951 = vadd.f32 0.0, %v1950
      %1952 = vmatmul.bf16.gmra.mxu0 %v1856
      %v1953 = vpop.f32.mrf.mxu0
      %v1954 = vadd.f32 0.0, %v1953
      %v1955 = vpop.f32.mrf.mxu0
      %v1956 = vadd.f32 0.0, %v1955
      %1957 = vmatmul.bf16.gmra.mxu0 %v1859
      %v1958 = vpop.f32.mrf.mxu0
      %v1959 = vadd.f32 0.0, %v1958
      %v1960 = vpop.f32.mrf.mxu0
      %v1961 = vadd.f32 0.0, %v1960
      %1962 = vdwg.mxu0
      %v1963 = vadd.f32 %v1639, %v1874
      %v1964 = vadd.f32 %v1640, %v1876
      %v1965 = vadd.f32 %v1641, %v1879
      %v1966 = vadd.f32 %v1642, %v1881
      %v1967 = vadd.f32 %v1643, %v1884
      %v1968 = vadd.f32 %v1644, %v1886
      %v1969 = vadd.f32 %v1645, %v1889
      %v1970 = vadd.f32 %v1646, %v1891
      %v1971 = vadd.f32 %v1647, %v1894
      %v1972 = vadd.f32 %v1648, %v1896
      %v1973 = vadd.f32 %v1649, %v1899
      %v1974 = vadd.f32 %v1650, %v1901
      %v1975 = vadd.f32 %v1651, %v1904
      %v1976 = vadd.f32 %v1652, %v1906
      %v1977 = vadd.f32 %v1653, %v1909
      %v1978 = vadd.f32 %v1654, %v1911
      %v1979 = vadd.f32 %v1655, %v1914
      %v1980 = vadd.f32 %v1656, %v1916
      %v1981 = vadd.f32 %v1657, %v1919
      %v1982 = vadd.f32 %v1658, %v1921
      %v1983 = vadd.f32 %v1659, %v1924
      %v1984 = vadd.f32 %v1660, %v1926
      %v1985 = vadd.f32 %v1661, %v1929
      %v1986 = vadd.f32 %v1662, %v1931
      %v1987 = vadd.f32 %v1663, %v1934
      %v1988 = vadd.f32 %v1664, %v1936
      %v1989 = vadd.f32 %v1665, %v1939
      %v1990 = vadd.f32 %v1666, %v1941
      %v1991 = vadd.f32 %v1667, %v1944
      %v1992 = vadd.f32 %v1668, %v1946
      %v1993 = vadd.f32 %v1669, %v1949
      %v1994 = vadd.f32 %v1670, %v1951
      %v1995 = vadd.f32 %v1671, %v1954
      %v1996 = vadd.f32 %v1672, %v1956
      %v1997 = vadd.f32 %v1673, %v1959
      %v1998 = vadd.f32 %v1674, %v1961
      %1999 = vst [vmem:[#allocation2] sm:$0xff] %v1963
      %2000 = vst [vmem:[#allocation2 + $0x8] sm:$0xff] %v1964
      %2001 = vst [vmem:[#allocation2 + $0x10] sm:$0xff] %v1965
      %2002 = vst [vmem:[#allocation2 + $0x18] sm:$0xff] %v1966
      %2003 = vst [vmem:[#allocation2 + $0x20] sm:$0xff] %v1967
      %2004 = vst [vmem:[#allocation2 + $0x28] sm:$0xff] %v1968
      %2005 = vst [vmem:[#allocation2 + $0x30] sm:$0xff] %v1969
      %2006 = vst [vmem:[#allocation2 + $0x38] sm:$0xff] %v1970
      %2007 = vst [vmem:[#allocation2 + $0x40] sm:$0xff] %v1971
      %2008 = vst [vmem:[#allocation2 + $0x48] sm:$0xff] %v1972
      %2009 = vst [vmem:[#allocation2 + $0x50] sm:$0xff] %v1973
      %2010 = vst [vmem:[#allocation2 + $0x58] sm:$0xff] %v1974
      %2011 = vst [vmem:[#allocation2 + $0x60] sm:$0xff] %v1975
      %2012 = vst [vmem:[#allocation2 + $0x68] sm:$0xff] %v1976
      %2013 = vst [vmem:[#allocation2 + $0x70] sm:$0xff] %v1977
      %2014 = vst [vmem:[#allocation2 + $0x78] sm:$0xff] %v1978
      %2015 = vst [vmem:[#allocation2 + $0x80] sm:$0xff] %v1979
      %2016 = vst [vmem:[#allocation2 + $0x88] sm:$0xff] %v1980
      %2017 = vst [vmem:[#allocation2 + $0x90] sm:$0xff] %v1981
      %2018 = vst [vmem:[#allocation2 + $0x98] sm:$0xff] %v1982
      %2019 = vst [vmem:[#allocation2 + $0xa0] sm:$0xff] %v1983
      %2020 = vst [vmem:[#allocation2 + $0xa8] sm:$0xff] %v1984
      %2021 = vst [vmem:[#allocation2 + $0xb0] sm:$0xff] %v1985
      %2022 = vst [vmem:[#allocation2 + $0xb8] sm:$0xff] %v1986
      %2023 = vst [vmem:[#allocation2 + $0xc0] sm:$0xff] %v1987
      %2024 = vst [vmem:[#allocation2 + $0xc8] sm:$0xff] %v1988
      %2025 = vst [vmem:[#allocation2 + $0xd0] sm:$0xff] %v1989
      %2026 = vst [vmem:[#allocation2 + $0xd8] sm:$0xff] %v1990
      %2027 = vst [vmem:[#allocation2 + $0xe0] sm:$0xff] %v1991
      %2028 = vst [vmem:[#allocation2 + $0xe8] sm:$0xff] %v1992
      %2029 = vst [vmem:[#allocation2 + $0xf0] sm:$0xff] %v1993
      %2030 = vst [vmem:[#allocation2 + $0xf8] sm:$0xff] %v1994
      %2031 = vst [vmem:[#allocation2 + $0x100] sm:$0xff] %v1995
      %2032 = vst [vmem:[#allocation2 + $0x108] sm:$0xff] %v1996
      %2033 = vst [vmem:[#allocation2 + $0x110] sm:$0xff] %v1997
      %2034 = vst [vmem:[#allocation2 + $0x118] sm:$0xff] %v1998
      %v2035 = vld [vmem:[%s183 + $0x8] sm:$0xe]
      %v2036 = vld [vmem:[%s183 + $0xc] sm:$0xf]
      %v2037 = vld [vmem:[%s183 + $0x10] sm:$0xf]
      %v2038 = vld [vmem:[%s183 + $0x14] sm:$0xf]
      %v2039 = vld [vmem:[%s183 + $0x18] sm:$0xf]
      %v2040 = vld [vmem:[%s183 + $0x1c] sm:$0xf]
      %v2041 = vld [vmem:[%s183 + $0x20] sm:$0xf]
      %v2042 = vld [vmem:[%s183 + $0x24] sm:$0xf]
      %v2043 = vld [vmem:[%s183 + $0x28] sm:$0xf]
      %v2044 = vld [vmem:[%s183 + $0x2c] sm:$0xf]
      %v2045 = vld [vmem:[%s183 + $0x30] sm:$0xf]
      %v2046 = vld [vmem:[%s183 + $0x34] sm:$0xf]
      %v2047 = vld [vmem:[%s183 + $0x38] sm:$0xf]
      %v2048 = vld [vmem:[%s183 + $0x3c] sm:$0xf]
      %v2049 = vld [vmem:[%s183 + $0x40] sm:$0xf]
      %v2050 = vld [vmem:[%s183 + $0x44] sm:$0xf]
      %v2051 = vld [vmem:[%s183 + $0x48] sm:$0xf]
      %v2052 = vld [vmem:[%s183 + $0x4c] sm:$0xf]
      %v2053 = vld [vmem:[%s183 + $0x50] sm:$0xf]
      %v2054 = vld [vmem:[%s183 + $0x54] sm:$0xf]
      %v2055 = vld [vmem:[%s183 + $0x58] sm:$0xf]
      %v2056 = vld [vmem:[%s183 + $0x5c] sm:$0xf]
      %v2057 = vld [vmem:[%s183 + $0x60] sm:$0xf]
      %v2058 = vld [vmem:[%s183 + $0x64] sm:$0xf]
      %v2059 = vld [vmem:[%s183 + $0x68] sm:$0xf]
      %v2060 = vld [vmem:[%s183 + $0x6c] sm:$0xf]
      %v2061 = vld [vmem:[%s183 + $0x70] sm:$0xf]
      %v2062 = vld [vmem:[%s183 + $0x74] sm:$0xf]
      %v2063 = vld [vmem:[%s183 + $0x78] sm:$0xf]
      %v2064 = vld [vmem:[%s183 + $0x7c] sm:$0xf]
      %v2065 = vld [vmem:[%s183 + $0x80] sm:$0xf]
      %v2066 = vld [vmem:[%s183 + $0x84] sm:$0xf]
      %v2067 = vld [vmem:[%s183 + $0x88] sm:$0xf]
      %v2068 = vld [vmem:[%s183 + $0x8c] sm:$0xf]
      %v2069 = vld [vmem:[%s183 + $0x90] sm:$0xf]
      %v2070 = vld [vmem:[%s183 + $0x94] sm:$0xf]
      %v2071 = vld [vmem:[%s183 + $0x98] sm:$0x3]
      %v2072 = vld [vmem:[#allocation2] sm:$0xff]
      %v2073 = vld [vmem:[#allocation2 + $0x8] sm:$0xff]
      %v2074 = vld [vmem:[#allocation2 + $0x10] sm:$0xff]
      %v2075 = vld [vmem:[#allocation2 + $0x18] sm:$0xff]
      %v2076 = vld [vmem:[#allocation2 + $0x20] sm:$0xff]
      %v2077 = vld [vmem:[#allocation2 + $0x28] sm:$0xff]
      %v2078 = vld [vmem:[#allocation2 + $0x30] sm:$0xff]
      %v2079 = vld [vmem:[#allocation2 + $0x38] sm:$0xff]
      %v2080 = vld [vmem:[#allocation2 + $0x40] sm:$0xff]
      %v2081 = vld [vmem:[#allocation2 + $0x48] sm:$0xff]
      %v2082 = vld [vmem:[#allocation2 + $0x50] sm:$0xff]
      %v2083 = vld [vmem:[#allocation2 + $0x58] sm:$0xff]
      %v2084 = vld [vmem:[#allocation2 + $0x60] sm:$0xff]
      %v2085 = vld [vmem:[#allocation2 + $0x68] sm:$0xff]
      %v2086 = vld [vmem:[#allocation2 + $0x70] sm:$0xff]
      %v2087 = vld [vmem:[#allocation2 + $0x78] sm:$0xff]
      %v2088 = vld [vmem:[#allocation2 + $0x80] sm:$0xff]
      %v2089 = vld [vmem:[#allocation2 + $0x88] sm:$0xff]
      %v2090 = vld [vmem:[#allocation2 + $0x90] sm:$0xff]
      %v2091 = vld [vmem:[#allocation2 + $0x98] sm:$0xff]
      %v2092 = vld [vmem:[#allocation2 + $0xa0] sm:$0xff]
      %v2093 = vld [vmem:[#allocation2 + $0xa8] sm:$0xff]
      %v2094 = vld [vmem:[#allocation2 + $0xb0] sm:$0xff]
      %v2095 = vld [vmem:[#allocation2 + $0xb8] sm:$0xff]
      %v2096 = vld [vmem:[#allocation2 + $0xc0] sm:$0xff]
      %v2097 = vld [vmem:[#allocation2 + $0xc8] sm:$0xff]
      %v2098 = vld [vmem:[#allocation2 + $0xd0] sm:$0xff]
      %v2099 = vld [vmem:[#allocation2 + $0xd8] sm:$0xff]
      %v2100 = vld [vmem:[#allocation2 + $0xe0] sm:$0xff]
      %v2101 = vld [vmem:[#allocation2 + $0xe8] sm:$0xff]
      %v2102 = vld [vmem:[#allocation2 + $0xf0] sm:$0xff]
      %v2103 = vld [vmem:[#allocation2 + $0xf8] sm:$0xff]
      %v2104 = vld [vmem:[#allocation2 + $0x100] sm:$0xff]
      %v2105 = vld [vmem:[#allocation2 + $0x108] sm:$0xff]
      %v2106 = vld [vmem:[#allocation2 + $0x110] sm:$0xff]
      %v2107 = vld [vmem:[#allocation2 + $0x118] sm:$0xff]
      %s2108 = scalar_lea.vmem %s1, 8
      %v2109 = vld [vmem:[%s2108] sm:$0x3]
      %v2147 = vunpack.c.l.b16 %v2035
      %v2148 = vunpack.c.l.b16 %v2036
      %v2149 = vunpack.c.l.b16 %v2037
      %v2150 = vunpack.c.l.b16 %v2038
      %v2151 = vunpack.c.l.b16 %v2039
      %v2152 = vunpack.c.l.b16 %v2040
      %v2153 = vunpack.c.l.b16 %v2041
      %v2154 = vunpack.c.l.b16 %v2042
      %v2155 = vunpack.c.l.b16 %v2043
      %v2156 = vunpack.c.l.b16 %v2044
      %v2157 = vunpack.c.l.b16 %v2045
      %v2158 = vunpack.c.l.b16 %v2046
      %v2159 = vunpack.c.l.b16 %v2047
      %v2160 = vunpack.c.l.b16 %v2048
      %v2161 = vunpack.c.l.b16 %v2049
      %v2162 = vunpack.c.l.b16 %v2050
      %v2163 = vunpack.c.l.b16 %v2051
      %v2164 = vunpack.c.l.b16 %v2052
      %v2165 = vunpack.c.l.b16 %v2053
      %v2166 = vunpack.c.l.b16 %v2054
      %v2167 = vunpack.c.l.b16 %v2055
      %v2168 = vunpack.c.l.b16 %v2056
      %v2169 = vunpack.c.l.b16 %v2057
      %v2170 = vunpack.c.l.b16 %v2058
      %v2171 = vunpack.c.l.b16 %v2059
      %v2172 = vunpack.c.l.b16 %v2060
      %v2173 = vunpack.c.l.b16 %v2061
      %v2174 = vunpack.c.l.b16 %v2062
      %v2175 = vunpack.c.l.b16 %v2063
      %v2176 = vunpack.c.l.b16 %v2064
      %v2177 = vunpack.c.l.b16 %v2065
      %v2178 = vunpack.c.l.b16 %v2066
      %v2179 = vunpack.c.l.b16 %v2067
      %v2180 = vunpack.c.l.b16 %v2068
      %v2181 = vunpack.c.l.b16 %v2069
      %v2182 = vunpack.c.l.b16 %v2070
      %v2183 = vunpack.c.l.b16 %v2071
      %v2184 = vpack.c.b16 %v2148, %v2147
      %v2185 = vpack.c.b16 %v2150, %v2149
      %v2186 = vpack.c.b16 %v2152, %v2151
      %v2187 = vpack.c.b16 %v2154, %v2153
      %v2188 = vpack.c.b16 %v2156, %v2155
      %v2189 = vpack.c.b16 %v2158, %v2157
      %v2190 = vpack.c.b16 %v2160, %v2159
      %v2191 = vpack.c.b16 %v2162, %v2161
      %v2192 = vpack.c.b16 %v2164, %v2163
      %v2193 = vpack.c.b16 %v2166, %v2165
      %v2194 = vpack.c.b16 %v2168, %v2167
      %v2195 = vpack.c.b16 %v2170, %v2169
      %v2196 = vpack.c.b16 %v2172, %v2171
      %v2197 = vpack.c.b16 %v2174, %v2173
      %v2198 = vpack.c.b16 %v2176, %v2175
      %v2199 = vpack.c.b16 %v2178, %v2177
      %v2200 = vpack.c.b16 %v2180, %v2179
      %v2201 = vpack.c.b16 %v2182, %v2181
      %v2202 = vpack.c.b16 %v2183, %v2183
      %vm2203 = vsmask.f32 6400
      %v2205 = vshrl.u32 %v2184, 16
      %v2207 = vrot.slane %v2205, 1
      %v2208 = vshll.u32 %v2184, 16
      %v2210 = vrot.slane %v2208, 2
      %v2211 = vor.u32 %v2207, %v2210
      %v2213 = vshrl.u32 %v2185, 16
      %v2215 = vrot.slane %v2213, 1
      %v2216 = vshll.u32 %v2185, 16
      %v2218 = vrot.slane %v2216, 2
      %v2219 = vor.u32 %v2215, %v2218
      %v2220 = vsel %vm2203, %v2211, %v2219
      %v2222 = vshrl.u32 %v2186, 16
      %v2224 = vrot.slane %v2222, 1
      %v2225 = vshll.u32 %v2186, 16
      %v2227 = vrot.slane %v2225, 2
      %v2228 = vor.u32 %v2224, %v2227
      %v2229 = vsel %vm2203, %v2219, %v2228
      %v2231 = vshrl.u32 %v2187, 16
      %v2233 = vrot.slane %v2231, 1
      %v2234 = vshll.u32 %v2187, 16
      %v2236 = vrot.slane %v2234, 2
      %v2237 = vor.u32 %v2233, %v2236
      %v2238 = vsel %vm2203, %v2228, %v2237
      %v2240 = vshrl.u32 %v2188, 16
      %v2242 = vrot.slane %v2240, 1
      %v2243 = vshll.u32 %v2188, 16
      %v2245 = vrot.slane %v2243, 2
      %v2246 = vor.u32 %v2242, %v2245
      %v2247 = vsel %vm2203, %v2237, %v2246
      %v2249 = vshrl.u32 %v2189, 16
      %v2251 = vrot.slane %v2249, 1
      %v2252 = vshll.u32 %v2189, 16
      %v2254 = vrot.slane %v2252, 2
      %v2255 = vor.u32 %v2251, %v2254
      %v2256 = vsel %vm2203, %v2246, %v2255
      %v2258 = vshrl.u32 %v2190, 16
      %v2260 = vrot.slane %v2258, 1
      %v2261 = vshll.u32 %v2190, 16
      %v2263 = vrot.slane %v2261, 2
      %v2264 = vor.u32 %v2260, %v2263
      %v2265 = vsel %vm2203, %v2255, %v2264
      %v2267 = vshrl.u32 %v2191, 16
      %v2269 = vrot.slane %v2267, 1
      %v2270 = vshll.u32 %v2191, 16
      %v2272 = vrot.slane %v2270, 2
      %v2273 = vor.u32 %v2269, %v2272
      %v2274 = vsel %vm2203, %v2264, %v2273
      %v2276 = vshrl.u32 %v2192, 16
      %v2278 = vrot.slane %v2276, 1
      %v2279 = vshll.u32 %v2192, 16
      %v2281 = vrot.slane %v2279, 2
      %v2282 = vor.u32 %v2278, %v2281
      %v2283 = vsel %vm2203, %v2273, %v2282
      %v2285 = vshrl.u32 %v2193, 16
      %v2287 = vrot.slane %v2285, 1
      %v2288 = vshll.u32 %v2193, 16
      %v2290 = vrot.slane %v2288, 2
      %v2291 = vor.u32 %v2287, %v2290
      %v2292 = vsel %vm2203, %v2282, %v2291
      %v2294 = vshrl.u32 %v2194, 16
      %v2296 = vrot.slane %v2294, 1
      %v2297 = vshll.u32 %v2194, 16
      %v2299 = vrot.slane %v2297, 2
      %v2300 = vor.u32 %v2296, %v2299
      %v2301 = vsel %vm2203, %v2291, %v2300
      %v2303 = vshrl.u32 %v2195, 16
      %v2305 = vrot.slane %v2303, 1
      %v2306 = vshll.u32 %v2195, 16
      %v2308 = vrot.slane %v2306, 2
      %v2309 = vor.u32 %v2305, %v2308
      %v2310 = vsel %vm2203, %v2300, %v2309
      %v2312 = vshrl.u32 %v2196, 16
      %v2314 = vrot.slane %v2312, 1
      %v2315 = vshll.u32 %v2196, 16
      %v2317 = vrot.slane %v2315, 2
      %v2318 = vor.u32 %v2314, %v2317
      %v2319 = vsel %vm2203, %v2309, %v2318
      %v2321 = vshrl.u32 %v2197, 16
      %v2323 = vrot.slane %v2321, 1
      %v2324 = vshll.u32 %v2197, 16
      %v2326 = vrot.slane %v2324, 2
      %v2327 = vor.u32 %v2323, %v2326
      %v2328 = vsel %vm2203, %v2318, %v2327
      %v2330 = vshrl.u32 %v2198, 16
      %v2332 = vrot.slane %v2330, 1
      %v2333 = vshll.u32 %v2198, 16
      %v2335 = vrot.slane %v2333, 2
      %v2336 = vor.u32 %v2332, %v2335
      %v2337 = vsel %vm2203, %v2327, %v2336
      %v2339 = vshrl.u32 %v2199, 16
      %v2341 = vrot.slane %v2339, 1
      %v2342 = vshll.u32 %v2199, 16
      %v2344 = vrot.slane %v2342, 2
      %v2345 = vor.u32 %v2341, %v2344
      %v2346 = vsel %vm2203, %v2336, %v2345
      %v2348 = vshrl.u32 %v2200, 16
      %v2350 = vrot.slane %v2348, 1
      %v2351 = vshll.u32 %v2200, 16
      %v2353 = vrot.slane %v2351, 2
      %v2354 = vor.u32 %v2350, %v2353
      %v2355 = vsel %vm2203, %v2345, %v2354
      %v2357 = vshrl.u32 %v2201, 16
      %v2359 = vrot.slane %v2357, 1
      %v2360 = vshll.u32 %v2201, 16
      %v2362 = vrot.slane %v2360, 2
      %v2363 = vor.u32 %v2359, %v2362
      %v2364 = vsel %vm2203, %v2354, %v2363
      %v2366 = vshrl.u32 %v2202, 16
      %v2368 = vrot.slane %v2366, 1
      %v2369 = vshll.u32 %v2202, 16
      %v2371 = vrot.slane %v2369, 2
      %v2372 = vor.u32 %v2368, %v2371
      %v2373 = vsel %vm2203, %v2363, %v2372
      %v2375 = vsel %vm393, %v2220, 0
      %v2378 = vsel %vm393, %v2229, 0
      %v2381 = vsel %vm393, %v2238, 0
      %v2384 = vsel %vm393, %v2247, 0
      %v2387 = vsel %vm393, %v2256, 0
      %v2390 = vsel %vm393, %v2265, 0
      %v2393 = vsel %vm393, %v2274, 0
      %v2396 = vsel %vm393, %v2283, 0
      %v2399 = vsel %vm393, %v2292, 0
      %v2402 = vsel %vm393, %v2301, 0
      %v2405 = vsel %vm393, %v2310, 0
      %v2408 = vsel %vm393, %v2319, 0
      %v2411 = vsel %vm393, %v2328, 0
      %v2414 = vsel %vm393, %v2337, 0
      %v2417 = vsel %vm393, %v2346, 0
      %v2420 = vsel %vm393, %v2355, 0
      %v2423 = vsel %vm393, %v2364, 0
      %v2426 = vsel %vm393, %v2373, 0
      %v2429 = vsel %vm448, %v2109, 0
      %2431 = vmatpush.bf16.msra.mxu0 0
      %2432 = vmatpush.bf16.msra.mxu0 0
      %2433 = vmatpush.bf16.msra.mxu0 0
      %2434 = vmatpush.bf16.msra.mxu0 0
      %2435 = vmatpush.bf16.msra.mxu0 0
      %2436 = vmatpush.bf16.msra.mxu0 0
      %2437 = vmatpush.bf16.msra.mxu0 0
      %2438 = vmatpush.bf16.msra.mxu0 %v2429
      %2439 = vmatmul.bf16.gmra.mxu0 %v2375
      %v2440 = vpop.f32.mrf.mxu0
      %v2441 = vadd.f32 0.0, %v2440
      %v2442 = vpop.f32.mrf.mxu0
      %v2443 = vadd.f32 0.0, %v2442
      %2444 = vmatmul.bf16.gmra.mxu0 %v2378
      %v2445 = vpop.f32.mrf.mxu0
      %v2446 = vadd.f32 0.0, %v2445
      %v2447 = vpop.f32.mrf.mxu0
      %v2448 = vadd.f32 0.0, %v2447
      %2449 = vmatmul.bf16.gmra.mxu0 %v2381
      %v2450 = vpop.f32.mrf.mxu0
      %v2451 = vadd.f32 0.0, %v2450
      %v2452 = vpop.f32.mrf.mxu0
      %v2453 = vadd.f32 0.0, %v2452
      %2454 = vmatmul.bf16.gmra.mxu0 %v2384
      %v2455 = vpop.f32.mrf.mxu0
      %v2456 = vadd.f32 0.0, %v2455
      %v2457 = vpop.f32.mrf.mxu0
      %v2458 = vadd.f32 0.0, %v2457
      %2459 = vmatmul.bf16.gmra.mxu0 %v2387
      %v2460 = vpop.f32.mrf.mxu0
      %v2461 = vadd.f32 0.0, %v2460
      %v2462 = vpop.f32.mrf.mxu0
      %v2463 = vadd.f32 0.0, %v2462
      %2464 = vmatmul.bf16.gmra.mxu0 %v2390
      %v2465 = vpop.f32.mrf.mxu0
      %v2466 = vadd.f32 0.0, %v2465
      %v2467 = vpop.f32.mrf.mxu0
      %v2468 = vadd.f32 0.0, %v2467
      %2469 = vmatmul.bf16.gmra.mxu0 %v2393
      %v2470 = vpop.f32.mrf.mxu0
      %v2471 = vadd.f32 0.0, %v2470
      %v2472 = vpop.f32.mrf.mxu0
      %v2473 = vadd.f32 0.0, %v2472
      %2474 = vmatmul.bf16.gmra.mxu0 %v2396
      %v2475 = vpop.f32.mrf.mxu0
      %v2476 = vadd.f32 0.0, %v2475
      %v2477 = vpop.f32.mrf.mxu0
      %v2478 = vadd.f32 0.0, %v2477
      %2479 = vmatmul.bf16.gmra.mxu0 %v2399
      %v2480 = vpop.f32.mrf.mxu0
      %v2481 = vadd.f32 0.0, %v2480
      %v2482 = vpop.f32.mrf.mxu0
      %v2483 = vadd.f32 0.0, %v2482
      %2484 = vmatmul.bf16.gmra.mxu0 %v2402
      %v2485 = vpop.f32.mrf.mxu0
      %v2486 = vadd.f32 0.0, %v2485
      %v2487 = vpop.f32.mrf.mxu0
      %v2488 = vadd.f32 0.0, %v2487
      %2489 = vmatmul.bf16.gmra.mxu0 %v2405
      %v2490 = vpop.f32.mrf.mxu0
      %v2491 = vadd.f32 0.0, %v2490
      %v2492 = vpop.f32.mrf.mxu0
      %v2493 = vadd.f32 0.0, %v2492
      %2494 = vmatmul.bf16.gmra.mxu0 %v2408
      %v2495 = vpop.f32.mrf.mxu0
      %v2496 = vadd.f32 0.0, %v2495
      %v2497 = vpop.f32.mrf.mxu0
      %v2498 = vadd.f32 0.0, %v2497
      %2499 = vmatmul.bf16.gmra.mxu0 %v2411
      %v2500 = vpop.f32.mrf.mxu0
      %v2501 = vadd.f32 0.0, %v2500
      %v2502 = vpop.f32.mrf.mxu0
      %v2503 = vadd.f32 0.0, %v2502
      %2504 = vmatmul.bf16.gmra.mxu0 %v2414
      %v2505 = vpop.f32.mrf.mxu0
      %v2506 = vadd.f32 0.0, %v2505
      %v2507 = vpop.f32.mrf.mxu0
      %v2508 = vadd.f32 0.0, %v2507
      %2509 = vmatmul.bf16.gmra.mxu0 %v2417
      %v2510 = vpop.f32.mrf.mxu0
      %v2511 = vadd.f32 0.0, %v2510
      %v2512 = vpop.f32.mrf.mxu0
      %v2513 = vadd.f32 0.0, %v2512
      %2514 = vmatmul.bf16.gmra.mxu0 %v2420
      %v2515 = vpop.f32.mrf.mxu0
      %v2516 = vadd.f32 0.0, %v2515
      %v2517 = vpop.f32.mrf.mxu0
      %v2518 = vadd.f32 0.0, %v2517
      %2519 = vmatmul.bf16.gmra.mxu0 %v2423
      %v2520 = vpop.f32.mrf.mxu0
      %v2521 = vadd.f32 0.0, %v2520
      %v2522 = vpop.f32.mrf.mxu0
      %v2523 = vadd.f32 0.0, %v2522
      %2524 = vmatmul.bf16.gmra.mxu0 %v2426
      %v2525 = vpop.f32.mrf.mxu0
      %v2526 = vadd.f32 0.0, %v2525
      %v2527 = vpop.f32.mrf.mxu0
      %v2528 = vadd.f32 0.0, %v2527
      %2529 = vdwg.mxu0
      %v2530 = vadd.f32 %v2072, %v2441
      %v2531 = vadd.f32 %v2073, %v2443
      %v2532 = vadd.f32 %v2074, %v2446
      %v2533 = vadd.f32 %v2075, %v2448
      %v2534 = vadd.f32 %v2076, %v2451
      %v2535 = vadd.f32 %v2077, %v2453
      %v2536 = vadd.f32 %v2078, %v2456
      %v2537 = vadd.f32 %v2079, %v2458
      %v2538 = vadd.f32 %v2080, %v2461
      %v2539 = vadd.f32 %v2081, %v2463
      %v2540 = vadd.f32 %v2082, %v2466
      %v2541 = vadd.f32 %v2083, %v2468
      %v2542 = vadd.f32 %v2084, %v2471
      %v2543 = vadd.f32 %v2085, %v2473
      %v2544 = vadd.f32 %v2086, %v2476
      %v2545 = vadd.f32 %v2087, %v2478
      %v2546 = vadd.f32 %v2088, %v2481
      %v2547 = vadd.f32 %v2089, %v2483
      %v2548 = vadd.f32 %v2090, %v2486
      %v2549 = vadd.f32 %v2091, %v2488
      %v2550 = vadd.f32 %v2092, %v2491
      %v2551 = vadd.f32 %v2093, %v2493
      %v2552 = vadd.f32 %v2094, %v2496
      %v2553 = vadd.f32 %v2095, %v2498
      %v2554 = vadd.f32 %v2096, %v2501
      %v2555 = vadd.f32 %v2097, %v2503
      %v2556 = vadd.f32 %v2098, %v2506
      %v2557 = vadd.f32 %v2099, %v2508
      %v2558 = vadd.f32 %v2100, %v2511
      %v2559 = vadd.f32 %v2101, %v2513
      %v2560 = vadd.f32 %v2102, %v2516
      %v2561 = vadd.f32 %v2103, %v2518
      %v2562 = vadd.f32 %v2104, %v2521
      %v2563 = vadd.f32 %v2105, %v2523
      %v2564 = vadd.f32 %v2106, %v2526
      %v2565 = vadd.f32 %v2107, %v2528
      %2566 = vst [vmem:[#allocation2] sm:$0xff] %v2530
      %2567 = vst [vmem:[#allocation2 + $0x8] sm:$0xff] %v2531
      %2568 = vst [vmem:[#allocation2 + $0x10] sm:$0xff] %v2532
      %2569 = vst [vmem:[#allocation2 + $0x18] sm:$0xff] %v2533
      %2570 = vst [vmem:[#allocation2 + $0x20] sm:$0xff] %v2534
      %2571 = vst [vmem:[#allocation2 + $0x28] sm:$0xff] %v2535
      %2572 = vst [vmem:[#allocation2 + $0x30] sm:$0xff] %v2536
      %2573 = vst [vmem:[#allocation2 + $0x38] sm:$0xff] %v2537
      %2574 = vst [vmem:[#allocation2 + $0x40] sm:$0xff] %v2538
      %2575 = vst [vmem:[#allocation2 + $0x48] sm:$0xff] %v2539
      %2576 = vst [vmem:[#allocation2 + $0x50] sm:$0xff] %v2540
      %2577 = vst [vmem:[#allocation2 + $0x58] sm:$0xff] %v2541
      %2578 = vst [vmem:[#allocation2 + $0x60] sm:$0xff] %v2542
      %2579 = vst [vmem:[#allocation2 + $0x68] sm:$0xff] %v2543
      %2580 = vst [vmem:[#allocation2 + $0x70] sm:$0xff] %v2544
      %2581 = vst [vmem:[#allocation2 + $0x78] sm:$0xff] %v2545
      %2582 = vst [vmem:[#allocation2 + $0x80] sm:$0xff] %v2546
      %2583 = vst [vmem:[#allocation2 + $0x88] sm:$0xff] %v2547
      %2584 = vst [vmem:[#allocation2 + $0x90] sm:$0xff] %v2548
      %2585 = vst [vmem:[#allocation2 + $0x98] sm:$0xff] %v2549
      %2586 = vst [vmem:[#allocation2 + $0xa0] sm:$0xff] %v2550
      %2587 = vst [vmem:[#allocation2 + $0xa8] sm:$0xff] %v2551
      %2588 = vst [vmem:[#allocation2 + $0xb0] sm:$0xff] %v2552
      %2589 = vst [vmem:[#allocation2 + $0xb8] sm:$0xff] %v2553
      %2590 = vst [vmem:[#allocation2 + $0xc0] sm:$0xff] %v2554
      %2591 = vst [vmem:[#allocation2 + $0xc8] sm:$0xff] %v2555
      %2592 = vst [vmem:[#allocation2 + $0xd0] sm:$0xff] %v2556
      %2593 = vst [vmem:[#allocation2 + $0xd8] sm:$0xff] %v2557
      %2594 = vst [vmem:[#allocation2 + $0xe0] sm:$0xff] %v2558
      %2595 = vst [vmem:[#allocation2 + $0xe8] sm:$0xff] %v2559
      %2596 = vst [vmem:[#allocation2 + $0xf0] sm:$0xff] %v2560
      %2597 = vst [vmem:[#allocation2 + $0xf8] sm:$0xff] %v2561
      %2598 = vst [vmem:[#allocation2 + $0x100] sm:$0xff] %v2562
      %2599 = vst [vmem:[#allocation2 + $0x108] sm:$0xff] %v2563
      %2600 = vst [vmem:[#allocation2 + $0x110] sm:$0xff] %v2564
      %2601 = vst [vmem:[#allocation2 + $0x118] sm:$0xff] %v2565
      %v2602 = vld [vmem:[%s183 + $0x8] sm:$0xc]
      %v2603 = vld [vmem:[%s183 + $0xc] sm:$0xf]
      %v2604 = vld [vmem:[%s183 + $0x10] sm:$0xf]
      %v2605 = vld [vmem:[%s183 + $0x14] sm:$0xf]
      %v2606 = vld [vmem:[%s183 + $0x18] sm:$0xf]
      %v2607 = vld [vmem:[%s183 + $0x1c] sm:$0xf]
      %v2608 = vld [vmem:[%s183 + $0x20] sm:$0xf]
      %v2609 = vld [vmem:[%s183 + $0x24] sm:$0xf]
      %v2610 = vld [vmem:[%s183 + $0x28] sm:$0xf]
      %v2611 = vld [vmem:[%s183 + $0x2c] sm:$0xf]
      %v2612 = vld [vmem:[%s183 + $0x30] sm:$0xf]
      %v2613 = vld [vmem:[%s183 + $0x34] sm:$0xf]
      %v2614 = vld [vmem:[%s183 + $0x38] sm:$0xf]
      %v2615 = vld [vmem:[%s183 + $0x3c] sm:$0xf]
      %v2616 = vld [vmem:[%s183 + $0x40] sm:$0xf]
      %v2617 = vld [vmem:[%s183 + $0x44] sm:$0xf]
      %v2618 = vld [vmem:[%s183 + $0x48] sm:$0xf]
      %v2619 = vld [vmem:[%s183 + $0x4c] sm:$0xf]
      %v2620 = vld [vmem:[%s183 + $0x50] sm:$0xf]
      %v2621 = vld [vmem:[%s183 + $0x54] sm:$0xf]
      %v2622 = vld [vmem:[%s183 + $0x58] sm:$0xf]
      %v2623 = vld [vmem:[%s183 + $0x5c] sm:$0xf]
      %v2624 = vld [vmem:[%s183 + $0x60] sm:$0xf]
      %v2625 = vld [vmem:[%s183 + $0x64] sm:$0xf]
      %v2626 = vld [vmem:[%s183 + $0x68] sm:$0xf]
      %v2627 = vld [vmem:[%s183 + $0x6c] sm:$0xf]
      %v2628 = vld [vmem:[%s183 + $0x70] sm:$0xf]
      %v2629 = vld [vmem:[%s183 + $0x74] sm:$0xf]
      %v2630 = vld [vmem:[%s183 + $0x78] sm:$0xf]
      %v2631 = vld [vmem:[%s183 + $0x7c] sm:$0xf]
      %v2632 = vld [vmem:[%s183 + $0x80] sm:$0xf]
      %v2633 = vld [vmem:[%s183 + $0x84] sm:$0xf]
      %v2634 = vld [vmem:[%s183 + $0x88] sm:$0xf]
      %v2635 = vld [vmem:[%s183 + $0x8c] sm:$0xf]
      %v2636 = vld [vmem:[%s183 + $0x90] sm:$0xf]
      %v2637 = vld [vmem:[%s183 + $0x94] sm:$0xf]
      %v2638 = vld [vmem:[%s183 + $0x98] sm:$0x3]
      %v2639 = vld [vmem:[#allocation2] sm:$0xff]
      %v2640 = vld [vmem:[#allocation2 + $0x8] sm:$0xff]
      %v2641 = vld [vmem:[#allocation2 + $0x10] sm:$0xff]
      %v2642 = vld [vmem:[#allocation2 + $0x18] sm:$0xff]
      %v2643 = vld [vmem:[#allocation2 + $0x20] sm:$0xff]
      %v2644 = vld [vmem:[#allocation2 + $0x28] sm:$0xff]
      %v2645 = vld [vmem:[#allocation2 + $0x30] sm:$0xff]
      %v2646 = vld [vmem:[#allocation2 + $0x38] sm:$0xff]
      %v2647 = vld [vmem:[#allocation2 + $0x40] sm:$0xff]
      %v2648 = vld [vmem:[#allocation2 + $0x48] sm:$0xff]
      %v2649 = vld [vmem:[#allocation2 + $0x50] sm:$0xff]
      %v2650 = vld [vmem:[#allocation2 + $0x58] sm:$0xff]
      %v2651 = vld [vmem:[#allocation2 + $0x60] sm:$0xff]
      %v2652 = vld [vmem:[#allocation2 + $0x68] sm:$0xff]
      %v2653 = vld [vmem:[#allocation2 + $0x70] sm:$0xff]
      %v2654 = vld [vmem:[#allocation2 + $0x78] sm:$0xff]
      %v2655 = vld [vmem:[#allocation2 + $0x80] sm:$0xff]
      %v2656 = vld [vmem:[#allocation2 + $0x88] sm:$0xff]
      %v2657 = vld [vmem:[#allocation2 + $0x90] sm:$0xff]
      %v2658 = vld [vmem:[#allocation2 + $0x98] sm:$0xff]
      %v2659 = vld [vmem:[#allocation2 + $0xa0] sm:$0xff]
      %v2660 = vld [vmem:[#allocation2 + $0xa8] sm:$0xff]
      %v2661 = vld [vmem:[#allocation2 + $0xb0] sm:$0xff]
      %v2662 = vld [vmem:[#allocation2 + $0xb8] sm:$0xff]
      %v2663 = vld [vmem:[#allocation2 + $0xc0] sm:$0xff]
      %v2664 = vld [vmem:[#allocation2 + $0xc8] sm:$0xff]
      %v2665 = vld [vmem:[#allocation2 + $0xd0] sm:$0xff]
      %v2666 = vld [vmem:[#allocation2 + $0xd8] sm:$0xff]
      %v2667 = vld [vmem:[#allocation2 + $0xe0] sm:$0xff]
      %v2668 = vld [vmem:[#allocation2 + $0xe8] sm:$0xff]
      %v2669 = vld [vmem:[#allocation2 + $0xf0] sm:$0xff]
      %v2670 = vld [vmem:[#allocation2 + $0xf8] sm:$0xff]
      %v2671 = vld [vmem:[#allocation2 + $0x100] sm:$0xff]
      %v2672 = vld [vmem:[#allocation2 + $0x108] sm:$0xff]
      %v2673 = vld [vmem:[#allocation2 + $0x110] sm:$0xff]
      %v2674 = vld [vmem:[#allocation2 + $0x118] sm:$0xff]
      %s2675 = scalar_lea.vmem %s1, 10
      %v2676 = vld [vmem:[%s2675] sm:$0x3]
      %v2714 = vunpack.c.l.b16 %v2602
      %v2715 = vunpack.c.l.b16 %v2603
      %v2716 = vunpack.c.l.b16 %v2604
      %v2717 = vunpack.c.l.b16 %v2605
      %v2718 = vunpack.c.l.b16 %v2606
      %v2719 = vunpack.c.l.b16 %v2607
      %v2720 = vunpack.c.l.b16 %v2608
      %v2721 = vunpack.c.l.b16 %v2609
      %v2722 = vunpack.c.l.b16 %v2610
      %v2723 = vunpack.c.l.b16 %v2611
      %v2724 = vunpack.c.l.b16 %v2612
      %v2725 = vunpack.c.l.b16 %v2613
      %v2726 = vunpack.c.l.b16 %v2614
      %v2727 = vunpack.c.l.b16 %v2615
      %v2728 = vunpack.c.l.b16 %v2616
      %v2729 = vunpack.c.l.b16 %v2617
      %v2730 = vunpack.c.l.b16 %v2618
      %v2731 = vunpack.c.l.b16 %v2619
      %v2732 = vunpack.c.l.b16 %v2620
      %v2733 = vunpack.c.l.b16 %v2621
      %v2734 = vunpack.c.l.b16 %v2622
      %v2735 = vunpack.c.l.b16 %v2623
      %v2736 = vunpack.c.l.b16 %v2624
      %v2737 = vunpack.c.l.b16 %v2625
      %v2738 = vunpack.c.l.b16 %v2626
      %v2739 = vunpack.c.l.b16 %v2627
      %v2740 = vunpack.c.l.b16 %v2628
      %v2741 = vunpack.c.l.b16 %v2629
      %v2742 = vunpack.c.l.b16 %v2630
      %v2743 = vunpack.c.l.b16 %v2631
      %v2744 = vunpack.c.l.b16 %v2632
      %v2745 = vunpack.c.l.b16 %v2633
      %v2746 = vunpack.c.l.b16 %v2634
      %v2747 = vunpack.c.l.b16 %v2635
      %v2748 = vunpack.c.l.b16 %v2636
      %v2749 = vunpack.c.l.b16 %v2637
      %v2750 = vunpack.c.l.b16 %v2638
      %v2751 = vpack.c.b16 %v2715, %v2714
      %v2752 = vpack.c.b16 %v2717, %v2716
      %v2753 = vpack.c.b16 %v2719, %v2718
      %v2754 = vpack.c.b16 %v2721, %v2720
      %v2755 = vpack.c.b16 %v2723, %v2722
      %v2756 = vpack.c.b16 %v2725, %v2724
      %v2757 = vpack.c.b16 %v2727, %v2726
      %v2758 = vpack.c.b16 %v2729, %v2728
      %v2759 = vpack.c.b16 %v2731, %v2730
      %v2760 = vpack.c.b16 %v2733, %v2732
      %v2761 = vpack.c.b16 %v2735, %v2734
      %v2762 = vpack.c.b16 %v2737, %v2736
      %v2763 = vpack.c.b16 %v2739, %v2738
      %v2764 = vpack.c.b16 %v2741, %v2740
      %v2765 = vpack.c.b16 %v2743, %v2742
      %v2766 = vpack.c.b16 %v2745, %v2744
      %v2767 = vpack.c.b16 %v2747, %v2746
      %v2768 = vpack.c.b16 %v2749, %v2748
      %v2769 = vpack.c.b16 %v2750, %v2750
      %vm2770 = vcmask 1045504
      %v2771 = vrot.slane %v2751, 2
      %v2772 = vrot.slane %v2752, 2
      %v2773 = vsel %vm2770, %v2771, %v2772
      %v2774 = vrot.slane %v2753, 2
      %v2775 = vsel %vm2770, %v2772, %v2774
      %v2776 = vrot.slane %v2754, 2
      %v2777 = vsel %vm2770, %v2774, %v2776
      %v2778 = vrot.slane %v2755, 2
      %v2779 = vsel %vm2770, %v2776, %v2778
      %v2780 = vrot.slane %v2756, 2
      %v2781 = vsel %vm2770, %v2778, %v2780
      %v2782 = vrot.slane %v2757, 2
      %v2783 = vsel %vm2770, %v2780, %v2782
      %v2784 = vrot.slane %v2758, 2
      %v2785 = vsel %vm2770, %v2782, %v2784
      %v2786 = vrot.slane %v2759, 2
      %v2787 = vsel %vm2770, %v2784, %v2786
      %v2788 = vrot.slane %v2760, 2
      %v2789 = vsel %vm2770, %v2786, %v2788
      %v2790 = vrot.slane %v2761, 2
      %v2791 = vsel %vm2770, %v2788, %v2790
      %v2792 = vrot.slane %v2762, 2
      %v2793 = vsel %vm2770, %v2790, %v2792
      %v2794 = vrot.slane %v2763, 2
      %v2795 = vsel %vm2770, %v2792, %v2794
      %v2796 = vrot.slane %v2764, 2
      %v2797 = vsel %vm2770, %v2794, %v2796
      %v2798 = vrot.slane %v2765, 2
      %v2799 = vsel %vm2770, %v2796, %v2798
      %v2800 = vrot.slane %v2766, 2
      %v2801 = vsel %vm2770, %v2798, %v2800
      %v2802 = vrot.slane %v2767, 2
      %v2803 = vsel %vm2770, %v2800, %v2802
      %v2804 = vrot.slane %v2768, 2
      %v2805 = vsel %vm2770, %v2802, %v2804
      %v2806 = vrot.slane %v2769, 2
      %v2807 = vsel %vm2770, %v2804, %v2806
      %v2809 = vsel %vm393, %v2773, 0
      %v2812 = vsel %vm393, %v2775, 0
      %v2815 = vsel %vm393, %v2777, 0
      %v2818 = vsel %vm393, %v2779, 0
      %v2821 = vsel %vm393, %v2781, 0
      %v2824 = vsel %vm393, %v2783, 0
      %v2827 = vsel %vm393, %v2785, 0
      %v2830 = vsel %vm393, %v2787, 0
      %v2833 = vsel %vm393, %v2789, 0
      %v2836 = vsel %vm393, %v2791, 0
      %v2839 = vsel %vm393, %v2793, 0
      %v2842 = vsel %vm393, %v2795, 0
      %v2845 = vsel %vm393, %v2797, 0
      %v2848 = vsel %vm393, %v2799, 0
      %v2851 = vsel %vm393, %v2801, 0
      %v2854 = vsel %vm393, %v2803, 0
      %v2857 = vsel %vm393, %v2805, 0
      %v2860 = vsel %vm393, %v2807, 0
      %v2863 = vsel %vm448, %v2676, 0
      %2865 = vmatpush.bf16.msra.mxu0 0
      %2866 = vmatpush.bf16.msra.mxu0 0
      %2867 = vmatpush.bf16.msra.mxu0 0
      %2868 = vmatpush.bf16.msra.mxu0 0
      %2869 = vmatpush.bf16.msra.mxu0 0
      %2870 = vmatpush.bf16.msra.mxu0 0
      %2871 = vmatpush.bf16.msra.mxu0 0
      %2872 = vmatpush.bf16.msra.mxu0 %v2863
      %2873 = vmatmul.bf16.gmra.mxu0 %v2809
      %v2874 = vpop.f32.mrf.mxu0
      %v2875 = vadd.f32 0.0, %v2874
      %v2876 = vpop.f32.mrf.mxu0
      %v2877 = vadd.f32 0.0, %v2876
      %2878 = vmatmul.bf16.gmra.mxu0 %v2812
      %v2879 = vpop.f32.mrf.mxu0
      %v2880 = vadd.f32 0.0, %v2879
      %v2881 = vpop.f32.mrf.mxu0
      %v2882 = vadd.f32 0.0, %v2881
      %2883 = vmatmul.bf16.gmra.mxu0 %v2815
      %v2884 = vpop.f32.mrf.mxu0
      %v2885 = vadd.f32 0.0, %v2884
      %v2886 = vpop.f32.mrf.mxu0
      %v2887 = vadd.f32 0.0, %v2886
      %2888 = vmatmul.bf16.gmra.mxu0 %v2818
      %v2889 = vpop.f32.mrf.mxu0
      %v2890 = vadd.f32 0.0, %v2889
      %v2891 = vpop.f32.mrf.mxu0
      %v2892 = vadd.f32 0.0, %v2891
      %2893 = vmatmul.bf16.gmra.mxu0 %v2821
      %v2894 = vpop.f32.mrf.mxu0
      %v2895 = vadd.f32 0.0, %v2894
      %v2896 = vpop.f32.mrf.mxu0
      %v2897 = vadd.f32 0.0, %v2896
      %2898 = vmatmul.bf16.gmra.mxu0 %v2824
      %v2899 = vpop.f32.mrf.mxu0
      %v2900 = vadd.f32 0.0, %v2899
      %v2901 = vpop.f32.mrf.mxu0
      %v2902 = vadd.f32 0.0, %v2901
      %2903 = vmatmul.bf16.gmra.mxu0 %v2827
      %v2904 = vpop.f32.mrf.mxu0
      %v2905 = vadd.f32 0.0, %v2904
      %v2906 = vpop.f32.mrf.mxu0
      %v2907 = vadd.f32 0.0, %v2906
      %2908 = vmatmul.bf16.gmra.mxu0 %v2830
      %v2909 = vpop.f32.mrf.mxu0
      %v2910 = vadd.f32 0.0, %v2909
      %v2911 = vpop.f32.mrf.mxu0
      %v2912 = vadd.f32 0.0, %v2911
      %2913 = vmatmul.bf16.gmra.mxu0 %v2833
      %v2914 = vpop.f32.mrf.mxu0
      %v2915 = vadd.f32 0.0, %v2914
      %v2916 = vpop.f32.mrf.mxu0
      %v2917 = vadd.f32 0.0, %v2916
      %2918 = vmatmul.bf16.gmra.mxu0 %v2836
      %v2919 = vpop.f32.mrf.mxu0
      %v2920 = vadd.f32 0.0, %v2919
      %v2921 = vpop.f32.mrf.mxu0
      %v2922 = vadd.f32 0.0, %v2921
      %2923 = vmatmul.bf16.gmra.mxu0 %v2839
      %v2924 = vpop.f32.mrf.mxu0
      %v2925 = vadd.f32 0.0, %v2924
      %v2926 = vpop.f32.mrf.mxu0
      %v2927 = vadd.f32 0.0, %v2926
      %2928 = vmatmul.bf16.gmra.mxu0 %v2842
      %v2929 = vpop.f32.mrf.mxu0
      %v2930 = vadd.f32 0.0, %v2929
      %v2931 = vpop.f32.mrf.mxu0
      %v2932 = vadd.f32 0.0, %v2931
      %2933 = vmatmul.bf16.gmra.mxu0 %v2845
      %v2934 = vpop.f32.mrf.mxu0
      %v2935 = vadd.f32 0.0, %v2934
      %v2936 = vpop.f32.mrf.mxu0
      %v2937 = vadd.f32 0.0, %v2936
      %2938 = vmatmul.bf16.gmra.mxu0 %v2848
      %v2939 = vpop.f32.mrf.mxu0
      %v2940 = vadd.f32 0.0, %v2939
      %v2941 = vpop.f32.mrf.mxu0
      %v2942 = vadd.f32 0.0, %v2941
      %2943 = vmatmul.bf16.gmra.mxu0 %v2851
      %v2944 = vpop.f32.mrf.mxu0
      %v2945 = vadd.f32 0.0, %v2944
      %v2946 = vpop.f32.mrf.mxu0
      %v2947 = vadd.f32 0.0, %v2946
      %2948 = vmatmul.bf16.gmra.mxu0 %v2854
      %v2949 = vpop.f32.mrf.mxu0
      %v2950 = vadd.f32 0.0, %v2949
      %v2951 = vpop.f32.mrf.mxu0
      %v2952 = vadd.f32 0.0, %v2951
      %2953 = vmatmul.bf16.gmra.mxu0 %v2857
      %v2954 = vpop.f32.mrf.mxu0
      %v2955 = vadd.f32 0.0, %v2954
      %v2956 = vpop.f32.mrf.mxu0
      %v2957 = vadd.f32 0.0, %v2956
      %2958 = vmatmul.bf16.gmra.mxu0 %v2860
      %v2959 = vpop.f32.mrf.mxu0
      %v2960 = vadd.f32 0.0, %v2959
      %v2961 = vpop.f32.mrf.mxu0
      %v2962 = vadd.f32 0.0, %v2961
      %2963 = vdwg.mxu0
      %v2964 = vadd.f32 %v2639, %v2875
      %v2965 = vadd.f32 %v2640, %v2877
      %v2966 = vadd.f32 %v2641, %v2880
      %v2967 = vadd.f32 %v2642, %v2882
      %v2968 = vadd.f32 %v2643, %v2885
      %v2969 = vadd.f32 %v2644, %v2887
      %v2970 = vadd.f32 %v2645, %v2890
      %v2971 = vadd.f32 %v2646, %v2892
      %v2972 = vadd.f32 %v2647, %v2895
      %v2973 = vadd.f32 %v2648, %v2897
      %v2974 = vadd.f32 %v2649, %v2900
      %v2975 = vadd.f32 %v2650, %v2902
      %v2976 = vadd.f32 %v2651, %v2905
      %v2977 = vadd.f32 %v2652, %v2907
      %v2978 = vadd.f32 %v2653, %v2910
      %v2979 = vadd.f32 %v2654, %v2912
      %v2980 = vadd.f32 %v2655, %v2915
      %v2981 = vadd.f32 %v2656, %v2917
      %v2982 = vadd.f32 %v2657, %v2920
      %v2983 = vadd.f32 %v2658, %v2922
      %v2984 = vadd.f32 %v2659, %v2925
      %v2985 = vadd.f32 %v2660, %v2927
      %v2986 = vadd.f32 %v2661, %v2930
      %v2987 = vadd.f32 %v2662, %v2932
      %v2988 = vadd.f32 %v2663, %v2935
      %v2989 = vadd.f32 %v2664, %v2937
      %v2990 = vadd.f32 %v2665, %v2940
      %v2991 = vadd.f32 %v2666, %v2942
      %v2992 = vadd.f32 %v2667, %v2945
      %v2993 = vadd.f32 %v2668, %v2947
      %v2994 = vadd.f32 %v2669, %v2950
      %v2995 = vadd.f32 %v2670, %v2952
      %v2996 = vadd.f32 %v2671, %v2955
      %v2997 = vadd.f32 %v2672, %v2957
      %v2998 = vadd.f32 %v2673, %v2960
      %v2999 = vadd.f32 %v2674, %v2962
      %3000 = vst [vmem:[#allocation2] sm:$0xff] %v2964
      %3001 = vst [vmem:[#allocation2 + $0x8] sm:$0xff] %v2965
      %3002 = vst [vmem:[#allocation2 + $0x10] sm:$0xff] %v2966
      %3003 = vst [vmem:[#allocation2 + $0x18] sm:$0xff] %v2967
      %3004 = vst [vmem:[#allocation2 + $0x20] sm:$0xff] %v2968
      %3005 = vst [vmem:[#allocation2 + $0x28] sm:$0xff] %v2969
      %3006 = vst [vmem:[#allocation2 + $0x30] sm:$0xff] %v2970
      %3007 = vst [vmem:[#allocation2 + $0x38] sm:$0xff] %v2971
      %3008 = vst [vmem:[#allocation2 + $0x40] sm:$0xff] %v2972
      %3009 = vst [vmem:[#allocation2 + $0x48] sm:$0xff] %v2973
      %3010 = vst [vmem:[#allocation2 + $0x50] sm:$0xff] %v2974
      %3011 = vst [vmem:[#allocation2 + $0x58] sm:$0xff] %v2975
      %3012 = vst [vmem:[#allocation2 + $0x60] sm:$0xff] %v2976
      %3013 = vst [vmem:[#allocation2 + $0x68] sm:$0xff] %v2977
      %3014 = vst [vmem:[#allocation2 + $0x70] sm:$0xff] %v2978
      %3015 = vst [vmem:[#allocation2 + $0x78] sm:$0xff] %v2979
      %3016 = vst [vmem:[#allocation2 + $0x80] sm:$0xff] %v2980
      %3017 = vst [vmem:[#allocation2 + $0x88] sm:$0xff] %v2981
      %3018 = vst [vmem:[#allocation2 + $0x90] sm:$0xff] %v2982
      %3019 = vst [vmem:[#allocation2 + $0x98] sm:$0xff] %v2983
      %3020 = vst [vmem:[#allocation2 + $0xa0] sm:$0xff] %v2984
      %3021 = vst [vmem:[#allocation2 + $0xa8] sm:$0xff] %v2985
      %3022 = vst [vmem:[#allocation2 + $0xb0] sm:$0xff] %v2986
      %3023 = vst [vmem:[#allocation2 + $0xb8] sm:$0xff] %v2987
      %3024 = vst [vmem:[#allocation2 + $0xc0] sm:$0xff] %v2988
      %3025 = vst [vmem:[#allocation2 + $0xc8] sm:$0xff] %v2989
      %3026 = vst [vmem:[#allocation2 + $0xd0] sm:$0xff] %v2990
      %3027 = vst [vmem:[#allocation2 + $0xd8] sm:$0xff] %v2991
      %3028 = vst [vmem:[#allocation2 + $0xe0] sm:$0xff] %v2992
      %3029 = vst [vmem:[#allocation2 + $0xe8] sm:$0xff] %v2993
      %3030 = vst [vmem:[#allocation2 + $0xf0] sm:$0xff] %v2994
      %3031 = vst [vmem:[#allocation2 + $0xf8] sm:$0xff] %v2995
      %3032 = vst [vmem:[#allocation2 + $0x100] sm:$0xff] %v2996
      %3033 = vst [vmem:[#allocation2 + $0x108] sm:$0xff] %v2997
      %3034 = vst [vmem:[#allocation2 + $0x110] sm:$0xff] %v2998
      %3035 = vst [vmem:[#allocation2 + $0x118] sm:$0xff] %v2999
      %v3036 = vld [vmem:[%s183 + $0x10] sm:$0xc]
      %v3037 = vld [vmem:[%s183 + $0x14] sm:$0xf]
      %v3038 = vld [vmem:[%s183 + $0x18] sm:$0xf]
      %v3039 = vld [vmem:[%s183 + $0x1c] sm:$0xf]
      %v3040 = vld [vmem:[%s183 + $0x20] sm:$0xf]
      %v3041 = vld [vmem:[%s183 + $0x24] sm:$0xf]
      %v3042 = vld [vmem:[%s183 + $0x28] sm:$0xf]
      %v3043 = vld [vmem:[%s183 + $0x2c] sm:$0xf]
      %v3044 = vld [vmem:[%s183 + $0x30] sm:$0xf]
      %v3045 = vld [vmem:[%s183 + $0x34] sm:$0xf]
      %v3046 = vld [vmem:[%s183 + $0x38] sm:$0xf]
      %v3047 = vld [vmem:[%s183 + $0x3c] sm:$0xf]
      %v3048 = vld [vmem:[%s183 + $0x40] sm:$0xf]
      %v3049 = vld [vmem:[%s183 + $0x44] sm:$0xf]
      %v3050 = vld [vmem:[%s183 + $0x48] sm:$0xf]
      %v3051 = vld [vmem:[%s183 + $0x4c] sm:$0xf]
      %v3052 = vld [vmem:[%s183 + $0x50] sm:$0xf]
      %v3053 = vld [vmem:[%s183 + $0x54] sm:$0xf]
      %v3054 = vld [vmem:[%s183 + $0x58] sm:$0xf]
      %v3055 = vld [vmem:[%s183 + $0x5c] sm:$0xf]
      %v3056 = vld [vmem:[%s183 + $0x60] sm:$0xf]
      %v3057 = vld [vmem:[%s183 + $0x64] sm:$0xf]
      %v3058 = vld [vmem:[%s183 + $0x68] sm:$0xf]
      %v3059 = vld [vmem:[%s183 + $0x6c] sm:$0xf]
      %v3060 = vld [vmem:[%s183 + $0x70] sm:$0xf]
      %v3061 = vld [vmem:[%s183 + $0x74] sm:$0xf]
      %v3062 = vld [vmem:[%s183 + $0x78] sm:$0xf]
      %v3063 = vld [vmem:[%s183 + $0x7c] sm:$0xf]
      %v3064 = vld [vmem:[%s183 + $0x80] sm:$0xf]
      %v3065 = vld [vmem:[%s183 + $0x84] sm:$0xf]
      %v3066 = vld [vmem:[%s183 + $0x88] sm:$0xf]
      %v3067 = vld [vmem:[%s183 + $0x8c] sm:$0xf]
      %v3068 = vld [vmem:[%s183 + $0x90] sm:$0xf]
      %v3069 = vld [vmem:[%s183 + $0x94] sm:$0xf]
      %v3070 = vld [vmem:[%s183 + $0x98] sm:$0xf]
      %v3071 = vld [vmem:[%s183 + $0x9c] sm:$0xf]
      %v3072 = vld [vmem:[%s183 + $0xa0] sm:$0x3]
      %v3073 = vld [vmem:[#allocation2] sm:$0xff]
      %v3074 = vld [vmem:[#allocation2 + $0x8] sm:$0xff]
      %v3075 = vld [vmem:[#allocation2 + $0x10] sm:$0xff]
      %v3076 = vld [vmem:[#allocation2 + $0x18] sm:$0xff]
      %v3077 = vld [vmem:[#allocation2 + $0x20] sm:$0xff]
      %v3078 = vld [vmem:[#allocation2 + $0x28] sm:$0xff]
      %v3079 = vld [vmem:[#allocation2 + $0x30] sm:$0xff]
      %v3080 = vld [vmem:[#allocation2 + $0x38] sm:$0xff]
      %v3081 = vld [vmem:[#allocation2 + $0x40] sm:$0xff]
      %v3082 = vld [vmem:[#allocation2 + $0x48] sm:$0xff]
      %v3083 = vld [vmem:[#allocation2 + $0x50] sm:$0xff]
      %v3084 = vld [vmem:[#allocation2 + $0x58] sm:$0xff]
      %v3085 = vld [vmem:[#allocation2 + $0x60] sm:$0xff]
      %v3086 = vld [vmem:[#allocation2 + $0x68] sm:$0xff]
      %v3087 = vld [vmem:[#allocation2 + $0x70] sm:$0xff]
      %v3088 = vld [vmem:[#allocation2 + $0x78] sm:$0xff]
      %v3089 = vld [vmem:[#allocation2 + $0x80] sm:$0xff]
      %v3090 = vld [vmem:[#allocation2 + $0x88] sm:$0xff]
      %v3091 = vld [vmem:[#allocation2 + $0x90] sm:$0xff]
      %v3092 = vld [vmem:[#allocation2 + $0x98] sm:$0xff]
      %v3093 = vld [vmem:[#allocation2 + $0xa0] sm:$0xff]
      %v3094 = vld [vmem:[#allocation2 + $0xa8] sm:$0xff]
      %v3095 = vld [vmem:[#allocation2 + $0xb0] sm:$0xff]
      %v3096 = vld [vmem:[#allocation2 + $0xb8] sm:$0xff]
      %v3097 = vld [vmem:[#allocation2 + $0xc0] sm:$0xff]
      %v3098 = vld [vmem:[#allocation2 + $0xc8] sm:$0xff]
      %v3099 = vld [vmem:[#allocation2 + $0xd0] sm:$0xff]
      %v3100 = vld [vmem:[#allocation2 + $0xd8] sm:$0xff]
      %v3101 = vld [vmem:[#allocation2 + $0xe0] sm:$0xff]
      %v3102 = vld [vmem:[#allocation2 + $0xe8] sm:$0xff]
      %v3103 = vld [vmem:[#allocation2 + $0xf0] sm:$0xff]
      %v3104 = vld [vmem:[#allocation2 + $0xf8] sm:$0xff]
      %v3105 = vld [vmem:[#allocation2 + $0x100] sm:$0xff]
      %v3106 = vld [vmem:[#allocation2 + $0x108] sm:$0xff]
      %v3107 = vld [vmem:[#allocation2 + $0x110] sm:$0xff]
      %v3108 = vld [vmem:[#allocation2 + $0x118] sm:$0xff]
      %s3109 = scalar_lea.vmem %s1, 12
      %v3110 = vld [vmem:[%s3109] sm:$0x3]
      %v3148 = vunpack.c.l.b16 %v3036
      %v3149 = vunpack.c.l.b16 %v3037
      %v3150 = vunpack.c.l.b16 %v3038
      %v3151 = vunpack.c.l.b16 %v3039
      %v3152 = vunpack.c.l.b16 %v3040
      %v3153 = vunpack.c.l.b16 %v3041
      %v3154 = vunpack.c.l.b16 %v3042
      %v3155 = vunpack.c.l.b16 %v3043
      %v3156 = vunpack.c.l.b16 %v3044
      %v3157 = vunpack.c.l.b16 %v3045
      %v3158 = vunpack.c.l.b16 %v3046
      %v3159 = vunpack.c.l.b16 %v3047
      %v3160 = vunpack.c.l.b16 %v3048
      %v3161 = vunpack.c.l.b16 %v3049
      %v3162 = vunpack.c.l.b16 %v3050
      %v3163 = vunpack.c.l.b16 %v3051
      %v3164 = vunpack.c.l.b16 %v3052
      %v3165 = vunpack.c.l.b16 %v3053
      %v3166 = vunpack.c.l.b16 %v3054
      %v3167 = vunpack.c.l.b16 %v3055
      %v3168 = vunpack.c.l.b16 %v3056
      %v3169 = vunpack.c.l.b16 %v3057
      %v3170 = vunpack.c.l.b16 %v3058
      %v3171 = vunpack.c.l.b16 %v3059
      %v3172 = vunpack.c.l.b16 %v3060
      %v3173 = vunpack.c.l.b16 %v3061
      %v3174 = vunpack.c.l.b16 %v3062
      %v3175 = vunpack.c.l.b16 %v3063
      %v3176 = vunpack.c.l.b16 %v3064
      %v3177 = vunpack.c.l.b16 %v3065
      %v3178 = vunpack.c.l.b16 %v3066
      %v3179 = vunpack.c.l.b16 %v3067
      %v3180 = vunpack.c.l.b16 %v3068
      %v3181 = vunpack.c.l.b16 %v3069
      %v3182 = vunpack.c.l.b16 %v3070
      %v3183 = vunpack.c.l.b16 %v3071
      %v3184 = vunpack.c.l.b16 %v3072
      %v3185 = vpack.c.b16 %v3149, %v3148
      %v3186 = vpack.c.b16 %v3151, %v3150
      %v3187 = vpack.c.b16 %v3153, %v3152
      %v3188 = vpack.c.b16 %v3155, %v3154
      %v3189 = vpack.c.b16 %v3157, %v3156
      %v3190 = vpack.c.b16 %v3159, %v3158
      %v3191 = vpack.c.b16 %v3161, %v3160
      %v3192 = vpack.c.b16 %v3163, %v3162
      %v3193 = vpack.c.b16 %v3165, %v3164
      %v3194 = vpack.c.b16 %v3167, %v3166
      %v3195 = vpack.c.b16 %v3169, %v3168
      %v3196 = vpack.c.b16 %v3171, %v3170
      %v3197 = vpack.c.b16 %v3173, %v3172
      %v3198 = vpack.c.b16 %v3175, %v3174
      %v3199 = vpack.c.b16 %v3177, %v3176
      %v3200 = vpack.c.b16 %v3179, %v3178
      %v3201 = vpack.c.b16 %v3181, %v3180
      %v3202 = vpack.c.b16 %v3183, %v3182
      %v3203 = vpack.c.b16 %v3184, %v3184
      %v3204 = vrot.slane %v3185, 2
      %v3205 = vrot.slane %v3186, 2
      %v3206 = vsel %vm2770, %v3204, %v3205
      %v3207 = vrot.slane %v3187, 2
      %v3208 = vsel %vm2770, %v3205, %v3207
      %v3209 = vrot.slane %v3188, 2
      %v3210 = vsel %vm2770, %v3207, %v3209
      %v3211 = vrot.slane %v3189, 2
      %v3212 = vsel %vm2770, %v3209, %v3211
      %v3213 = vrot.slane %v3190, 2
      %v3214 = vsel %vm2770, %v3211, %v3213
      %v3215 = vrot.slane %v3191, 2
      %v3216 = vsel %vm2770, %v3213, %v3215
      %v3217 = vrot.slane %v3192, 2
      %v3218 = vsel %vm2770, %v3215, %v3217
      %v3219 = vrot.slane %v3193, 2
      %v3220 = vsel %vm2770, %v3217, %v3219
      %v3221 = vrot.slane %v3194, 2
      %v3222 = vsel %vm2770, %v3219, %v3221
      %v3223 = vrot.slane %v3195, 2
      %v3224 = vsel %vm2770, %v3221, %v3223
      %v3225 = vrot.slane %v3196, 2
      %v3226 = vsel %vm2770, %v3223, %v3225
      %v3227 = vrot.slane %v3197, 2
      %v3228 = vsel %vm2770, %v3225, %v3227
      %v3229 = vrot.slane %v3198, 2
      %v3230 = vsel %vm2770, %v3227, %v3229
      %v3231 = vrot.slane %v3199, 2
      %v3232 = vsel %vm2770, %v3229, %v3231
      %v3233 = vrot.slane %v3200, 2
      %v3234 = vsel %vm2770, %v3231, %v3233
      %v3235 = vrot.slane %v3201, 2
      %v3236 = vsel %vm2770, %v3233, %v3235
      %v3237 = vrot.slane %v3202, 2
      %v3238 = vsel %vm2770, %v3235, %v3237
      %v3239 = vrot.slane %v3203, 2
      %v3240 = vsel %vm2770, %v3237, %v3239
      %v3242 = vsel %vm393, %v3206, 0
      %v3245 = vsel %vm393, %v3208, 0
      %v3248 = vsel %vm393, %v3210, 0
      %v3251 = vsel %vm393, %v3212, 0
      %v3254 = vsel %vm393, %v3214, 0
      %v3257 = vsel %vm393, %v3216, 0
      %v3260 = vsel %vm393, %v3218, 0
      %v3263 = vsel %vm393, %v3220, 0
      %v3266 = vsel %vm393, %v3222, 0
      %v3269 = vsel %vm393, %v3224, 0
      %v3272 = vsel %vm393, %v3226, 0
      %v3275 = vsel %vm393, %v3228, 0
      %v3278 = vsel %vm393, %v3230, 0
      %v3281 = vsel %vm393, %v3232, 0
      %v3284 = vsel %vm393, %v3234, 0
      %v3287 = vsel %vm393, %v3236, 0
      %v3290 = vsel %vm393, %v3238, 0
      %v3293 = vsel %vm393, %v3240, 0
      %v3296 = vsel %vm448, %v3110, 0
      %3298 = vmatpush.bf16.msra.mxu0 0
      %3299 = vmatpush.bf16.msra.mxu0 0
      %3300 = vmatpush.bf16.msra.mxu0 0
      %3301 = vmatpush.bf16.msra.mxu0 0
      %3302 = vmatpush.bf16.msra.mxu0 0
      %3303 = vmatpush.bf16.msra.mxu0 0
      %3304 = vmatpush.bf16.msra.mxu0 0
      %3305 = vmatpush.bf16.msra.mxu0 %v3296
      %3306 = vmatmul.bf16.gmra.mxu0 %v3242
      %v3307 = vpop.f32.mrf.mxu0
      %v3308 = vadd.f32 0.0, %v3307
      %v3309 = vpop.f32.mrf.mxu0
      %v3310 = vadd.f32 0.0, %v3309
      %3311 = vmatmul.bf16.gmra.mxu0 %v3245
      %v3312 = vpop.f32.mrf.mxu0
      %v3313 = vadd.f32 0.0, %v3312
      %v3314 = vpop.f32.mrf.mxu0
      %v3315 = vadd.f32 0.0, %v3314
      %3316 = vmatmul.bf16.gmra.mxu0 %v3248
      %v3317 = vpop.f32.mrf.mxu0
      %v3318 = vadd.f32 0.0, %v3317
      %v3319 = vpop.f32.mrf.mxu0
      %v3320 = vadd.f32 0.0, %v3319
      %3321 = vmatmul.bf16.gmra.mxu0 %v3251
      %v3322 = vpop.f32.mrf.mxu0
      %v3323 = vadd.f32 0.0, %v3322
      %v3324 = vpop.f32.mrf.mxu0
      %v3325 = vadd.f32 0.0, %v3324
      %3326 = vmatmul.bf16.gmra.mxu0 %v3254
      %v3327 = vpop.f32.mrf.mxu0
      %v3328 = vadd.f32 0.0, %v3327
      %v3329 = vpop.f32.mrf.mxu0
      %v3330 = vadd.f32 0.0, %v3329
      %3331 = vmatmul.bf16.gmra.mxu0 %v3257
      %v3332 = vpop.f32.mrf.mxu0
      %v3333 = vadd.f32 0.0, %v3332
      %v3334 = vpop.f32.mrf.mxu0
      %v3335 = vadd.f32 0.0, %v3334
      %3336 = vmatmul.bf16.gmra.mxu0 %v3260
      %v3337 = vpop.f32.mrf.mxu0
      %v3338 = vadd.f32 0.0, %v3337
      %v3339 = vpop.f32.mrf.mxu0
      %v3340 = vadd.f32 0.0, %v3339
      %3341 = vmatmul.bf16.gmra.mxu0 %v3263
      %v3342 = vpop.f32.mrf.mxu0
      %v3343 = vadd.f32 0.0, %v3342
      %v3344 = vpop.f32.mrf.mxu0
      %v3345 = vadd.f32 0.0, %v3344
      %3346 = vmatmul.bf16.gmra.mxu0 %v3266
      %v3347 = vpop.f32.mrf.mxu0
      %v3348 = vadd.f32 0.0, %v3347
      %v3349 = vpop.f32.mrf.mxu0
      %v3350 = vadd.f32 0.0, %v3349
      %3351 = vmatmul.bf16.gmra.mxu0 %v3269
      %v3352 = vpop.f32.mrf.mxu0
      %v3353 = vadd.f32 0.0, %v3352
      %v3354 = vpop.f32.mrf.mxu0
      %v3355 = vadd.f32 0.0, %v3354
      %3356 = vmatmul.bf16.gmra.mxu0 %v3272
      %v3357 = vpop.f32.mrf.mxu0
      %v3358 = vadd.f32 0.0, %v3357
      %v3359 = vpop.f32.mrf.mxu0
      %v3360 = vadd.f32 0.0, %v3359
      %3361 = vmatmul.bf16.gmra.mxu0 %v3275
      %v3362 = vpop.f32.mrf.mxu0
      %v3363 = vadd.f32 0.0, %v3362
      %v3364 = vpop.f32.mrf.mxu0
      %v3365 = vadd.f32 0.0, %v3364
      %3366 = vmatmul.bf16.gmra.mxu0 %v3278
      %v3367 = vpop.f32.mrf.mxu0
      %v3368 = vadd.f32 0.0, %v3367
      %v3369 = vpop.f32.mrf.mxu0
      %v3370 = vadd.f32 0.0, %v3369
      %3371 = vmatmul.bf16.gmra.mxu0 %v3281
      %v3372 = vpop.f32.mrf.mxu0
      %v3373 = vadd.f32 0.0, %v3372
      %v3374 = vpop.f32.mrf.mxu0
      %v3375 = vadd.f32 0.0, %v3374
      %3376 = vmatmul.bf16.gmra.mxu0 %v3284
      %v3377 = vpop.f32.mrf.mxu0
      %v3378 = vadd.f32 0.0, %v3377
      %v3379 = vpop.f32.mrf.mxu0
      %v3380 = vadd.f32 0.0, %v3379
      %3381 = vmatmul.bf16.gmra.mxu0 %v3287
      %v3382 = vpop.f32.mrf.mxu0
      %v3383 = vadd.f32 0.0, %v3382
      %v3384 = vpop.f32.mrf.mxu0
      %v3385 = vadd.f32 0.0, %v3384
      %3386 = vmatmul.bf16.gmra.mxu0 %v3290
      %v3387 = vpop.f32.mrf.mxu0
      %v3388 = vadd.f32 0.0, %v3387
      %v3389 = vpop.f32.mrf.mxu0
      %v3390 = vadd.f32 0.0, %v3389
      %3391 = vmatmul.bf16.gmra.mxu0 %v3293
      %v3392 = vpop.f32.mrf.mxu0
      %v3393 = vadd.f32 0.0, %v3392
      %v3394 = vpop.f32.mrf.mxu0
      %v3395 = vadd.f32 0.0, %v3394
      %3396 = vdwg.mxu0
      %v3397 = vadd.f32 %v3073, %v3308
      %v3398 = vadd.f32 %v3074, %v3310
      %v3399 = vadd.f32 %v3075, %v3313
      %v3400 = vadd.f32 %v3076, %v3315
      %v3401 = vadd.f32 %v3077, %v3318
      %v3402 = vadd.f32 %v3078, %v3320
      %v3403 = vadd.f32 %v3079, %v3323
      %v3404 = vadd.f32 %v3080, %v3325
      %v3405 = vadd.f32 %v3081, %v3328
      %v3406 = vadd.f32 %v3082, %v3330
      %v3407 = vadd.f32 %v3083, %v3333
      %v3408 = vadd.f32 %v3084, %v3335
      %v3409 = vadd.f32 %v3085, %v3338
      %v3410 = vadd.f32 %v3086, %v3340
      %v3411 = vadd.f32 %v3087, %v3343
      %v3412 = vadd.f32 %v3088, %v3345
      %v3413 = vadd.f32 %v3089, %v3348
      %v3414 = vadd.f32 %v3090, %v3350
      %v3415 = vadd.f32 %v3091, %v3353
      %v3416 = vadd.f32 %v3092, %v3355
      %v3417 = vadd.f32 %v3093, %v3358
      %v3418 = vadd.f32 %v3094, %v3360
      %v3419 = vadd.f32 %v3095, %v3363
      %v3420 = vadd.f32 %v3096, %v3365
      %v3421 = vadd.f32 %v3097, %v3368
      %v3422 = vadd.f32 %v3098, %v3370
      %v3423 = vadd.f32 %v3099, %v3373
      %v3424 = vadd.f32 %v3100, %v3375
      %v3425 = vadd.f32 %v3101, %v3378
      %v3426 = vadd.f32 %v3102, %v3380
      %v3427 = vadd.f32 %v3103, %v3383
      %v3428 = vadd.f32 %v3104, %v3385
      %v3429 = vadd.f32 %v3105, %v3388
      %v3430 = vadd.f32 %v3106, %v3390
      %v3431 = vadd.f32 %v3107, %v3393
      %v3432 = vadd.f32 %v3108, %v3395
      %3433 = vst [vmem:[#allocation2] sm:$0xff] %v3397
      %3434 = vst [vmem:[#allocation2 + $0x8] sm:$0xff] %v3398
      %3435 = vst [vmem:[#allocation2 + $0x10] sm:$0xff] %v3399
      %3436 = vst [vmem:[#allocation2 + $0x18] sm:$0xff] %v3400
      %3437 = vst [vmem:[#allocation2 + $0x20] sm:$0xff] %v3401
      %3438 = vst [vmem:[#allocation2 + $0x28] sm:$0xff] %v3402
      %3439 = vst [vmem:[#allocation2 + $0x30] sm:$0xff] %v3403
      %3440 = vst [vmem:[#allocation2 + $0x38] sm:$0xff] %v3404
      %3441 = vst [vmem:[#allocation2 + $0x40] sm:$0xff] %v3405
      %3442 = vst [vmem:[#allocation2 + $0x48] sm:$0xff] %v3406
      %3443 = vst [vmem:[#allocation2 + $0x50] sm:$0xff] %v3407
      %3444 = vst [vmem:[#allocation2 + $0x58] sm:$0xff] %v3408
      %3445 = vst [vmem:[#allocation2 + $0x60] sm:$0xff] %v3409
      %3446 = vst [vmem:[#allocation2 + $0x68] sm:$0xff] %v3410
      %3447 = vst [vmem:[#allocation2 + $0x70] sm:$0xff] %v3411
      %3448 = vst [vmem:[#allocation2 + $0x78] sm:$0xff] %v3412
      %3449 = vst [vmem:[#allocation2 + $0x80] sm:$0xff] %v3413
      %3450 = vst [vmem:[#allocation2 + $0x88] sm:$0xff] %v3414
      %3451 = vst [vmem:[#allocation2 + $0x90] sm:$0xff] %v3415
      %3452 = vst [vmem:[#allocation2 + $0x98] sm:$0xff] %v3416
      %3453 = vst [vmem:[#allocation2 + $0xa0] sm:$0xff] %v3417
      %3454 = vst [vmem:[#allocation2 + $0xa8] sm:$0xff] %v3418
      %3455 = vst [vmem:[#allocation2 + $0xb0] sm:$0xff] %v3419
      %3456 = vst [vmem:[#allocation2 + $0xb8] sm:$0xff] %v3420
      %3457 = vst [vmem:[#allocation2 + $0xc0] sm:$0xff] %v3421
      %3458 = vst [vmem:[#allocation2 + $0xc8] sm:$0xff] %v3422
      %3459 = vst [vmem:[#allocation2 + $0xd0] sm:$0xff] %v3423
      %3460 = vst [vmem:[#allocation2 + $0xd8] sm:$0xff] %v3424
      %3461 = vst [vmem:[#allocation2 + $0xe0] sm:$0xff] %v3425
      %3462 = vst [vmem:[#allocation2 + $0xe8] sm:$0xff] %v3426
      %3463 = vst [vmem:[#allocation2 + $0xf0] sm:$0xff] %v3427
      %3464 = vst [vmem:[#allocation2 + $0xf8] sm:$0xff] %v3428
      %3465 = vst [vmem:[#allocation2 + $0x100] sm:$0xff] %v3429
      %3466 = vst [vmem:[#allocation2 + $0x108] sm:$0xff] %v3430
      %3467 = vst [vmem:[#allocation2 + $0x110] sm:$0xff] %v3431
      %3468 = vst [vmem:[#allocation2 + $0x118] sm:$0xff] %v3432
      %v3469 = vld [vmem:[%s183 + $0x10] sm:$0xc]
      %v3470 = vld [vmem:[%s183 + $0x14] sm:$0xf]
      %v3471 = vld [vmem:[%s183 + $0x18] sm:$0xf]
      %v3472 = vld [vmem:[%s183 + $0x1c] sm:$0xf]
      %v3473 = vld [vmem:[%s183 + $0x20] sm:$0xf]
      %v3474 = vld [vmem:[%s183 + $0x24] sm:$0xf]
      %v3475 = vld [vmem:[%s183 + $0x28] sm:$0xf]
      %v3476 = vld [vmem:[%s183 + $0x2c] sm:$0xf]
      %v3477 = vld [vmem:[%s183 + $0x30] sm:$0xf]
      %v3478 = vld [vmem:[%s183 + $0x34] sm:$0xf]
      %v3479 = vld [vmem:[%s183 + $0x38] sm:$0xf]
      %v3480 = vld [vmem:[%s183 + $0x3c] sm:$0xf]
      %v3481 = vld [vmem:[%s183 + $0x40] sm:$0xf]
      %v3482 = vld [vmem:[%s183 + $0x44] sm:$0xf]
      %v3483 = vld [vmem:[%s183 + $0x48] sm:$0xf]
      %v3484 = vld [vmem:[%s183 + $0x4c] sm:$0xf]
      %v3485 = vld [vmem:[%s183 + $0x50] sm:$0xf]
      %v3486 = vld [vmem:[%s183 + $0x54] sm:$0xf]
      %v3487 = vld [vmem:[%s183 + $0x58] sm:$0xf]
      %v3488 = vld [vmem:[%s183 + $0x5c] sm:$0xf]
      %v3489 = vld [vmem:[%s183 + $0x60] sm:$0xf]
      %v3490 = vld [vmem:[%s183 + $0x64] sm:$0xf]
      %v3491 = vld [vmem:[%s183 + $0x68] sm:$0xf]
      %v3492 = vld [vmem:[%s183 + $0x6c] sm:$0xf]
      %v3493 = vld [vmem:[%s183 + $0x70] sm:$0xf]
      %v3494 = vld [vmem:[%s183 + $0x74] sm:$0xf]
      %v3495 = vld [vmem:[%s183 + $0x78] sm:$0xf]
      %v3496 = vld [vmem:[%s183 + $0x7c] sm:$0xf]
      %v3497 = vld [vmem:[%s183 + $0x80] sm:$0xf]
      %v3498 = vld [vmem:[%s183 + $0x84] sm:$0xf]
      %v3499 = vld [vmem:[%s183 + $0x88] sm:$0xf]
      %v3500 = vld [vmem:[%s183 + $0x8c] sm:$0xf]
      %v3501 = vld [vmem:[%s183 + $0x90] sm:$0xf]
      %v3502 = vld [vmem:[%s183 + $0x94] sm:$0xf]
      %v3503 = vld [vmem:[%s183 + $0x98] sm:$0xf]
      %v3504 = vld [vmem:[%s183 + $0x9c] sm:$0xf]
      %v3505 = vld [vmem:[%s183 + $0xa0] sm:$0x7]
      %v3506 = vld [vmem:[#allocation2] sm:$0xff]
      %v3507 = vld [vmem:[#allocation2 + $0x8] sm:$0xff]
      %v3508 = vld [vmem:[#allocation2 + $0x10] sm:$0xff]
      %v3509 = vld [vmem:[#allocation2 + $0x18] sm:$0xff]
      %v3510 = vld [vmem:[#allocation2 + $0x20] sm:$0xff]
      %v3511 = vld [vmem:[#allocation2 + $0x28] sm:$0xff]
      %v3512 = vld [vmem:[#allocation2 + $0x30] sm:$0xff]
      %v3513 = vld [vmem:[#allocation2 + $0x38] sm:$0xff]
      %v3514 = vld [vmem:[#allocation2 + $0x40] sm:$0xff]
      %v3515 = vld [vmem:[#allocation2 + $0x48] sm:$0xff]
      %v3516 = vld [vmem:[#allocation2 + $0x50] sm:$0xff]
      %v3517 = vld [vmem:[#allocation2 + $0x58] sm:$0xff]
      %v3518 = vld [vmem:[#allocation2 + $0x60] sm:$0xff]
      %v3519 = vld [vmem:[#allocation2 + $0x68] sm:$0xff]
      %v3520 = vld [vmem:[#allocation2 + $0x70] sm:$0xff]
      %v3521 = vld [vmem:[#allocation2 + $0x78] sm:$0xff]
      %v3522 = vld [vmem:[#allocation2 + $0x80] sm:$0xff]
      %v3523 = vld [vmem:[#allocation2 + $0x88] sm:$0xff]
      %v3524 = vld [vmem:[#allocation2 + $0x90] sm:$0xff]
      %v3525 = vld [vmem:[#allocation2 + $0x98] sm:$0xff]
      %v3526 = vld [vmem:[#allocation2 + $0xa0] sm:$0xff]
      %v3527 = vld [vmem:[#allocation2 + $0xa8] sm:$0xff]
      %v3528 = vld [vmem:[#allocation2 + $0xb0] sm:$0xff]
      %v3529 = vld [vmem:[#allocation2 + $0xb8] sm:$0xff]
      %v3530 = vld [vmem:[#allocation2 + $0xc0] sm:$0xff]
      %v3531 = vld [vmem:[#allocation2 + $0xc8] sm:$0xff]
      %v3532 = vld [vmem:[#allocation2 + $0xd0] sm:$0xff]
      %v3533 = vld [vmem:[#allocation2 + $0xd8] sm:$0xff]
      %v3534 = vld [vmem:[#allocation2 + $0xe0] sm:$0xff]
      %v3535 = vld [vmem:[#allocation2 + $0xe8] sm:$0xff]
      %v3536 = vld [vmem:[#allocation2 + $0xf0] sm:$0xff]
      %v3537 = vld [vmem:[#allocation2 + $0xf8] sm:$0xff]
      %v3538 = vld [vmem:[#allocation2 + $0x100] sm:$0xff]
      %v3539 = vld [vmem:[#allocation2 + $0x108] sm:$0xff]
      %v3540 = vld [vmem:[#allocation2 + $0x110] sm:$0xff]
      %v3541 = vld [vmem:[#allocation2 + $0x118] sm:$0xff]
      %s3542 = scalar_lea.vmem %s1, 14
      %v3543 = vld [vmem:[%s3542] sm:$0x3]
      %v3581 = vunpack.c.l.b16 %v3469
      %v3582 = vunpack.c.l.b16 %v3470
      %v3583 = vunpack.c.l.b16 %v3471
      %v3584 = vunpack.c.l.b16 %v3472
      %v3585 = vunpack.c.l.b16 %v3473
      %v3586 = vunpack.c.l.b16 %v3474
      %v3587 = vunpack.c.l.b16 %v3475
      %v3588 = vunpack.c.l.b16 %v3476
      %v3589 = vunpack.c.l.b16 %v3477
      %v3590 = vunpack.c.l.b16 %v3478
      %v3591 = vunpack.c.l.b16 %v3479
      %v3592 = vunpack.c.l.b16 %v3480
      %v3593 = vunpack.c.l.b16 %v3481
      %v3594 = vunpack.c.l.b16 %v3482
      %v3595 = vunpack.c.l.b16 %v3483
      %v3596 = vunpack.c.l.b16 %v3484
      %v3597 = vunpack.c.l.b16 %v3485
      %v3598 = vunpack.c.l.b16 %v3486
      %v3599 = vunpack.c.l.b16 %v3487
      %v3600 = vunpack.c.l.b16 %v3488
      %v3601 = vunpack.c.l.b16 %v3489
      %v3602 = vunpack.c.l.b16 %v3490
      %v3603 = vunpack.c.l.b16 %v3491
      %v3604 = vunpack.c.l.b16 %v3492
      %v3605 = vunpack.c.l.b16 %v3493
      %v3606 = vunpack.c.l.b16 %v3494
      %v3607 = vunpack.c.l.b16 %v3495
      %v3608 = vunpack.c.l.b16 %v3496
      %v3609 = vunpack.c.l.b16 %v3497
      %v3610 = vunpack.c.l.b16 %v3498
      %v3611 = vunpack.c.l.b16 %v3499
      %v3612 = vunpack.c.l.b16 %v3500
      %v3613 = vunpack.c.l.b16 %v3501
      %v3614 = vunpack.c.l.b16 %v3502
      %v3615 = vunpack.c.l.b16 %v3503
      %v3616 = vunpack.c.l.b16 %v3504
      %v3617 = vunpack.c.l.b16 %v3505
      %v3618 = vpack.c.b16 %v3582, %v3581
      %v3619 = vpack.c.b16 %v3584, %v3583
      %v3620 = vpack.c.b16 %v3586, %v3585
      %v3621 = vpack.c.b16 %v3588, %v3587
      %v3622 = vpack.c.b16 %v3590, %v3589
      %v3623 = vpack.c.b16 %v3592, %v3591
      %v3624 = vpack.c.b16 %v3594, %v3593
      %v3625 = vpack.c.b16 %v3596, %v3595
      %v3626 = vpack.c.b16 %v3598, %v3597
      %v3627 = vpack.c.b16 %v3600, %v3599
      %v3628 = vpack.c.b16 %v3602, %v3601
      %v3629 = vpack.c.b16 %v3604, %v3603
      %v3630 = vpack.c.b16 %v3606, %v3605
      %v3631 = vpack.c.b16 %v3608, %v3607
      %v3632 = vpack.c.b16 %v3610, %v3609
      %v3633 = vpack.c.b16 %v3612, %v3611
      %v3634 = vpack.c.b16 %v3614, %v3613
      %v3635 = vpack.c.b16 %v3616, %v3615
      %v3636 = vpack.c.b16 %v3617, %v3617
      %vm3637 = vsmask.f32 5376
      %v3639 = vshrl.u32 %v3618, 16
      %v3641 = vrot.slane %v3639, 2
      %v3642 = vshll.u32 %v3618, 16
      %v3644 = vrot.slane %v3642, 3
      %v3645 = vor.u32 %v3641, %v3644
      %v3647 = vshrl.u32 %v3619, 16
      %v3649 = vrot.slane %v3647, 2
      %v3650 = vshll.u32 %v3619, 16
      %v3652 = vrot.slane %v3650, 3
      %v3653 = vor.u32 %v3649, %v3652
      %v3654 = vsel %vm3637, %v3645, %v3653
      %v3656 = vshrl.u32 %v3620, 16
      %v3658 = vrot.slane %v3656, 2
      %v3659 = vshll.u32 %v3620, 16
      %v3661 = vrot.slane %v3659, 3
      %v3662 = vor.u32 %v3658, %v3661
      %v3663 = vsel %vm3637, %v3653, %v3662
      %v3665 = vshrl.u32 %v3621, 16
      %v3667 = vrot.slane %v3665, 2
      %v3668 = vshll.u32 %v3621, 16
      %v3670 = vrot.slane %v3668, 3
      %v3671 = vor.u32 %v3667, %v3670
      %v3672 = vsel %vm3637, %v3662, %v3671
      %v3674 = vshrl.u32 %v3622, 16
      %v3676 = vrot.slane %v3674, 2
      %v3677 = vshll.u32 %v3622, 16
      %v3679 = vrot.slane %v3677, 3
      %v3680 = vor.u32 %v3676, %v3679
      %v3681 = vsel %vm3637, %v3671, %v3680
      %v3683 = vshrl.u32 %v3623, 16
      %v3685 = vrot.slane %v3683, 2
      %v3686 = vshll.u32 %v3623, 16
      %v3688 = vrot.slane %v3686, 3
      %v3689 = vor.u32 %v3685, %v3688
      %v3690 = vsel %vm3637, %v3680, %v3689
      %v3692 = vshrl.u32 %v3624, 16
      %v3694 = vrot.slane %v3692, 2
      %v3695 = vshll.u32 %v3624, 16
      %v3697 = vrot.slane %v3695, 3
      %v3698 = vor.u32 %v3694, %v3697
      %v3699 = vsel %vm3637, %v3689, %v3698
      %v3701 = vshrl.u32 %v3625, 16
      %v3703 = vrot.slane %v3701, 2
      %v3704 = vshll.u32 %v3625, 16
      %v3706 = vrot.slane %v3704, 3
      %v3707 = vor.u32 %v3703, %v3706
      %v3708 = vsel %vm3637, %v3698, %v3707
      %v3710 = vshrl.u32 %v3626, 16
      %v3712 = vrot.slane %v3710, 2
      %v3713 = vshll.u32 %v3626, 16
      %v3715 = vrot.slane %v3713, 3
      %v3716 = vor.u32 %v3712, %v3715
      %v3717 = vsel %vm3637, %v3707, %v3716
      %v3719 = vshrl.u32 %v3627, 16
      %v3721 = vrot.slane %v3719, 2
      %v3722 = vshll.u32 %v3627, 16
      %v3724 = vrot.slane %v3722, 3
      %v3725 = vor.u32 %v3721, %v3724
      %v3726 = vsel %vm3637, %v3716, %v3725
      %v3728 = vshrl.u32 %v3628, 16
      %v3730 = vrot.slane %v3728, 2
      %v3731 = vshll.u32 %v3628, 16
      %v3733 = vrot.slane %v3731, 3
      %v3734 = vor.u32 %v3730, %v3733
      %v3735 = vsel %vm3637, %v3725, %v3734
      %v3737 = vshrl.u32 %v3629, 16
      %v3739 = vrot.slane %v3737, 2
      %v3740 = vshll.u32 %v3629, 16
      %v3742 = vrot.slane %v3740, 3
      %v3743 = vor.u32 %v3739, %v3742
      %v3744 = vsel %vm3637, %v3734, %v3743
      %v3746 = vshrl.u32 %v3630, 16
      %v3748 = vrot.slane %v3746, 2
      %v3749 = vshll.u32 %v3630, 16
      %v3751 = vrot.slane %v3749, 3
      %v3752 = vor.u32 %v3748, %v3751
      %v3753 = vsel %vm3637, %v3743, %v3752
      %v3755 = vshrl.u32 %v3631, 16
      %v3757 = vrot.slane %v3755, 2
      %v3758 = vshll.u32 %v3631, 16
      %v3760 = vrot.slane %v3758, 3
      %v3761 = vor.u32 %v3757, %v3760
      %v3762 = vsel %vm3637, %v3752, %v3761
      %v3764 = vshrl.u32 %v3632, 16
      %v3766 = vrot.slane %v3764, 2
      %v3767 = vshll.u32 %v3632, 16
      %v3769 = vrot.slane %v3767, 3
      %v3770 = vor.u32 %v3766, %v3769
      %v3771 = vsel %vm3637, %v3761, %v3770
      %v3773 = vshrl.u32 %v3633, 16
      %v3775 = vrot.slane %v3773, 2
      %v3776 = vshll.u32 %v3633, 16
      %v3778 = vrot.slane %v3776, 3
      %v3779 = vor.u32 %v3775, %v3778
      %v3780 = vsel %vm3637, %v3770, %v3779
      %v3782 = vshrl.u32 %v3634, 16
      %v3784 = vrot.slane %v3782, 2
      %v3785 = vshll.u32 %v3634, 16
      %v3787 = vrot.slane %v3785, 3
      %v3788 = vor.u32 %v3784, %v3787
      %v3789 = vsel %vm3637, %v3779, %v3788
      %v3791 = vshrl.u32 %v3635, 16
      %v3793 = vrot.slane %v3791, 2
      %v3794 = vshll.u32 %v3635, 16
      %v3796 = vrot.slane %v3794, 3
      %v3797 = vor.u32 %v3793, %v3796
      %v3798 = vsel %vm3637, %v3788, %v3797
      %v3800 = vshrl.u32 %v3636, 16
      %v3802 = vrot.slane %v3800, 2
      %v3803 = vshll.u32 %v3636, 16
      %v3805 = vrot.slane %v3803, 3
      %v3806 = vor.u32 %v3802, %v3805
      %v3807 = vsel %vm3637, %v3797, %v3806
      %v3809 = vsel %vm393, %v3654, 0
      %v3812 = vsel %vm393, %v3663, 0
      %v3815 = vsel %vm393, %v3672, 0
      %v3818 = vsel %vm393, %v3681, 0
      %v3821 = vsel %vm393, %v3690, 0
      %v3824 = vsel %vm393, %v3699, 0
      %v3827 = vsel %vm393, %v3708, 0
      %v3830 = vsel %vm393, %v3717, 0
      %v3833 = vsel %vm393, %v3726, 0
      %v3836 = vsel %vm393, %v3735, 0
      %v3839 = vsel %vm393, %v3744, 0
      %v3842 = vsel %vm393, %v3753, 0
      %v3845 = vsel %vm393, %v3762, 0
      %v3848 = vsel %vm393, %v3771, 0
      %v3851 = vsel %vm393, %v3780, 0
      %v3854 = vsel %vm393, %v3789, 0
      %v3857 = vsel %vm393, %v3798, 0
      %v3860 = vsel %vm393, %v3807, 0
      %v3863 = vsel %vm448, %v3543, 0
      %3865 = vmatpush.bf16.msra.mxu0 0
      %3866 = vmatpush.bf16.msra.mxu0 0
      %3867 = vmatpush.bf16.msra.mxu0 0
      %3868 = vmatpush.bf16.msra.mxu0 0
      %3869 = vmatpush.bf16.msra.mxu0 0
      %3870 = vmatpush.bf16.msra.mxu0 0
      %3871 = vmatpush.bf16.msra.mxu0 0
      %3872 = vmatpush.bf16.msra.mxu0 %v3863
      %3873 = vmatmul.bf16.gmra.mxu0 %v3809
      %v3874 = vpop.f32.mrf.mxu0
      %v3875 = vadd.f32 0.0, %v3874
      %v3876 = vpop.f32.mrf.mxu0
      %v3877 = vadd.f32 0.0, %v3876
      %3878 = vmatmul.bf16.gmra.mxu0 %v3812
      %v3879 = vpop.f32.mrf.mxu0
      %v3880 = vadd.f32 0.0, %v3879
      %v3881 = vpop.f32.mrf.mxu0
      %v3882 = vadd.f32 0.0, %v3881
      %3883 = vmatmul.bf16.gmra.mxu0 %v3815
      %v3884 = vpop.f32.mrf.mxu0
      %v3885 = vadd.f32 0.0, %v3884
      %v3886 = vpop.f32.mrf.mxu0
      %v3887 = vadd.f32 0.0, %v3886
      %3888 = vmatmul.bf16.gmra.mxu0 %v3818
      %v3889 = vpop.f32.mrf.mxu0
      %v3890 = vadd.f32 0.0, %v3889
      %v3891 = vpop.f32.mrf.mxu0
      %v3892 = vadd.f32 0.0, %v3891
      %3893 = vmatmul.bf16.gmra.mxu0 %v3821
      %v3894 = vpop.f32.mrf.mxu0
      %v3895 = vadd.f32 0.0, %v3894
      %v3896 = vpop.f32.mrf.mxu0
      %v3897 = vadd.f32 0.0, %v3896
      %3898 = vmatmul.bf16.gmra.mxu0 %v3824
      %v3899 = vpop.f32.mrf.mxu0
      %v3900 = vadd.f32 0.0, %v3899
      %v3901 = vpop.f32.mrf.mxu0
      %v3902 = vadd.f32 0.0, %v3901
      %3903 = vmatmul.bf16.gmra.mxu0 %v3827
      %v3904 = vpop.f32.mrf.mxu0
      %v3905 = vadd.f32 0.0, %v3904
      %v3906 = vpop.f32.mrf.mxu0
      %v3907 = vadd.f32 0.0, %v3906
      %3908 = vmatmul.bf16.gmra.mxu0 %v3830
      %v3909 = vpop.f32.mrf.mxu0
      %v3910 = vadd.f32 0.0, %v3909
      %v3911 = vpop.f32.mrf.mxu0
      %v3912 = vadd.f32 0.0, %v3911
      %3913 = vmatmul.bf16.gmra.mxu0 %v3833
      %v3914 = vpop.f32.mrf.mxu0
      %v3915 = vadd.f32 0.0, %v3914
      %v3916 = vpop.f32.mrf.mxu0
      %v3917 = vadd.f32 0.0, %v3916
      %3918 = vmatmul.bf16.gmra.mxu0 %v3836
      %v3919 = vpop.f32.mrf.mxu0
      %v3920 = vadd.f32 0.0, %v3919
      %v3921 = vpop.f32.mrf.mxu0
      %v3922 = vadd.f32 0.0, %v3921
      %3923 = vmatmul.bf16.gmra.mxu0 %v3839
      %v3924 = vpop.f32.mrf.mxu0
      %v3925 = vadd.f32 0.0, %v3924
      %v3926 = vpop.f32.mrf.mxu0
      %v3927 = vadd.f32 0.0, %v3926
      %3928 = vmatmul.bf16.gmra.mxu0 %v3842
      %v3929 = vpop.f32.mrf.mxu0
      %v3930 = vadd.f32 0.0, %v3929
      %v3931 = vpop.f32.mrf.mxu0
      %v3932 = vadd.f32 0.0, %v3931
      %3933 = vmatmul.bf16.gmra.mxu0 %v3845
      %v3934 = vpop.f32.mrf.mxu0
      %v3935 = vadd.f32 0.0, %v3934
      %v3936 = vpop.f32.mrf.mxu0
      %v3937 = vadd.f32 0.0, %v3936
      %3938 = vmatmul.bf16.gmra.mxu0 %v3848
      %v3939 = vpop.f32.mrf.mxu0
      %v3940 = vadd.f32 0.0, %v3939
      %v3941 = vpop.f32.mrf.mxu0
      %v3942 = vadd.f32 0.0, %v3941
      %3943 = vmatmul.bf16.gmra.mxu0 %v3851
      %v3944 = vpop.f32.mrf.mxu0
      %v3945 = vadd.f32 0.0, %v3944
      %v3946 = vpop.f32.mrf.mxu0
      %v3947 = vadd.f32 0.0, %v3946
      %3948 = vmatmul.bf16.gmra.mxu0 %v3854
      %v3949 = vpop.f32.mrf.mxu0
      %v3950 = vadd.f32 0.0, %v3949
      %v3951 = vpop.f32.mrf.mxu0
      %v3952 = vadd.f32 0.0, %v3951
      %3953 = vmatmul.bf16.gmra.mxu0 %v3857
      %v3954 = vpop.f32.mrf.mxu0
      %v3955 = vadd.f32 0.0, %v3954
      %v3956 = vpop.f32.mrf.mxu0
      %v3957 = vadd.f32 0.0, %v3956
      %3958 = vmatmul.bf16.gmra.mxu0 %v3860
      %v3959 = vpop.f32.mrf.mxu0
      %v3960 = vadd.f32 0.0, %v3959
      %v3961 = vpop.f32.mrf.mxu0
      %v3962 = vadd.f32 0.0, %v3961
      %3963 = vdwg.mxu0
      %v3964 = vadd.f32 %v3506, %v3875
      %v3965 = vadd.f32 %v3507, %v3877
      %v3966 = vadd.f32 %v3508, %v3880
      %v3967 = vadd.f32 %v3509, %v3882
      %v3968 = vadd.f32 %v3510, %v3885
      %v3969 = vadd.f32 %v3511, %v3887
      %v3970 = vadd.f32 %v3512, %v3890
      %v3971 = vadd.f32 %v3513, %v3892
      %v3972 = vadd.f32 %v3514, %v3895
      %v3973 = vadd.f32 %v3515, %v3897
      %v3974 = vadd.f32 %v3516, %v3900
      %v3975 = vadd.f32 %v3517, %v3902
      %v3976 = vadd.f32 %v3518, %v3905
      %v3977 = vadd.f32 %v3519, %v3907
      %v3978 = vadd.f32 %v3520, %v3910
      %v3979 = vadd.f32 %v3521, %v3912
      %v3980 = vadd.f32 %v3522, %v3915
      %v3981 = vadd.f32 %v3523, %v3917
      %v3982 = vadd.f32 %v3524, %v3920
      %v3983 = vadd.f32 %v3525, %v3922
      %v3984 = vadd.f32 %v3526, %v3925
      %v3985 = vadd.f32 %v3527, %v3927
      %v3986 = vadd.f32 %v3528, %v3930
      %v3987 = vadd.f32 %v3529, %v3932
      %v3988 = vadd.f32 %v3530, %v3935
      %v3989 = vadd.f32 %v3531, %v3937
      %v3990 = vadd.f32 %v3532, %v3940
      %v3991 = vadd.f32 %v3533, %v3942
      %v3992 = vadd.f32 %v3534, %v3945
      %v3993 = vadd.f32 %v3535, %v3947
      %v3994 = vadd.f32 %v3536, %v3950
      %v3995 = vadd.f32 %v3537, %v3952
      %v3996 = vadd.f32 %v3538, %v3955
      %v3997 = vadd.f32 %v3539, %v3957
      %v3998 = vadd.f32 %v3540, %v3960
      %v3999 = vadd.f32 %v3541, %v3962
      %4000 = vst [vmem:[#allocation2] sm:$0xff] %v3964
      %4001 = vst [vmem:[#allocation2 + $0x8] sm:$0xff] %v3965
      %4002 = vst [vmem:[#allocation2 + $0x10] sm:$0xff] %v3966
      %4003 = vst [vmem:[#allocation2 + $0x18] sm:$0xff] %v3967
      %4004 = vst [vmem:[#allocation2 + $0x20] sm:$0xff] %v3968
      %4005 = vst [vmem:[#allocation2 + $0x28] sm:$0xff] %v3969
      %4006 = vst [vmem:[#allocation2 + $0x30] sm:$0xff] %v3970
      %4007 = vst [vmem:[#allocation2 + $0x38] sm:$0xff] %v3971
      %4008 = vst [vmem:[#allocation2 + $0x40] sm:$0xff] %v3972
      %4009 = vst [vmem:[#allocation2 + $0x48] sm:$0xff] %v3973
      %4010 = vst [vmem:[#allocation2 + $0x50] sm:$0xff] %v3974
      %4011 = vst [vmem:[#allocation2 + $0x58] sm:$0xff] %v3975
      %4012 = vst [vmem:[#allocation2 + $0x60] sm:$0xff] %v3976
      %4013 = vst [vmem:[#allocation2 + $0x68] sm:$0xff] %v3977
      %4014 = vst [vmem:[#allocation2 + $0x70] sm:$0xff] %v3978
      %4015 = vst [vmem:[#allocation2 + $0x78] sm:$0xff] %v3979
      %4016 = vst [vmem:[#allocation2 + $0x80] sm:$0xff] %v3980
      %4017 = vst [vmem:[#allocation2 + $0x88] sm:$0xff] %v3981
      %4018 = vst [vmem:[#allocation2 + $0x90] sm:$0xff] %v3982
      %4019 = vst [vmem:[#allocation2 + $0x98] sm:$0xff] %v3983
      %4020 = vst [vmem:[#allocation2 + $0xa0] sm:$0xff] %v3984
      %4021 = vst [vmem:[#allocation2 + $0xa8] sm:$0xff] %v3985
      %4022 = vst [vmem:[#allocation2 + $0xb0] sm:$0xff] %v3986
      %4023 = vst [vmem:[#allocation2 + $0xb8] sm:$0xff] %v3987
      %4024 = vst [vmem:[#allocation2 + $0xc0] sm:$0xff] %v3988
      %4025 = vst [vmem:[#allocation2 + $0xc8] sm:$0xff] %v3989
      %4026 = vst [vmem:[#allocation2 + $0xd0] sm:$0xff] %v3990
      %4027 = vst [vmem:[#allocation2 + $0xd8] sm:$0xff] %v3991
      %4028 = vst [vmem:[#allocation2 + $0xe0] sm:$0xff] %v3992
      %4029 = vst [vmem:[#allocation2 + $0xe8] sm:$0xff] %v3993
      %4030 = vst [vmem:[#allocation2 + $0xf0] sm:$0xff] %v3994
      %4031 = vst [vmem:[#allocation2 + $0xf8] sm:$0xff] %v3995
      %4032 = vst [vmem:[#allocation2 + $0x100] sm:$0xff] %v3996
      %4033 = vst [vmem:[#allocation2 + $0x108] sm:$0xff] %v3997
      %4034 = vst [vmem:[#allocation2 + $0x110] sm:$0xff] %v3998
      %4035 = vst [vmem:[#allocation2 + $0x118] sm:$0xff] %v3999
      %v4036 = vld [vmem:[%s183 + $0x10] sm:$0x8]
      %v4037 = vld [vmem:[%s183 + $0x14] sm:$0xf]
      %v4038 = vld [vmem:[%s183 + $0x18] sm:$0xf]
      %v4039 = vld [vmem:[%s183 + $0x1c] sm:$0xf]
      %v4040 = vld [vmem:[%s183 + $0x20] sm:$0xf]
      %v4041 = vld [vmem:[%s183 + $0x24] sm:$0xf]
      %v4042 = vld [vmem:[%s183 + $0x28] sm:$0xf]
      %v4043 = vld [vmem:[%s183 + $0x2c] sm:$0xf]
      %v4044 = vld [vmem:[%s183 + $0x30] sm:$0xf]
      %v4045 = vld [vmem:[%s183 + $0x34] sm:$0xf]
      %v4046 = vld [vmem:[%s183 + $0x38] sm:$0xf]
      %v4047 = vld [vmem:[%s183 + $0x3c] sm:$0xf]
      %v4048 = vld [vmem:[%s183 + $0x40] sm:$0xf]
      %v4049 = vld [vmem:[%s183 + $0x44] sm:$0xf]
      %v4050 = vld [vmem:[%s183 + $0x48] sm:$0xf]
      %v4051 = vld [vmem:[%s183 + $0x4c] sm:$0xf]
      %v4052 = vld [vmem:[%s183 + $0x50] sm:$0xf]
      %v4053 = vld [vmem:[%s183 + $0x54] sm:$0xf]
      %v4054 = vld [vmem:[%s183 + $0x58] sm:$0xf]
      %v4055 = vld [vmem:[%s183 + $0x5c] sm:$0xf]
      %v4056 = vld [vmem:[%s183 + $0x60] sm:$0xf]
      %v4057 = vld [vmem:[%s183 + $0x64] sm:$0xf]
      %v4058 = vld [vmem:[%s183 + $0x68] sm:$0xf]
      %v4059 = vld [vmem:[%s183 + $0x6c] sm:$0xf]
      %v4060 = vld [vmem:[%s183 + $0x70] sm:$0xf]
      %v4061 = vld [vmem:[%s183 + $0x74] sm:$0xf]
      %v4062 = vld [vmem:[%s183 + $0x78] sm:$0xf]
      %v4063 = vld [vmem:[%s183 + $0x7c] sm:$0xf]
      %v4064 = vld [vmem:[%s183 + $0x80] sm:$0xf]
      %v4065 = vld [vmem:[%s183 + $0x84] sm:$0xf]
      %v4066 = vld [vmem:[%s183 + $0x88] sm:$0xf]
      %v4067 = vld [vmem:[%s183 + $0x8c] sm:$0xf]
      %v4068 = vld [vmem:[%s183 + $0x90] sm:$0xf]
      %v4069 = vld [vmem:[%s183 + $0x94] sm:$0xf]
      %v4070 = vld [vmem:[%s183 + $0x98] sm:$0xf]
      %v4071 = vld [vmem:[%s183 + $0x9c] sm:$0xf]
      %v4072 = vld [vmem:[%s183 + $0xa0] sm:$0x7]
      %v4073 = vld [vmem:[#allocation2] sm:$0xff]
      %v4074 = vld [vmem:[#allocation2 + $0x8] sm:$0xff]
      %v4075 = vld [vmem:[#allocation2 + $0x10] sm:$0xff]
      %v4076 = vld [vmem:[#allocation2 + $0x18] sm:$0xff]
      %v4077 = vld [vmem:[#allocation2 + $0x20] sm:$0xff]
      %v4078 = vld [vmem:[#allocation2 + $0x28] sm:$0xff]
      %v4079 = vld [vmem:[#allocation2 + $0x30] sm:$0xff]
      %v4080 = vld [vmem:[#allocation2 + $0x38] sm:$0xff]
      %v4081 = vld [vmem:[#allocation2 + $0x40] sm:$0xff]
      %v4082 = vld [vmem:[#allocation2 + $0x48] sm:$0xff]
      %v4083 = vld [vmem:[#allocation2 + $0x50] sm:$0xff]
      %v4084 = vld [vmem:[#allocation2 + $0x58] sm:$0xff]
      %v4085 = vld [vmem:[#allocation2 + $0x60] sm:$0xff]
      %v4086 = vld [vmem:[#allocation2 + $0x68] sm:$0xff]
      %v4087 = vld [vmem:[#allocation2 + $0x70] sm:$0xff]
      %v4088 = vld [vmem:[#allocation2 + $0x78] sm:$0xff]
      %v4089 = vld [vmem:[#allocation2 + $0x80] sm:$0xff]
      %v4090 = vld [vmem:[#allocation2 + $0x88] sm:$0xff]
      %v4091 = vld [vmem:[#allocation2 + $0x90] sm:$0xff]
      %v4092 = vld [vmem:[#allocation2 + $0x98] sm:$0xff]
      %v4093 = vld [vmem:[#allocation2 + $0xa0] sm:$0xff]
      %v4094 = vld [vmem:[#allocation2 + $0xa8] sm:$0xff]
      %v4095 = vld [vmem:[#allocation2 + $0xb0] sm:$0xff]
      %v4096 = vld [vmem:[#allocation2 + $0xb8] sm:$0xff]
      %v4097 = vld [vmem:[#allocation2 + $0xc0] sm:$0xff]
      %v4098 = vld [vmem:[#allocation2 + $0xc8] sm:$0xff]
      %v4099 = vld [vmem:[#allocation2 + $0xd0] sm:$0xff]
      %v4100 = vld [vmem:[#allocation2 + $0xd8] sm:$0xff]
      %v4101 = vld [vmem:[#allocation2 + $0xe0] sm:$0xff]
      %v4102 = vld [vmem:[#allocation2 + $0xe8] sm:$0xff]
      %v4103 = vld [vmem:[#allocation2 + $0xf0] sm:$0xff]
      %v4104 = vld [vmem:[#allocation2 + $0xf8] sm:$0xff]
      %v4105 = vld [vmem:[#allocation2 + $0x100] sm:$0xff]
      %v4106 = vld [vmem:[#allocation2 + $0x108] sm:$0xff]
      %v4107 = vld [vmem:[#allocation2 + $0x110] sm:$0xff]
      %v4108 = vld [vmem:[#allocation2 + $0x118] sm:$0xff]
      %s4109 = scalar_lea.vmem %s1, 16
      %v4110 = vld [vmem:[%s4109] sm:$0x3]
      %v4148 = vunpack.c.l.b16 %v4036
      %v4149 = vunpack.c.l.b16 %v4037
      %v4150 = vunpack.c.l.b16 %v4038
      %v4151 = vunpack.c.l.b16 %v4039
      %v4152 = vunpack.c.l.b16 %v4040
      %v4153 = vunpack.c.l.b16 %v4041
      %v4154 = vunpack.c.l.b16 %v4042
      %v4155 = vunpack.c.l.b16 %v4043
      %v4156 = vunpack.c.l.b16 %v4044
      %v4157 = vunpack.c.l.b16 %v4045
      %v4158 = vunpack.c.l.b16 %v4046
      %v4159 = vunpack.c.l.b16 %v4047
      %v4160 = vunpack.c.l.b16 %v4048
      %v4161 = vunpack.c.l.b16 %v4049
      %v4162 = vunpack.c.l.b16 %v4050
      %v4163 = vunpack.c.l.b16 %v4051
      %v4164 = vunpack.c.l.b16 %v4052
      %v4165 = vunpack.c.l.b16 %v4053
      %v4166 = vunpack.c.l.b16 %v4054
      %v4167 = vunpack.c.l.b16 %v4055
      %v4168 = vunpack.c.l.b16 %v4056
      %v4169 = vunpack.c.l.b16 %v4057
      %v4170 = vunpack.c.l.b16 %v4058
      %v4171 = vunpack.c.l.b16 %v4059
      %v4172 = vunpack.c.l.b16 %v4060
      %v4173 = vunpack.c.l.b16 %v4061
      %v4174 = vunpack.c.l.b16 %v4062
      %v4175 = vunpack.c.l.b16 %v4063
      %v4176 = vunpack.c.l.b16 %v4064
      %v4177 = vunpack.c.l.b16 %v4065
      %v4178 = vunpack.c.l.b16 %v4066
      %v4179 = vunpack.c.l.b16 %v4067
      %v4180 = vunpack.c.l.b16 %v4068
      %v4181 = vunpack.c.l.b16 %v4069
      %v4182 = vunpack.c.l.b16 %v4070
      %v4183 = vunpack.c.l.b16 %v4071
      %v4184 = vunpack.c.l.b16 %v4072
      %v4185 = vpack.c.b16 %v4149, %v4148
      %v4186 = vpack.c.b16 %v4151, %v4150
      %v4187 = vpack.c.b16 %v4153, %v4152
      %v4188 = vpack.c.b16 %v4155, %v4154
      %v4189 = vpack.c.b16 %v4157, %v4156
      %v4190 = vpack.c.b16 %v4159, %v4158
      %v4191 = vpack.c.b16 %v4161, %v4160
      %v4192 = vpack.c.b16 %v4163, %v4162
      %v4193 = vpack.c.b16 %v4165, %v4164
      %v4194 = vpack.c.b16 %v4167, %v4166
      %v4195 = vpack.c.b16 %v4169, %v4168
      %v4196 = vpack.c.b16 %v4171, %v4170
      %v4197 = vpack.c.b16 %v4173, %v4172
      %v4198 = vpack.c.b16 %v4175, %v4174
      %v4199 = vpack.c.b16 %v4177, %v4176
      %v4200 = vpack.c.b16 %v4179, %v4178
      %v4201 = vpack.c.b16 %v4181, %v4180
      %v4202 = vpack.c.b16 %v4183, %v4182
      %v4203 = vpack.c.b16 %v4184, %v4184
      %vm4204 = vcmask 1044480
      %v4205 = vrot.slane %v4185, 3
      %v4206 = vrot.slane %v4186, 3
      %v4207 = vsel %vm4204, %v4205, %v4206
      %v4208 = vrot.slane %v4187, 3
      %v4209 = vsel %vm4204, %v4206, %v4208
      %v4210 = vrot.slane %v4188, 3
      %v4211 = vsel %vm4204, %v4208, %v4210
      %v4212 = vrot.slane %v4189, 3
      %v4213 = vsel %vm4204, %v4210, %v4212
      %v4214 = vrot.slane %v4190, 3
      %v4215 = vsel %vm4204, %v4212, %v4214
      %v4216 = vrot.slane %v4191, 3
      %v4217 = vsel %vm4204, %v4214, %v4216
      %v4218 = vrot.slane %v4192, 3
      %v4219 = vsel %vm4204, %v4216, %v4218
      %v4220 = vrot.slane %v4193, 3
      %v4221 = vsel %vm4204, %v4218, %v4220
      %v4222 = vrot.slane %v4194, 3
      %v4223 = vsel %vm4204, %v4220, %v4222
      %v4224 = vrot.slane %v4195, 3
      %v4225 = vsel %vm4204, %v4222, %v4224
      %v4226 = vrot.slane %v4196, 3
      %v4227 = vsel %vm4204, %v4224, %v4226
      %v4228 = vrot.slane %v4197, 3
      %v4229 = vsel %vm4204, %v4226, %v4228
      %v4230 = vrot.slane %v4198, 3
      %v4231 = vsel %vm4204, %v4228, %v4230
      %v4232 = vrot.slane %v4199, 3
      %v4233 = vsel %vm4204, %v4230, %v4232
      %v4234 = vrot.slane %v4200, 3
      %v4235 = vsel %vm4204, %v4232, %v4234
      %v4236 = vrot.slane %v4201, 3
      %v4237 = vsel %vm4204, %v4234, %v4236
      %v4238 = vrot.slane %v4202, 3
      %v4239 = vsel %vm4204, %v4236, %v4238
      %v4240 = vrot.slane %v4203, 3
      %v4241 = vsel %vm4204, %v4238, %v4240
      %v4243 = vsel %vm393, %v4207, 0
      %v4246 = vsel %vm393, %v4209, 0
      %v4249 = vsel %vm393, %v4211, 0
      %v4252 = vsel %vm393, %v4213, 0
      %v4255 = vsel %vm393, %v4215, 0
      %v4258 = vsel %vm393, %v4217, 0
      %v4261 = vsel %vm393, %v4219, 0
      %v4264 = vsel %vm393, %v4221, 0
      %v4267 = vsel %vm393, %v4223, 0
      %v4270 = vsel %vm393, %v4225, 0
      %v4273 = vsel %vm393, %v4227, 0
      %v4276 = vsel %vm393, %v4229, 0
      %v4279 = vsel %vm393, %v4231, 0
      %v4282 = vsel %vm393, %v4233, 0
      %v4285 = vsel %vm393, %v4235, 0
      %v4288 = vsel %vm393, %v4237, 0
      %v4291 = vsel %vm393, %v4239, 0
      %v4294 = vsel %vm393, %v4241, 0
      %v4297 = vsel %vm448, %v4110, 0
      %4299 = vmatpush.bf16.msra.mxu0 0
      %4300 = vmatpush.bf16.msra.mxu0 0
      %4301 = vmatpush.bf16.msra.mxu0 0
      %4302 = vmatpush.bf16.msra.mxu0 0
      %4303 = vmatpush.bf16.msra.mxu0 0
      %4304 = vmatpush.bf16.msra.mxu0 0
      %4305 = vmatpush.bf16.msra.mxu0 0
      %4306 = vmatpush.bf16.msra.mxu0 %v4297
      %4307 = vmatmul.bf16.gmra.mxu0 %v4243
      %v4308 = vpop.f32.mrf.mxu0
      %v4309 = vadd.f32 0.0, %v4308
      %v4310 = vpop.f32.mrf.mxu0
      %v4311 = vadd.f32 0.0, %v4310
      %4312 = vmatmul.bf16.gmra.mxu0 %v4246
      %v4313 = vpop.f32.mrf.mxu0
      %v4314 = vadd.f32 0.0, %v4313
      %v4315 = vpop.f32.mrf.mxu0
      %v4316 = vadd.f32 0.0, %v4315
      %4317 = vmatmul.bf16.gmra.mxu0 %v4249
      %v4318 = vpop.f32.mrf.mxu0
      %v4319 = vadd.f32 0.0, %v4318
      %v4320 = vpop.f32.mrf.mxu0
      %v4321 = vadd.f32 0.0, %v4320
      %4322 = vmatmul.bf16.gmra.mxu0 %v4252
      %v4323 = vpop.f32.mrf.mxu0
      %v4324 = vadd.f32 0.0, %v4323
      %v4325 = vpop.f32.mrf.mxu0
      %v4326 = vadd.f32 0.0, %v4325
      %4327 = vmatmul.bf16.gmra.mxu0 %v4255
      %v4328 = vpop.f32.mrf.mxu0
      %v4329 = vadd.f32 0.0, %v4328
      %v4330 = vpop.f32.mrf.mxu0
      %v4331 = vadd.f32 0.0, %v4330
      %4332 = vmatmul.bf16.gmra.mxu0 %v4258
      %v4333 = vpop.f32.mrf.mxu0
      %v4334 = vadd.f32 0.0, %v4333
      %v4335 = vpop.f32.mrf.mxu0
      %v4336 = vadd.f32 0.0, %v4335
      %4337 = vmatmul.bf16.gmra.mxu0 %v4261
      %v4338 = vpop.f32.mrf.mxu0
      %v4339 = vadd.f32 0.0, %v4338
      %v4340 = vpop.f32.mrf.mxu0
      %v4341 = vadd.f32 0.0, %v4340
      %4342 = vmatmul.bf16.gmra.mxu0 %v4264
      %v4343 = vpop.f32.mrf.mxu0
      %v4344 = vadd.f32 0.0, %v4343
      %v4345 = vpop.f32.mrf.mxu0
      %v4346 = vadd.f32 0.0, %v4345
      %4347 = vmatmul.bf16.gmra.mxu0 %v4267
      %v4348 = vpop.f32.mrf.mxu0
      %v4349 = vadd.f32 0.0, %v4348
      %v4350 = vpop.f32.mrf.mxu0
      %v4351 = vadd.f32 0.0, %v4350
      %4352 = vmatmul.bf16.gmra.mxu0 %v4270
      %v4353 = vpop.f32.mrf.mxu0
      %v4354 = vadd.f32 0.0, %v4353
      %v4355 = vpop.f32.mrf.mxu0
      %v4356 = vadd.f32 0.0, %v4355
      %4357 = vmatmul.bf16.gmra.mxu0 %v4273
      %v4358 = vpop.f32.mrf.mxu0
      %v4359 = vadd.f32 0.0, %v4358
      %v4360 = vpop.f32.mrf.mxu0
      %v4361 = vadd.f32 0.0, %v4360
      %4362 = vmatmul.bf16.gmra.mxu0 %v4276
      %v4363 = vpop.f32.mrf.mxu0
      %v4364 = vadd.f32 0.0, %v4363
      %v4365 = vpop.f32.mrf.mxu0
      %v4366 = vadd.f32 0.0, %v4365
      %4367 = vmatmul.bf16.gmra.mxu0 %v4279
      %v4368 = vpop.f32.mrf.mxu0
      %v4369 = vadd.f32 0.0, %v4368
      %v4370 = vpop.f32.mrf.mxu0
      %v4371 = vadd.f32 0.0, %v4370
      %4372 = vmatmul.bf16.gmra.mxu0 %v4282
      %v4373 = vpop.f32.mrf.mxu0
      %v4374 = vadd.f32 0.0, %v4373
      %v4375 = vpop.f32.mrf.mxu0
      %v4376 = vadd.f32 0.0, %v4375
      %4377 = vmatmul.bf16.gmra.mxu0 %v4285
      %v4378 = vpop.f32.mrf.mxu0
      %v4379 = vadd.f32 0.0, %v4378
      %v4380 = vpop.f32.mrf.mxu0
      %v4381 = vadd.f32 0.0, %v4380
      %4382 = vmatmul.bf16.gmra.mxu0 %v4288
      %v4383 = vpop.f32.mrf.mxu0
      %v4384 = vadd.f32 0.0, %v4383
      %v4385 = vpop.f32.mrf.mxu0
      %v4386 = vadd.f32 0.0, %v4385
      %4387 = vmatmul.bf16.gmra.mxu0 %v4291
      %v4388 = vpop.f32.mrf.mxu0
      %v4389 = vadd.f32 0.0, %v4388
      %v4390 = vpop.f32.mrf.mxu0
      %v4391 = vadd.f32 0.0, %v4390
      %4392 = vmatmul.bf16.gmra.mxu0 %v4294
      %v4393 = vpop.f32.mrf.mxu0
      %v4394 = vadd.f32 0.0, %v4393
      %v4395 = vpop.f32.mrf.mxu0
      %v4396 = vadd.f32 0.0, %v4395
      %4397 = vdwg.mxu0
      %v4398 = vadd.f32 %v4073, %v4309
      %v4399 = vadd.f32 %v4074, %v4311
      %v4400 = vadd.f32 %v4075, %v4314
      %v4401 = vadd.f32 %v4076, %v4316
      %v4402 = vadd.f32 %v4077, %v4319
      %v4403 = vadd.f32 %v4078, %v4321
      %v4404 = vadd.f32 %v4079, %v4324
      %v4405 = vadd.f32 %v4080, %v4326
      %v4406 = vadd.f32 %v4081, %v4329
      %v4407 = vadd.f32 %v4082, %v4331
      %v4408 = vadd.f32 %v4083, %v4334
      %v4409 = vadd.f32 %v4084, %v4336
      %v4410 = vadd.f32 %v4085, %v4339
      %v4411 = vadd.f32 %v4086, %v4341
      %v4412 = vadd.f32 %v4087, %v4344
      %v4413 = vadd.f32 %v4088, %v4346
      %v4414 = vadd.f32 %v4089, %v4349
      %v4415 = vadd.f32 %v4090, %v4351
      %v4416 = vadd.f32 %v4091, %v4354
      %v4417 = vadd.f32 %v4092, %v4356
      %v4418 = vadd.f32 %v4093, %v4359
      %v4419 = vadd.f32 %v4094, %v4361
      %v4420 = vadd.f32 %v4095, %v4364
      %v4421 = vadd.f32 %v4096, %v4366
      %v4422 = vadd.f32 %v4097, %v4369
      %v4423 = vadd.f32 %v4098, %v4371
      %v4424 = vadd.f32 %v4099, %v4374
      %v4425 = vadd.f32 %v4100, %v4376
      %v4426 = vadd.f32 %v4101, %v4379
      %v4427 = vadd.f32 %v4102, %v4381
      %v4428 = vadd.f32 %v4103, %v4384
      %v4429 = vadd.f32 %v4104, %v4386
      %v4430 = vadd.f32 %v4105, %v4389
      %v4431 = vadd.f32 %v4106, %v4391
      %v4432 = vadd.f32 %v4107, %v4394
      %v4433 = vadd.f32 %v4108, %v4396
      %4434 = vst [vmem:[#allocation2] sm:$0xff] %v4398
      %4435 = vst [vmem:[#allocation2 + $0x8] sm:$0xff] %v4399
      %4436 = vst [vmem:[#allocation2 + $0x10] sm:$0xff] %v4400
      %4437 = vst [vmem:[#allocation2 + $0x18] sm:$0xff] %v4401
      %4438 = vst [vmem:[#allocation2 + $0x20] sm:$0xff] %v4402
      %4439 = vst [vmem:[#allocation2 + $0x28] sm:$0xff] %v4403
      %4440 = vst [vmem:[#allocation2 + $0x30] sm:$0xff] %v4404
      %4441 = vst [vmem:[#allocation2 + $0x38] sm:$0xff] %v4405
      %4442 = vst [vmem:[#allocation2 + $0x40] sm:$0xff] %v4406
      %4443 = vst [vmem:[#allocation2 + $0x48] sm:$0xff] %v4407
      %4444 = vst [vmem:[#allocation2 + $0x50] sm:$0xff] %v4408
      %4445 = vst [vmem:[#allocation2 + $0x58] sm:$0xff] %v4409
      %4446 = vst [vmem:[#allocation2 + $0x60] sm:$0xff] %v4410
      %4447 = vst [vmem:[#allocation2 + $0x68] sm:$0xff] %v4411
      %4448 = vst [vmem:[#allocation2 + $0x70] sm:$0xff] %v4412
      %4449 = vst [vmem:[#allocation2 + $0x78] sm:$0xff] %v4413
      %4450 = vst [vmem:[#allocation2 + $0x80] sm:$0xff] %v4414
      %4451 = vst [vmem:[#allocation2 + $0x88] sm:$0xff] %v4415
      %4452 = vst [vmem:[#allocation2 + $0x90] sm:$0xff] %v4416
      %4453 = vst [vmem:[#allocation2 + $0x98] sm:$0xff] %v4417
      %4454 = vst [vmem:[#allocation2 + $0xa0] sm:$0xff] %v4418
      %4455 = vst [vmem:[#allocation2 + $0xa8] sm:$0xff] %v4419
      %4456 = vst [vmem:[#allocation2 + $0xb0] sm:$0xff] %v4420
      %4457 = vst [vmem:[#allocation2 + $0xb8] sm:$0xff] %v4421
      %4458 = vst [vmem:[#allocation2 + $0xc0] sm:$0xff] %v4422
      %4459 = vst [vmem:[#allocation2 + $0xc8] sm:$0xff] %v4423
      %4460 = vst [vmem:[#allocation2 + $0xd0] sm:$0xff] %v4424
      %4461 = vst [vmem:[#allocation2 + $0xd8] sm:$0xff] %v4425
      %4462 = vst [vmem:[#allocation2 + $0xe0] sm:$0xff] %v4426
      %4463 = vst [vmem:[#allocation2 + $0xe8] sm:$0xff] %v4427
      %4464 = vst [vmem:[#allocation2 + $0xf0] sm:$0xff] %v4428
      %4465 = vst [vmem:[#allocation2 + $0xf8] sm:$0xff] %v4429
      %4466 = vst [vmem:[#allocation2 + $0x100] sm:$0xff] %v4430
      %4467 = vst [vmem:[#allocation2 + $0x108] sm:$0xff] %v4431
      %4468 = vst [vmem:[#allocation2 + $0x110] sm:$0xff] %v4432
      %4469 = vst [vmem:[#allocation2 + $0x118] sm:$0xff] %v4433
      %v4470 = vld [vmem:[#allocation2] sm:$0xff]
      %v4471 = vld [vmem:[#allocation2 + $0x8] sm:$0xff]
      %v4472 = vld [vmem:[#allocation2 + $0x10] sm:$0xff]
      %v4473 = vld [vmem:[#allocation2 + $0x18] sm:$0xff]
      %v4474 = vld [vmem:[#allocation2 + $0x20] sm:$0xff]
      %v4475 = vld [vmem:[#allocation2 + $0x28] sm:$0xff]
      %v4476 = vld [vmem:[#allocation2 + $0x30] sm:$0xff]
      %v4477 = vld [vmem:[#allocation2 + $0x38] sm:$0xff]
      %v4478 = vld [vmem:[#allocation2 + $0x40] sm:$0xff]
      %v4479 = vld [vmem:[#allocation2 + $0x48] sm:$0xff]
      %v4480 = vld [vmem:[#allocation2 + $0x50] sm:$0xff]
      %v4481 = vld [vmem:[#allocation2 + $0x58] sm:$0xff]
      %v4482 = vld [vmem:[#allocation2 + $0x60] sm:$0xff]
      %v4483 = vld [vmem:[#allocation2 + $0x68] sm:$0xff]
      %v4484 = vld [vmem:[#allocation2 + $0x70] sm:$0xff]
      %v4485 = vld [vmem:[#allocation2 + $0x78] sm:$0xff]
      %v4486 = vld [vmem:[#allocation2 + $0x80] sm:$0xff]
      %v4487 = vld [vmem:[#allocation2 + $0x88] sm:$0xff]
      %v4488 = vld [vmem:[#allocation2 + $0x90] sm:$0xff]
      %v4489 = vld [vmem:[#allocation2 + $0x98] sm:$0xff]
      %v4490 = vld [vmem:[#allocation2 + $0xa0] sm:$0xff]
      %v4491 = vld [vmem:[#allocation2 + $0xa8] sm:$0xff]
      %v4492 = vld [vmem:[#allocation2 + $0xb0] sm:$0xff]
      %v4493 = vld [vmem:[#allocation2 + $0xb8] sm:$0xff]
      %v4494 = vld [vmem:[#allocation2 + $0xc0] sm:$0xff]
      %v4495 = vld [vmem:[#allocation2 + $0xc8] sm:$0xff]
      %v4496 = vld [vmem:[#allocation2 + $0xd0] sm:$0xff]
      %v4497 = vld [vmem:[#allocation2 + $0xd8] sm:$0xff]
      %v4498 = vld [vmem:[#allocation2 + $0xe0] sm:$0xff]
      %v4499 = vld [vmem:[#allocation2 + $0xe8] sm:$0xff]
      %v4500 = vld [vmem:[#allocation2 + $0xf0] sm:$0xff]
      %v4501 = vld [vmem:[#allocation2 + $0xf8] sm:$0xff]
      %v4502 = vld [vmem:[#allocation2 + $0x100] sm:$0xff]
      %v4503 = vld [vmem:[#allocation2 + $0x108] sm:$0xff]
      %v4504 = vld [vmem:[#allocation2 + $0x110] sm:$0xff]
      %v4505 = vld [vmem:[#allocation2 + $0x118] sm:$0xff]
      %v4506 = vld [vmem:[%s2] sm:$0x1]
      %v4508 = vperm.slane %v4506, 0
      %v4510 = vadd.f32 %v4470, %v4508
      %v4511 = vadd.f32 %v4471, %v4508
      %v4512 = vadd.f32 %v4472, %v4508
      %v4513 = vadd.f32 %v4473, %v4508
      %v4514 = vadd.f32 %v4474, %v4508
      %v4515 = vadd.f32 %v4475, %v4508
      %v4516 = vadd.f32 %v4476, %v4508
      %v4517 = vadd.f32 %v4477, %v4508
      %v4518 = vadd.f32 %v4478, %v4508
      %v4519 = vadd.f32 %v4479, %v4508
      %v4520 = vadd.f32 %v4480, %v4508
      %v4521 = vadd.f32 %v4481, %v4508
      %v4522 = vadd.f32 %v4482, %v4508
      %v4523 = vadd.f32 %v4483, %v4508
      %v4524 = vadd.f32 %v4484, %v4508
      %v4525 = vadd.f32 %v4485, %v4508
      %v4526 = vadd.f32 %v4486, %v4508
      %v4527 = vadd.f32 %v4487, %v4508
      %v4528 = vadd.f32 %v4488, %v4508
      %v4529 = vadd.f32 %v4489, %v4508
      %v4530 = vadd.f32 %v4490, %v4508
      %v4531 = vadd.f32 %v4491, %v4508
      %v4532 = vadd.f32 %v4492, %v4508
      %v4533 = vadd.f32 %v4493, %v4508
      %v4534 = vadd.f32 %v4494, %v4508
      %v4535 = vadd.f32 %v4495, %v4508
      %v4536 = vadd.f32 %v4496, %v4508
      %v4537 = vadd.f32 %v4497, %v4508
      %v4538 = vadd.f32 %v4498, %v4508
      %v4539 = vadd.f32 %v4499, %v4508
      %v4540 = vadd.f32 %v4500, %v4508
      %v4541 = vadd.f32 %v4501, %v4508
      %v4542 = vadd.f32 %v4502, %v4508
      %v4543 = vadd.f32 %v4503, %v4508
      %v4544 = vadd.f32 %v4504, %v4508
      %v4545 = vadd.f32 %v4505, %v4508
      %v4546 = vmax.f32 %v4510, 0.0
      %v4547 = vmax.f32 %v4511, 0.0
      %v4548 = vmax.f32 %v4512, 0.0
      %v4549 = vmax.f32 %v4513, 0.0
      %v4550 = vmax.f32 %v4514, 0.0
      %v4551 = vmax.f32 %v4515, 0.0
      %v4552 = vmax.f32 %v4516, 0.0
      %v4553 = vmax.f32 %v4517, 0.0
      %v4554 = vmax.f32 %v4518, 0.0
      %v4555 = vmax.f32 %v4519, 0.0
      %v4556 = vmax.f32 %v4520, 0.0
      %v4557 = vmax.f32 %v4521, 0.0
      %v4558 = vmax.f32 %v4522, 0.0
      %v4559 = vmax.f32 %v4523, 0.0
      %v4560 = vmax.f32 %v4524, 0.0
      %v4561 = vmax.f32 %v4525, 0.0
      %v4562 = vmax.f32 %v4526, 0.0
      %v4563 = vmax.f32 %v4527, 0.0
      %v4564 = vmax.f32 %v4528, 0.0
      %v4565 = vmax.f32 %v4529, 0.0
      %v4566 = vmax.f32 %v4530, 0.0
      %v4567 = vmax.f32 %v4531, 0.0
      %v4568 = vmax.f32 %v4532, 0.0
      %v4569 = vmax.f32 %v4533, 0.0
      %v4570 = vmax.f32 %v4534, 0.0
      %v4571 = vmax.f32 %v4535, 0.0
      %v4572 = vmax.f32 %v4536, 0.0
      %v4573 = vmax.f32 %v4537, 0.0
      %v4574 = vmax.f32 %v4538, 0.0
      %v4575 = vmax.f32 %v4539, 0.0
      %v4576 = vmax.f32 %v4540, 0.0
      %v4577 = vmax.f32 %v4541, 0.0
      %v4578 = vmax.f32 %v4542, 0.0
      %v4579 = vmax.f32 %v4543, 0.0
      %v4580 = vmax.f32 %v4544, 0.0
      %v4581 = vmax.f32 %v4545, 0.0
      %4582 = vst [vmem:[%s192] sm:$0xff] %v4546
      %4583 = vst [vmem:[%s192 + $0x8] sm:$0xff] %v4547
      %4584 = vst [vmem:[%s192 + $0x10] sm:$0xff] %v4548
      %4585 = vst [vmem:[%s192 + $0x18] sm:$0xff] %v4549
      %4586 = vst [vmem:[%s192 + $0x20] sm:$0xff] %v4550
      %4587 = vst [vmem:[%s192 + $0x28] sm:$0xff] %v4551
      %4588 = vst [vmem:[%s192 + $0x30] sm:$0xff] %v4552
      %4589 = vst [vmem:[%s192 + $0x38] sm:$0xff] %v4553
      %4590 = vst [vmem:[%s192 + $0x40] sm:$0xff] %v4554
      %4591 = vst [vmem:[%s192 + $0x48] sm:$0xff] %v4555
      %4592 = vst [vmem:[%s192 + $0x50] sm:$0xff] %v4556
      %4593 = vst [vmem:[%s192 + $0x58] sm:$0xff] %v4557
      %4594 = vst [vmem:[%s192 + $0x60] sm:$0xff] %v4558
      %4595 = vst [vmem:[%s192 + $0x68] sm:$0xff] %v4559
      %4596 = vst [vmem:[%s192 + $0x70] sm:$0xff] %v4560
      %4597 = vst [vmem:[%s192 + $0x78] sm:$0xff] %v4561
      %4598 = vst [vmem:[%s192 + $0x80] sm:$0xff] %v4562
      %4599 = vst [vmem:[%s192 + $0x88] sm:$0xff] %v4563
      %4600 = vst [vmem:[%s192 + $0x90] sm:$0xff] %v4564
      %4601 = vst [vmem:[%s192 + $0x98] sm:$0xff] %v4565
      %4602 = vst [vmem:[%s192 + $0xa0] sm:$0xff] %v4566
      %4603 = vst [vmem:[%s192 + $0xa8] sm:$0xff] %v4567
      %4604 = vst [vmem:[%s192 + $0xb0] sm:$0xff] %v4568
      %4605 = vst [vmem:[%s192 + $0xb8] sm:$0xff] %v4569
      %4606 = vst [vmem:[%s192 + $0xc0] sm:$0xff] %v4570
      %4607 = vst [vmem:[%s192 + $0xc8] sm:$0xff] %v4571
      %4608 = vst [vmem:[%s192 + $0xd0] sm:$0xff] %v4572
      %4609 = vst [vmem:[%s192 + $0xd8] sm:$0xff] %v4573
      %4610 = vst [vmem:[%s192 + $0xe0] sm:$0xff] %v4574
      %4611 = vst [vmem:[%s192 + $0xe8] sm:$0xff] %v4575
      %4612 = vst [vmem:[%s192 + $0xf0] sm:$0xff] %v4576
      %4613 = vst [vmem:[%s192 + $0xf8] sm:$0xff] %v4577
      %4614 = vst [vmem:[%s192 + $0x100] sm:$0xff] %v4578
      %4615 = vst [vmem:[%s192 + $0x108] sm:$0xff] %v4579
      %4616 = vst [vmem:[%s192 + $0x110] sm:$0xff] %v4580
      %4617 = vst [vmem:[%s192 + $0x118] sm:$0xff] %v4581
      %p4618 = scmp.lt.s32.totalorder %s18, 1
      %s4619 = scalar_select %p4618, %s18, 1
      %p4620 = scmp.lt.s32.totalorder %s19, 0
      %s4621 = scalar_select %p4620, %s19, 0
      %s4622 = smul.addr %s4621, 36
      %s4623 = smul.addr %s4619, 36
      %s4624 = sadd.s32 %s4622, %s4623
      %s4625 = smul.addr %s4624, 8
      %s4626 = scalar_lea.vmem %s3, %s4625
      // Predicated region
      $region33: #{conv_bn_relu.1} parent=31 // pred_check
        %p4627 = pneg %p114
      $region34: #{conv_bn_relu.1} parent=31 // pred_check_branch
        %4629 = sbr.rel (%p4627) target = $region36
      $region35: #{conv_bn_relu.1} parent=31 // pred_region
        _
      $region36: #{conv_bn_relu.1} parent=31 // pred_fallthru
        _
    $region32: #{conv_bn_relu.1} parent=5 // pred_fallthru
      _
    %p4630 = scmp.le.s32.totalorder 2, %s9
    // Predicated region
    $region37: #{conv_bn_relu.1} parent=5 // pred_check
      %p4631 = pneg %p4630
    $region38: #{conv_bn_relu.1} parent=5 // pred_check_branch
      %4633 = sbr.rel (%p4631) target = $region40
    $region39: #{conv_bn_relu.1} parent=5 // pred_region
      %s4634 = ssub.s32 %s9, 2
      // Predicated region
      $region41: #{conv_bn_relu.1} parent=39 // pred_check
        %p4635 = pneg %p120
      $region42: #{conv_bn_relu.1} parent=39 // pred_check_branch
        %4637 = sbr.rel (%p4635) target = $region44
      $region43: #{conv_bn_relu.1} parent=39 // pred_region
        %p4638 = scmp.lt.s32.totalorder %s20, 1
        %s4639 = scalar_select %p4638, %s20, 1
        %p4640 = scmp.lt.s32.totalorder %s21, 0
        %s4641 = scalar_select %p4640, %s21, 0
        %s4642 = smul.addr %s4641, 36
        %s4643 = smul.addr %s4639, 36
        %s4644 = sadd.s32 %s4642, %s4643
        %s4645 = smul.addr %s4644, 8
        %s4646 = scalar_lea.vmem %s3, %s4645
      $region44: #{conv_bn_relu.1} parent=39 // pred_fallthru
        _
    $region40: #{conv_bn_relu.1} parent=5 // pred_fallthru
      _
  $region6: #{conv_bn_relu.1} parent=0 // loop_footer
    %s13 = sadd.s32 1, %s9
  $region7: #{conv_bn_relu.1} parent=0 // loop_footer_branch
    %8 = sbr.rel target = $region3
  $region8: #{conv_bn_relu.1} parent=0 // loop_exit
    _

</llo_original>
